<compile_context>
chip_gen: v7x
topology: tpu7x:2x2x1
jax: 0.10.0
libtpu: 0.0.40
codegen_flags: <defaults>
</compile_context>

<pallas_src>
import jax
import jax.numpy as jnp
from jax.experimental import pallas as pl
from jax.experimental.pallas import tpu as pltpu


# ----------------------------------------------------------------------------
# Helpers
# ----------------------------------------------------------------------------
def _round_up(v, m):
    return ((v + m - 1) // m) * m


def _cdiv(a, b):
    return -(-a // b)


def _vmem_capacity_bytes():
    """Generation-aware physical VMEM per TensorCore (v5e/v6e 128 MiB, v7x 64 MiB)."""
    try:
        return int(pltpu.get_tpu_info().vmem_capacity_bytes)
    except Exception:
        return 64 * 2 ** 20  # conservative fallback (v7x per-TC)


# ----------------------------------------------------------------------------
# Pallas kernel: fused SharedMLP (1x1 conv stack + folded-BN bias + ReLU),
# first layer split across feature slabs (concat fused in-kernel).
# ----------------------------------------------------------------------------
def _make_fused_mlp_kernel(n_feat, layer_dtypes, g_rows):
    n_layers = len(layer_dtypes)

    def kernel(*refs):
        feat_refs = refs[:n_feat]
        o_ref = refs[-1]
        params = refs[n_feat:-1]
        # params layout: [w0_part_0..w0_part_{n_feat-1}, b0, w1, b1, ..., wL-1, bL-1]
        for g in range(g_rows):                         # static unroll over batch rows in block
            # ---- layer 0: split matmul over the (virtual) channel-concat ----
            acc = None
            for f in range(n_feat):
                w = params[f][...]                      # (C_out0, C_f)
                x = feat_refs[f][g].astype(w.dtype)     # (C_f, tn)
                part = jnp.dot(w, x, preferred_element_type=jnp.float32)
                acc = part if acc is None else acc + part
            h = jnp.maximum(acc + params[n_feat][...], 0.0)   # f32 bias + ReLU epilogue
            if n_layers > 1:
                h = h.astype(layer_dtypes[1])           # cast once at the ReLU
            # ---- remaining layers ----
            for l in range(1, n_layers):
                w = params[n_feat + 1 + 2 * (l - 1)][...]
                b = params[n_feat + 2 + 2 * (l - 1)][...]
                acc = jnp.dot(w, h, preferred_element_type=jnp.float32)
                h = jnp.maximum(acc + b, 0.0)
                if l + 1 < n_layers:
                    h = h.astype(layer_dtypes[l + 1])
            o_ref[g] = h.astype(o_ref.dtype)            # lane-dense store

    return kernel


def shared_mlp_pallas(feats_list, layers, *, tile_bytes=4 * 2 ** 20, out_dtype=None):
    """Fused SharedMLP over per-point features.

    feats_list: list of (B, C_i, N) slabs; their channel-concat is the MLP input
                (never materialized in HBM: first-layer weight is split per slab).
    layers    : list of (w_eff (C_out, C_in_total), b_eff (C_out,)) with BN folded.
    returns (B, C_last, N) in out_dtype (defaults to feats_list[0].dtype).
    """
    B, _, N = feats_list[0].shape
    chans = [int(f.shape[1]) for f in feats_list]
    c_in_total = sum(chans)
    assert int(layers[0][0].shape[1]) == c_in_total
    out_dtype = jnp.dtype(out_dtype if out_dtype is not None else feats_list[0].dtype)
    C_last = int(layers[-1][0].shape[0])
    c_max = max([c_in_total] + [int(w.shape[0]) for w, _ in layers])
    layer_dtypes = [w.dtype for w, _ in layers]

    # --- batch folding: put the whole (small) batch into the block.
    G = B if B <= 16 else 1
    gB = _cdiv(B, G)

    # --- byte-targeted spatial tile (lane axis), clamped to the point count.
    n_pad = _round_up(N, 128)
    in_bpp = G * sum(c * f.dtype.itemsize for c, f in zip(chans, feats_list))
    out_bpp = G * C_last * out_dtype.itemsize
    tn = _round_up(max(128, int(tile_bytes) // max(1, in_bpp + out_bpp)), 128)
    tn = min(tn, n_pad)

    # --- clamp tile so the working set fits the chip's VMEM (80% budget).
    vmem_cap = _vmem_capacity_bytes()
    param_bytes = int(sum(int(w.size) * w.dtype.itemsize + 4 * int(w.shape[0])
                          for w, _ in layers))
    inter_bpp = (c_in_total + 3 * c_max) * 4            # f32 in-flight intermediates (worst case)
    per_tn = 2 * (in_bpp + out_bpp) + inter_bpp         # double-buffered I/O tiles + intermediates
    budget = vmem_cap * 4 // 5
    tn_fit = max(128, ((budget - 2 * param_bytes) // max(1, per_tn)) // 128 * 128)
    tn = max(128, min(tn, tn_fit))

    # --- v7x megacore: guarantee >=2 parallel grid blocks (harmless on 1-TC chips).
    if gB * _cdiv(N, tn) < 2 and n_pad >= 256:
        tn = _round_up(_cdiv(N, 2), 128)

    grid = (gB, _cdiv(N, tn))

    est_vmem = per_tn * tn + 2 * param_bytes
    # Always set an explicit limit (v5e's 16 MiB scoped default is too small),
    # capped below physical VMEM of the current generation.
    vmem_limit = int(min(vmem_cap * 9 // 10, max(est_vmem * 3 // 2, 24 * 2 ** 20)))

    flops = int(2 * B * N * sum(int(w.shape[0]) * int(w.shape[1]) for w, _ in layers))
    bytes_accessed = int(sum(int(f.size) * f.dtype.itemsize for f in feats_list)
                         + B * N * C_last * out_dtype.itemsize + param_bytes)

    kernel = _make_fused_mlp_kernel(len(feats_list), layer_dtypes, G)

    def build(single_buffer_params):
        pmode = {"pipeline_mode": pl.Buffered(1)} if single_buffer_params else {}
        in_specs, flat_args = [], []
        for f, c in zip(feats_list, chans):
            in_specs.append(pl.BlockSpec((G, c, tn), lambda g, t: (g, 0, t)))
            flat_args.append(f)
        w0, b0 = layers[0]
        off = 0
        for c in chans:                                  # first-layer weight, split per slab
            in_specs.append(pl.BlockSpec((int(w0.shape[0]), c), lambda g, t: (0, 0), **pmode))
            flat_args.append(w0[:, off:off + c])
            off += c
        in_specs.append(pl.BlockSpec((int(w0.shape[0]), 1), lambda g, t: (0, 0), **pmode))
        flat_args.append(b0.reshape(-1, 1).astype(jnp.float32))
        for w, b in layers[1:]:
            in_specs.append(pl.BlockSpec((int(w.shape[0]), int(w.shape[1])),
                                         lambda g, t: (0, 0), **pmode))
            flat_args.append(w)
            in_specs.append(pl.BlockSpec((int(w.shape[0]), 1), lambda g, t: (0, 0), **pmode))
            flat_args.append(b.reshape(-1, 1).astype(jnp.float32))
        out_specs = pl.BlockSpec((G, C_last, tn), lambda g, t: (g, 0, t))

        return pl.pallas_call(
            kernel,
            out_shape=jax.ShapeDtypeStruct((B, C_last, N), out_dtype),
            grid_spec=pltpu.PrefetchScalarGridSpec(
                num_scalar_prefetch=0,
                grid=grid,
                in_specs=in_specs,
                out_specs=out_specs,
            ),
            compiler_params=pltpu.CompilerParams(
                dimension_semantics=("parallel", "parallel"),
                vmem_limit_bytes=vmem_limit,
            ),
            cost_estimate=pl.CostEstimate(flops=flops, transcendentals=0,
                                          bytes_accessed=bytes_accessed),
        )(*flat_args)

    try:
        # Single-buffered (constant-index) weights/biases: halves resident-param VMEM.
        return build(True)
    except Exception:
        # Older Pallas versions may reject Buffered(1); fall back to default buffering.
        return build(False)


# ----------------------------------------------------------------------------
# Plain-JAX glue: three_nn + three_interpolate, BN folding, reference
# ----------------------------------------------------------------------------
def three_nn_interpolate(unknown, known, known_feats):
    """unknown (B,n,3), known (B,m,3), known_feats (B,C2,m) -> (B,C2,n)."""
    # MXU-friendly pairwise distances: ||u||^2 + ||k||^2 - 2 u.k^T (no (B,n,m,3) blowup).
    u2 = jnp.sum(unknown * unknown, axis=-1)                         # (B, n)
    k2 = jnp.sum(known * known, axis=-1)                             # (B, m)
    cross = jnp.einsum("bnd,bmd->bnm", unknown, known,
                       preferred_element_type=jnp.float32)           # (B, n, m)
    d2 = jnp.maximum(u2[:, :, None] + k2[:, None, :] - 2.0 * cross, 0.0)
    dist = jnp.sqrt(d2)
    neg_d3, idx = jax.lax.top_k(-dist, 3)                            # 3 nearest, ascending
    d3 = -neg_d3                                                     # (B, n, 3)
    # pointnet2_pyt's three_nn returns sqrt(dist2) -> module weights are 1/(d + 1e-8).
    w = 1.0 / (d3 + 1e-8)
    w = w / jnp.sum(w, axis=-1, keepdims=True)

    def per_batch(kf, ix, ww):                                       # kf (C2,m), ix/ww (n,3)
        g = kf[:, ix]                                                # (C2, n, 3)
        return jnp.sum(g * ww[None, :, :], axis=-1)                  # (C2, n)

    return jax.vmap(per_batch)(known_feats, idx, w)


def _fp_feature_slabs(unknown, known, unknow_feats, known_feats):
    """Returns the feature slabs whose channel-concat feeds the SharedMLP."""
    if known is not None:
        interpolated = three_nn_interpolate(unknown, known, known_feats)
    else:
        B, C2 = known_feats.shape[:2]
        interpolated = jnp.broadcast_to(known_feats, (B, C2, unknown.shape[1]))
    slabs = [interpolated]
    if unknow_feats is not None:
        slabs.append(unknow_feats)
    return slabs


def fold_batchnorm(w, gamma, beta, running_mean, running_var, eps=1e-5):
    """Fold inference-mode BatchNorm2d into a 1x1-conv weight/bias."""
    scale = gamma / jnp.sqrt(running_var + eps)
    return w * scale[:, None], beta - running_mean * scale


def pointnet_fp_forward(unknown, known, unknow_feats, known_feats, layers, *,
                        feature_dtype=None, tile_bytes=4 * 2 ** 20):
    """Full PointnetFPModule.forward with the SharedMLP running in Pallas."""
    slabs = _fp_feature_slabs(unknown, known, unknow_feats, known_feats)
    if feature_dtype is not None:
        slabs = [s.astype(feature_dtype) for s in slabs]
    # unsqueeze(-1)/squeeze(-1) around the MLP are value no-ops; the fused
    # 1x1-conv stack runs directly on the (B, C, n) slabs (concat fused in-kernel).
    return shared_mlp_pallas(slabs, layers, tile_bytes=tile_bytes)


def pointnet_fp_reference(unknown, known, unknow_feats, known_feats, layers, *,
                          feature_dtype=None):
    """Pure-JAX reference (same math: f32 accumulation, f32 bias+ReLU)."""
    slabs = _fp_feature_slabs(unknown, known, unknow_feats, known_feats)
    if feature_dtype is not None:
        slabs = [s.astype(feature_dtype) for s in slabs]
    h = jnp.concatenate(slabs, axis=1) if len(slabs) > 1 else slabs[0]
    for w, b in layers:
        acc = jnp.einsum("oc,bcn->bon", w, h.astype(w.dtype),
                         preferred_element_type=jnp.float32)
        h = jnp.maximum(acc + b[None, :, None].astype(jnp.float32), 0.0)
    return h


# ----------------------------------------------------------------------------
# Demo / self-test
# ----------------------------------------------------------------------------
if __name__ == "__main__":
    key = jax.random.PRNGKey(0)
    k_unk, k_kn, k_uf, k_kf, k_w, k_bn = jax.random.split(key, 6)

    # Small but representative FP-module shapes.
    B, n, m = 2, 256, 64          # n unknown points, m known points
    C1, C2 = 4, 6                 # skip-connection / propagated feature channels
    mlp = [C1 + C2, 64, 32]       # SharedMLP channel spec

    unknown = jax.random.normal(k_unk, (B, n, 3), dtype=jnp.float32)
    known = jax.random.normal(k_kn, (B, m, 3), dtype=jnp.float32)
    unknow_feats = jax.random.normal(k_uf, (B, C1, n), dtype=jnp.float32)
    known_feats = jax.random.normal(k_kf, (B, C2, m), dtype=jnp.float32)

    # SharedMLP params: conv weights (bias=False when bn=True) + BN folded (inference).
    layers = []
    w_keys = jax.random.split(k_w, len(mlp) - 1)
    bn_keys = jax.random.split(k_bn, len(mlp) - 1)
    for l in range(len(mlp) - 1):
        cin, cout = mlp[l], mlp[l + 1]
        w = ((2.0 / cin) ** 0.5) * jax.random.normal(w_keys[l], (cout, cin), jnp.float32)
        kg, kb, km = jax.random.split(bn_keys[l], 3)
        gamma = 1.0 + 0.1 * jax.random.normal(kg, (cout,), jnp.float32)
        beta = 0.1 * jax.random.normal(kb, (cout,), jnp.float32)
        run_mean = 0.1 * jax.random.normal(km, (cout,), jnp.float32)
        run_var = jnp.ones((cout,), jnp.float32)
        layers.append(fold_batchnorm(w, gamma, beta, run_mean, run_var))

    # --- f32 path: strict check against the pure-JAX reference ---------------
    out = pointnet_fp_forward(unknown, known, unknow_feats, known_feats, layers)
    out = jax.block_until_ready(out)
    ref = pointnet_fp_reference(unknown, known, unknow_feats, known_feats, layers)
    assert out.shape == (B, mlp[-1], n), out.shape
    assert jnp.allclose(out, ref, atol=1e-4, rtol=1e-4), "f32 mismatch vs reference"

    # --- bf16 I/O path (HBM-bandwidth / v5e-MXU optimization): loose check ----
    layers_bf16 = [(w.astype(jnp.bfloat16), b) for (w, b) in layers]
    out_bf16 = pointnet_fp_forward(unknown, known, unknow_feats, known_feats,
                                   layers_bf16, feature_dtype=jnp.bfloat16)
    out_bf16 = jax.block_until_ready(out_bf16)
    ref_bf16 = pointnet_fp_reference(unknown, known, unknow_feats, known_feats,
                                     layers_bf16, feature_dtype=jnp.bfloat16)
    assert out_bf16.shape == (B, mlp[-1], n)
    assert out_bf16.dtype == jnp.bfloat16
    assert jnp.allclose(out_bf16.astype(jnp.float32), ref_bf16.astype(jnp.float32),
                        atol=2e-2, rtol=2e-2), "bf16 mismatch vs reference"

    print("KERNEL_OK")
</pallas_src>

<mosaic_0001>
module attributes {stable_mosaic.version = 11 : i64} {
  func.func @kernel(%arg0: i32, %arg1: i32, %arg2: memref<2x6x128xf32, #tpu.memory_space<vmem>>, %arg3: memref<2x4x128xf32, #tpu.memory_space<vmem>>, %arg4: memref<64x6xf32, #tpu.memory_space<vmem>>, %arg5: memref<64x4xf32, #tpu.memory_space<vmem>>, %arg6: memref<64x1xf32, #tpu.memory_space<vmem>>, %arg7: memref<32x64xf32, #tpu.memory_space<vmem>>, %arg8: memref<32x1xf32, #tpu.memory_space<vmem>>, %arg9: memref<2x32x128xf32, #tpu.memory_space<vmem>>) attributes {dimension_semantics = [#tpu.dimension_semantics<parallel>, #tpu.dimension_semantics<parallel>], iteration_bounds = array<i64: 1, 2>, scalar_prefetch = 0 : i64, scratch_operands = 0 : i64, tpu.core_type = #tpu.core_type<tc>, window_params = [{transform_indices = @transform_0, window_bounds = array<i64: 2, 6, 128>}, {transform_indices = @transform_1, window_bounds = array<i64: 2, 4, 128>}, {pipeline_mode = #tpu.pipeline_mode<synchronous>, transform_indices = @transform_2, window_bounds = array<i64: 64, 6>}, {pipeline_mode = #tpu.pipeline_mode<synchronous>, transform_indices = @transform_3, window_bounds = array<i64: 64, 4>}, {pipeline_mode = #tpu.pipeline_mode<synchronous>, transform_indices = @transform_4, window_bounds = array<i64: 64, 1>}, {pipeline_mode = #tpu.pipeline_mode<synchronous>, transform_indices = @transform_5, window_bounds = array<i64: 32, 64>}, {pipeline_mode = #tpu.pipeline_mode<synchronous>, transform_indices = @transform_6, window_bounds = array<i64: 32, 1>}, {transform_indices = @transform_7, window_bounds = array<i64: 2, 32, 128>}]} {
    %c0 = arith.constant 0 : index
    %c0_0 = arith.constant 0 : index
    %0 = vector.load %arg4[%c0, %c0_0] : memref<64x6xf32, #tpu.memory_space<vmem>>, vector<64x6xf32>
    %c0_1 = arith.constant 0 : index
    %c0_2 = arith.constant 0 : index
    %c0_3 = arith.constant 0 : index
    %1 = vector.load %arg2[%c0_1, %c0_2, %c0_3] : memref<2x6x128xf32, #tpu.memory_space<vmem>>, vector<1x6x128xf32>
    %2 = vector.shape_cast %1 : vector<1x6x128xf32> to vector<6x128xf32>
    %cst = arith.constant dense<0.000000e+00> : vector<64x128xf32>
    %3 = tpu.matmul %0, %2, %cst {dimension_numbers = #tpu.dot_dimension_numbers<[1], [0], [0], [1], [0, 0, 1, 1], [], []>} : vector<64x6xf32>, vector<6x128xf32>, vector<64x128xf32> -> vector<64x128xf32>
    %c0_4 = arith.constant 0 : index
    %c0_5 = arith.constant 0 : index
    %4 = vector.load %arg5[%c0_4, %c0_5] : memref<64x4xf32, #tpu.memory_space<vmem>>, vector<64x4xf32>
    %c0_6 = arith.constant 0 : index
    %c0_7 = arith.constant 0 : index
    %c0_8 = arith.constant 0 : index
    %5 = vector.load %arg3[%c0_6, %c0_7, %c0_8] : memref<2x4x128xf32, #tpu.memory_space<vmem>>, vector<1x4x128xf32>
    %6 = vector.shape_cast %5 : vector<1x4x128xf32> to vector<4x128xf32>
    %cst_9 = arith.constant dense<0.000000e+00> : vector<64x128xf32>
    %7 = tpu.matmul %4, %6, %cst_9 {dimension_numbers = #tpu.dot_dimension_numbers<[1], [0], [0], [1], [0, 0, 1, 1], [], []>} : vector<64x4xf32>, vector<4x128xf32>, vector<64x128xf32> -> vector<64x128xf32>
    %8 = arith.addf %3, %7 : vector<64x128xf32>
    %c0_10 = arith.constant 0 : index
    %c0_11 = arith.constant 0 : index
    %9 = vector.load %arg6[%c0_10, %c0_11] : memref<64x1xf32, #tpu.memory_space<vmem>>, vector<64x1xf32>
    %10 = vector.broadcast %9 : vector<64x1xf32> to vector<64x128xf32>
    %11 = arith.addf %8, %10 : vector<64x128xf32>
    %cst_12 = arith.constant 0.000000e+00 : f32
    %12 = vector.broadcast %cst_12 : f32 to vector<64x128xf32>
    %13 = arith.maximumf %11, %12 : vector<64x128xf32>
    %c0_13 = arith.constant 0 : index
    %c0_14 = arith.constant 0 : index
    %14 = vector.load %arg7[%c0_13, %c0_14] : memref<32x64xf32, #tpu.memory_space<vmem>>, vector<32x64xf32>
    %c0_15 = arith.constant 0 : index
    %c0_16 = arith.constant 0 : index
    %15 = vector.load %arg8[%c0_15, %c0_16] : memref<32x1xf32, #tpu.memory_space<vmem>>, vector<32x1xf32>
    %cst_17 = arith.constant dense<0.000000e+00> : vector<32x128xf32>
    %16 = tpu.matmul %14, %13, %cst_17 {dimension_numbers = #tpu.dot_dimension_numbers<[1], [0], [0], [1], [0, 0, 1, 1], [], []>} : vector<32x64xf32>, vector<64x128xf32>, vector<32x128xf32> -> vector<32x128xf32>
    %17 = vector.broadcast %15 : vector<32x1xf32> to vector<32x128xf32>
    %18 = arith.addf %16, %17 : vector<32x128xf32>
    %cst_18 = arith.constant 0.000000e+00 : f32
    %19 = vector.broadcast %cst_18 : f32 to vector<32x128xf32>
    %20 = arith.maximumf %18, %19 : vector<32x128xf32>
    %c0_19 = arith.constant 0 : index
    %c0_20 = arith.constant 0 : index
    %c0_21 = arith.constant 0 : index
    %21 = vector.load %arg9[%c0_19, %c0_20, %c0_21] : memref<2x32x128xf32, #tpu.memory_space<vmem>>, vector<1x32x128xf32>
    %22 = vector.shape_cast %21 : vector<1x32x128xf32> to vector<32x128xf32>
    %23 = vector.shape_cast %20 : vector<32x128xf32> to vector<1x32x128xf32>
    tpu.vector_store %arg9[%c0_19, %c0_20, %c0_21], %23 {strides = array<i32>} : memref<2x32x128xf32, #tpu.memory_space<vmem>>, vector<1x32x128xf32>,
    %c0_22 = arith.constant 0 : index
    %c0_23 = arith.constant 0 : index
    %24 = vector.load %arg4[%c0_22, %c0_23] : memref<64x6xf32, #tpu.memory_space<vmem>>, vector<64x6xf32>
    %c1 = arith.constant 1 : index
    %c0_24 = arith.constant 0 : index
    %c0_25 = arith.constant 0 : index
    %25 = vector.load %arg2[%c1, %c0_24, %c0_25] : memref<2x6x128xf32, #tpu.memory_space<vmem>>, vector<1x6x128xf32>
    %26 = vector.shape_cast %25 : vector<1x6x128xf32> to vector<6x128xf32>
    %cst_26 = arith.constant dense<0.000000e+00> : vector<64x128xf32>
    %27 = tpu.matmul %24, %26, %cst_26 {dimension_numbers = #tpu.dot_dimension_numbers<[1], [0], [0], [1], [0, 0, 1, 1], [], []>} : vector<64x6xf32>, vector<6x128xf32>, vector<64x128xf32> -> vector<64x128xf32>
    %c0_27 = arith.constant 0 : index
    %c0_28 = arith.constant 0 : index
    %28 = vector.load %arg5[%c0_27, %c0_28] : memref<64x4xf32, #tpu.memory_space<vmem>>, vector<64x4xf32>
    %c1_29 = arith.constant 1 : index
    %c0_30 = arith.constant 0 : index
    %c0_31 = arith.constant 0 : index
    %29 = vector.load %arg3[%c1_29, %c0_30, %c0_31] : memref<2x4x128xf32, #tpu.memory_space<vmem>>, vector<1x4x128xf32>
    %30 = vector.shape_cast %29 : vector<1x4x128xf32> to vector<4x128xf32>
    %cst_32 = arith.constant dense<0.000000e+00> : vector<64x128xf32>
    %31 = tpu.matmul %28, %30, %cst_32 {dimension_numbers = #tpu.dot_dimension_numbers<[1], [0], [0], [1], [0, 0, 1, 1], [], []>} : vector<64x4xf32>, vector<4x128xf32>, vector<64x128xf32> -> vector<64x128xf32>
    %32 = arith.addf %27, %31 : vector<64x128xf32>
    %c0_33 = arith.constant 0 : index
    %c0_34 = arith.constant 0 : index
    %33 = vector.load %arg6[%c0_33, %c0_34] : memref<64x1xf32, #tpu.memory_space<vmem>>, vector<64x1xf32>
    %34 = vector.broadcast %33 : vector<64x1xf32> to vector<64x128xf32>
    %35 = arith.addf %32, %34 : vector<64x128xf32>
    %cst_35 = arith.constant 0.000000e+00 : f32
    %36 = vector.broadcast %cst_35 : f32 to vector<64x128xf32>
    %37 = arith.maximumf %35, %36 : vector<64x128xf32>
    %c0_36 = arith.constant 0 : index
    %c0_37 = arith.constant 0 : index
    %38 = vector.load %arg7[%c0_36, %c0_37] : memref<32x64xf32, #tpu.memory_space<vmem>>, vector<32x64xf32>
    %c0_38 = arith.constant 0 : index
    %c0_39 = arith.constant 0 : index
    %39 = vector.load %arg8[%c0_38, %c0_39] : memref<32x1xf32, #tpu.memory_space<vmem>>, vector<32x1xf32>
    %cst_40 = arith.constant dense<0.000000e+00> : vector<32x128xf32>
    %40 = tpu.matmul %38, %37, %cst_40 {dimension_numbers = #tpu.dot_dimension_numbers<[1], [0], [0], [1], [0, 0, 1, 1], [], []>} : vector<32x64xf32>, vector<64x128xf32>, vector<32x128xf32> -> vector<32x128xf32>
    %41 = vector.broadcast %39 : vector<32x1xf32> to vector<32x128xf32>
    %42 = arith.addf %40, %41 : vector<32x128xf32>
    %cst_41 = arith.constant 0.000000e+00 : f32
    %43 = vector.broadcast %cst_41 : f32 to vector<32x128xf32>
    %44 = arith.maximumf %42, %43 : vector<32x128xf32>
    %c1_42 = arith.constant 1 : index
    %c0_43 = arith.constant 0 : index
    %c0_44 = arith.constant 0 : index
    %45 = vector.load %arg9[%c1_42, %c0_43, %c0_44] : memref<2x32x128xf32, #tpu.memory_space<vmem>>, vector<1x32x128xf32>
    %46 = vector.shape_cast %45 : vector<1x32x128xf32> to vector<32x128xf32>
    %47 = vector.shape_cast %44 : vector<32x128xf32> to vector<1x32x128xf32>
    tpu.vector_store %arg9[%c1_42, %c0_43, %c0_44], %47 {strides = array<i32>} : memref<2x32x128xf32, #tpu.memory_space<vmem>>, vector<1x32x128xf32>,
    return
  }
  func.func @transform_0(%arg0: i32, %arg1: i32) -> (i32, i32, i32) {
    %c0_i32 = arith.constant 0 : i32
    %c0_i32_0 = arith.constant 0 : i32
    return %arg0, %c0_i32, %arg1 : i32, i32, i32
  }
  func.func @transform_1(%arg0: i32, %arg1: i32) -> (i32, i32, i32) {
    %c0_i32 = arith.constant 0 : i32
    %c0_i32_0 = arith.constant 0 : i32
    return %arg0, %c0_i32, %arg1 : i32, i32, i32
  }
  func.func @transform_2(%arg0: i32, %arg1: i32) -> (i32, i32) {
    %c0_i32 = arith.constant 0 : i32
    %c0_i32_0 = arith.constant 0 : i32
    %c0_i32_1 = arith.constant 0 : i32
    return %c0_i32, %c0_i32_0 : i32, i32
  }
  func.func @transform_3(%arg0: i32, %arg1: i32) -> (i32, i32) {
    %c0_i32 = arith.constant 0 : i32
    %c0_i32_0 = arith.constant 0 : i32
    %c0_i32_1 = arith.constant 0 : i32
    return %c0_i32, %c0_i32_0 : i32, i32
  }
  func.func @transform_4(%arg0: i32, %arg1: i32) -> (i32, i32) {
    %c0_i32 = arith.constant 0 : i32
    %c0_i32_0 = arith.constant 0 : i32
    %c0_i32_1 = arith.constant 0 : i32
    return %c0_i32, %c0_i32_0 : i32, i32
  }
  func.func @transform_5(%arg0: i32, %arg1: i32) -> (i32, i32) {
    %c0_i32 = arith.constant 0 : i32
    %c0_i32_0 = arith.constant 0 : i32
    %c0_i32_1 = arith.constant 0 : i32
    return %c0_i32, %c0_i32_0 : i32, i32
  }
  func.func @transform_6(%arg0: i32, %arg1: i32) -> (i32, i32) {
    %c0_i32 = arith.constant 0 : i32
    %c0_i32_0 = arith.constant 0 : i32
    %c0_i32_1 = arith.constant 0 : i32
    return %c0_i32, %c0_i32_0 : i32, i32
  }
  func.func @transform_7(%arg0: i32, %arg1: i32) -> (i32, i32, i32) {
    %c0_i32 = arith.constant 0 : i32
    %c0_i32_0 = arith.constant 0 : i32
    return %arg0, %c0_i32, %arg1 : i32, i32, i32
  }
}

module attributes {stable_mosaic.version = 11 : i64} {
  func.func @kernel(%arg0: i32, %arg1: i32, %arg2: memref<2x6x128xf32, #tpu.memory_space<vmem>>, %arg3: memref<2x4x128xf32, #tpu.memory_space<vmem>>, %arg4: memref<64x6xf32, #tpu.memory_space<vmem>>, %arg5: memref<64x4xf32, #tpu.memory_space<vmem>>, %arg6: memref<64x1xf32, #tpu.memory_space<vmem>>, %arg7: memref<32x64xf32, #tpu.memory_space<vmem>>, %arg8: memref<32x1xf32, #tpu.memory_space<vmem>>, %arg9: memref<2x32x128xf32, #tpu.memory_space<vmem>>) attributes {dimension_semantics = [#tpu.dimension_semantics<parallel>, #tpu.dimension_semantics<parallel>], iteration_bounds = array<i64: 1, 2>, scalar_prefetch = 0 : i64, scratch_operands = 0 : i64, tpu.core_type = #tpu.core_type<tc>, window_params = [{transform_indices = @transform_0, window_bounds = array<i64: 2, 6, 128>}, {transform_indices = @transform_1, window_bounds = array<i64: 2, 4, 128>}, {pipeline_mode = #tpu.pipeline_mode<synchronous>, transform_indices = @transform_2, window_bounds = array<i64: 64, 6>}, {pipeline_mode = #tpu.pipeline_mode<synchronous>, transform_indices = @transform_3, window_bounds = array<i64: 64, 4>}, {pipeline_mode = #tpu.pipeline_mode<synchronous>, transform_indices = @transform_4, window_bounds = array<i64: 64, 1>}, {pipeline_mode = #tpu.pipeline_mode<synchronous>, transform_indices = @transform_5, window_bounds = array<i64: 32, 64>}, {pipeline_mode = #tpu.pipeline_mode<synchronous>, transform_indices = @transform_6, window_bounds = array<i64: 32, 1>}, {transform_indices = @transform_7, window_bounds = array<i64: 2, 32, 128>}]} {
    %c0 = arith.constant 0 : index
    %c0_0 = arith.constant 0 : index
    %0 = vector.load %arg4[%c0, %c0_0] : memref<64x6xf32, #tpu.memory_space<vmem>>, vector<64x6xf32>
    %c0_1 = arith.constant 0 : index
    %c0_2 = arith.constant 0 : index
    %c0_3 = arith.constant 0 : index
    %1 = vector.load %arg2[%c0_1, %c0_2, %c0_3] : memref<2x6x128xf32, #tpu.memory_space<vmem>>, vector<1x6x128xf32>
    %2 = vector.shape_cast %1 : vector<1x6x128xf32> to vector<6x128xf32>
    %cst = arith.constant dense<0.000000e+00> : vector<64x128xf32>
    %3 = tpu.matmul %0, %2, %cst {dimension_numbers = #tpu.dot_dimension_numbers<[1], [0], [0], [1], [0, 0, 1, 1], [], []>} : vector<64x6xf32>, vector<6x128xf32>, vector<64x128xf32> -> vector<64x128xf32>
    %c0_4 = arith.constant 0 : index
    %c0_5 = arith.constant 0 : index
    %4 = vector.load %arg5[%c0_4, %c0_5] : memref<64x4xf32, #tpu.memory_space<vmem>>, vector<64x4xf32>
    %c0_6 = arith.constant 0 : index
    %c0_7 = arith.constant 0 : index
    %c0_8 = arith.constant 0 : index
    %5 = vector.load %arg3[%c0_6, %c0_7, %c0_8] : memref<2x4x128xf32, #tpu.memory_space<vmem>>, vector<1x4x128xf32>
    %6 = vector.shape_cast %5 : vector<1x4x128xf32> to vector<4x128xf32>
    %cst_9 = arith.constant dense<0.000000e+00> : vector<64x128xf32>
    %7 = tpu.matmul %4, %6, %cst_9 {dimension_numbers = #tpu.dot_dimension_numbers<[1], [0], [0], [1], [0, 0, 1, 1], [], []>} : vector<64x4xf32>, vector<4x128xf32>, vector<64x128xf32> -> vector<64x128xf32>
    %8 = arith.addf %3, %7 : vector<64x128xf32>
    %c0_10 = arith.constant 0 : index
    %c0_11 = arith.constant 0 : index
    %9 = vector.load %arg6[%c0_10, %c0_11] : memref<64x1xf32, #tpu.memory_space<vmem>>, vector<64x1xf32>
    %10 = vector.broadcast %9 : vector<64x1xf32> to vector<64x128xf32>
    %11 = arith.addf %8, %10 : vector<64x128xf32>
    %cst_12 = arith.constant 0.000000e+00 : f32
    %12 = vector.broadcast %cst_12 : f32 to vector<64x128xf32>
    %13 = arith.maximumf %11, %12 : vector<64x128xf32>
    %c0_13 = arith.constant 0 : index
    %c0_14 = arith.constant 0 : index
    %14 = vector.load %arg7[%c0_13, %c0_14] : memref<32x64xf32, #tpu.memory_space<vmem>>, vector<32x64xf32>
    %c0_15 = arith.constant 0 : index
    %c0_16 = arith.constant 0 : index
    %15 = vector.load %arg8[%c0_15, %c0_16] : memref<32x1xf32, #tpu.memory_space<vmem>>, vector<32x1xf32>
    %cst_17 = arith.constant dense<0.000000e+00> : vector<32x128xf32>
    %16 = tpu.matmul %14, %13, %cst_17 {dimension_numbers = #tpu.dot_dimension_numbers<[1], [0], [0], [1], [0, 0, 1, 1], [], []>} : vector<32x64xf32>, vector<64x128xf32>, vector<32x128xf32> -> vector<32x128xf32>
    %17 = vector.broadcast %15 : vector<32x1xf32> to vector<32x128xf32>
    %18 = arith.addf %16, %17 : vector<32x128xf32>
    %cst_18 = arith.constant 0.000000e+00 : f32
    %19 = vector.broadcast %cst_18 : f32 to vector<32x128xf32>
    %20 = arith.maximumf %18, %19 : vector<32x128xf32>
    %c0_19 = arith.constant 0 : index
    %c0_20 = arith.constant 0 : index
    %c0_21 = arith.constant 0 : index
    %21 = vector.load %arg9[%c0_19, %c0_20, %c0_21] : memref<2x32x128xf32, #tpu.memory_space<vmem>>, vector<1x32x128xf32>
    %22 = vector.shape_cast %21 : vector<1x32x128xf32> to vector<32x128xf32>
    %23 = vector.shape_cast %20 : vector<32x128xf32> to vector<1x32x128xf32>
    tpu.vector_store %arg9[%c0_19, %c0_20, %c0_21], %23 {strides = array<i32>} : memref<2x32x128xf32, #tpu.memory_space<vmem>>, vector<1x32x128xf32>,
    %c0_22 = arith.constant 0 : index
    %c0_23 = arith.constant 0 : index
    %24 = vector.load %arg4[%c0_22, %c0_23] : memref<64x6xf32, #tpu.memory_space<vmem>>, vector<64x6xf32>
    %c1 = arith.constant 1 : index
    %c0_24 = arith.constant 0 : index
    %c0_25 = arith.constant 0 : index
    %25 = vector.load %arg2[%c1, %c0_24, %c0_25] : memref<2x6x128xf32, #tpu.memory_space<vmem>>, vector<1x6x128xf32>
    %26 = vector.shape_cast %25 : vector<1x6x128xf32> to vector<6x128xf32>
    %cst_26 = arith.constant dense<0.000000e+00> : vector<64x128xf32>
    %27 = tpu.matmul %24, %26, %cst_26 {dimension_numbers = #tpu.dot_dimension_numbers<[1], [0], [0], [1], [0, 0, 1, 1], [], []>} : vector<64x6xf32>, vector<6x128xf32>, vector<64x128xf32> -> vector<64x128xf32>
    %c0_27 = arith.constant 0 : index
    %c0_28 = arith.constant 0 : index
    %28 = vector.load %arg5[%c0_27, %c0_28] : memref<64x4xf32, #tpu.memory_space<vmem>>, vector<64x4xf32>
    %c1_29 = arith.constant 1 : index
    %c0_30 = arith.constant 0 : index
    %c0_31 = arith.constant 0 : index
    %29 = vector.load %arg3[%c1_29, %c0_30, %c0_31] : memref<2x4x128xf32, #tpu.memory_space<vmem>>, vector<1x4x128xf32>
    %30 = vector.shape_cast %29 : vector<1x4x128xf32> to vector<4x128xf32>
    %cst_32 = arith.constant dense<0.000000e+00> : vector<64x128xf32>
    %31 = tpu.matmul %28, %30, %cst_32 {dimension_numbers = #tpu.dot_dimension_numbers<[1], [0], [0], [1], [0, 0, 1, 1], [], []>} : vector<64x4xf32>, vector<4x128xf32>, vector<64x128xf32> -> vector<64x128xf32>
    %32 = arith.addf %27, %31 : vector<64x128xf32>
    %c0_33 = arith.constant 0 : index
    %c0_34 = arith.constant 0 : index
    %33 = vector.load %arg6[%c0_33, %c0_34] : memref<64x1xf32, #tpu.memory_space<vmem>>, vector<64x1xf32>
    %34 = vector.broadcast %33 : vector<64x1xf32> to vector<64x128xf32>
    %35 = arith.addf %32, %34 : vector<64x128xf32>
    %cst_35 = arith.constant 0.000000e+00 : f32
    %36 = vector.broadcast %cst_35 : f32 to vector<64x128xf32>
    %37 = arith.maximumf %35, %36 : vector<64x128xf32>
    %c0_36 = arith.constant 0 : index
    %c0_37 = arith.constant 0 : index
    %38 = vector.load %arg7[%c0_36, %c0_37] : memref<32x64xf32, #tpu.memory_space<vmem>>, vector<32x64xf32>
    %c0_38 = arith.constant 0 : index
    %c0_39 = arith.constant 0 : index
    %39 = vector.load %arg8[%c0_38, %c0_39] : memref<32x1xf32, #tpu.memory_space<vmem>>, vector<32x1xf32>
    %cst_40 = arith.constant dense<0.000000e+00> : vector<32x128xf32>
    %40 = tpu.matmul %38, %37, %cst_40 {dimension_numbers = #tpu.dot_dimension_numbers<[1], [0], [0], [1], [0, 0, 1, 1], [], []>} : vector<32x64xf32>, vector<64x128xf32>, vector<32x128xf32> -> vector<32x128xf32>
    %41 = vector.broadcast %39 : vector<32x1xf32> to vector<32x128xf32>
    %42 = arith.addf %40, %41 : vector<32x128xf32>
    %cst_41 = arith.constant 0.000000e+00 : f32
    %43 = vector.broadcast %cst_41 : f32 to vector<32x128xf32>
    %44 = arith.maximumf %42, %43 : vector<32x128xf32>
    %c1_42 = arith.constant 1 : index
    %c0_43 = arith.constant 0 : index
    %c0_44 = arith.constant 0 : index
    %45 = vector.load %arg9[%c1_42, %c0_43, %c0_44] : memref<2x32x128xf32, #tpu.memory_space<vmem>>, vector<1x32x128xf32>
    %46 = vector.shape_cast %45 : vector<1x32x128xf32> to vector<32x128xf32>
    %47 = vector.shape_cast %44 : vector<32x128xf32> to vector<1x32x128xf32>
    tpu.vector_store %arg9[%c1_42, %c0_43, %c0_44], %47 {strides = array<i32>} : memref<2x32x128xf32, #tpu.memory_space<vmem>>, vector<1x32x128xf32>,
    return
  }
  func.func @transform_0(%arg0: i32, %arg1: i32) -> (i32, i32, i32) {
    %c0_i32 = arith.constant 0 : i32
    %c0_i32_0 = arith.constant 0 : i32
    return %arg0, %c0_i32, %arg1 : i32, i32, i32
  }
  func.func @transform_1(%arg0: i32, %arg1: i32) -> (i32, i32, i32) {
    %c0_i32 = arith.constant 0 : i32
    %c0_i32_0 = arith.constant 0 : i32
    return %arg0, %c0_i32, %arg1 : i32, i32, i32
  }
  func.func @transform_2(%arg0: i32, %arg1: i32) -> (i32, i32) {
    %c0_i32 = arith.constant 0 : i32
    %c0_i32_0 = arith.constant 0 : i32
    %c0_i32_1 = arith.constant 0 : i32
    return %c0_i32, %c0_i32_0 : i32, i32
  }
  func.func @transform_3(%arg0: i32, %arg1: i32) -> (i32, i32) {
    %c0_i32 = arith.constant 0 : i32
    %c0_i32_0 = arith.constant 0 : i32
    %c0_i32_1 = arith.constant 0 : i32
    return %c0_i32, %c0_i32_0 : i32, i32
  }
  func.func @transform_4(%arg0: i32, %arg1: i32) -> (i32, i32) {
    %c0_i32 = arith.constant 0 : i32
    %c0_i32_0 = arith.constant 0 : i32
    %c0_i32_1 = arith.constant 0 : i32
    return %c0_i32, %c0_i32_0 : i32, i32
  }
  func.func @transform_5(%arg0: i32, %arg1: i32) -> (i32, i32) {
    %c0_i32 = arith.constant 0 : i32
    %c0_i32_0 = arith.constant 0 : i32
    %c0_i32_1 = arith.constant 0 : i32
    return %c0_i32, %c0_i32_0 : i32, i32
  }
  func.func @transform_6(%arg0: i32, %arg1: i32) -> (i32, i32) {
    %c0_i32 = arith.constant 0 : i32
    %c0_i32_0 = arith.constant 0 : i32
    %c0_i32_1 = arith.constant 0 : i32
    return %c0_i32, %c0_i32_0 : i32, i32
  }
  func.func @transform_7(%arg0: i32, %arg1: i32) -> (i32, i32, i32) {
    %c0_i32 = arith.constant 0 : i32
    %c0_i32_0 = arith.constant 0 : i32
    return %arg0, %c0_i32, %arg1 : i32, i32, i32
  }
}

</mosaic_0001>

<llo_original>
// kernel: tpu_custom_call.1
$region0: #{tpu_custom_call.1}
  #allocation0 [shape = 'u32[]', space=smem, size = 0x4, offset = 0x4, fixed_abs, tag = 'smem constant byte address 0x4 - core index']
  #allocation1 [shape = 'u32[144,128]{1,0:T(1,128)}', space=vmem, size = 0x12000, scoped, tag = 'internal scratch']
  %s0 = inlined_call_operand.vmem [shape: f32[2,6,256], index: 0, kind: input, shape index: {}]
  %s1 = inlined_call_operand.vmem [shape: f32[2,4,256], index: 1, kind: input, shape index: {}]
  %s2 = inlined_call_operand.vmem [shape: f32[64,6], index: 2, kind: input, shape index: {}]
  %s3 = inlined_call_operand.vmem [shape: f32[64,4], index: 3, kind: input, shape index: {}]
  %s4 = inlined_call_operand.vmem [shape: f32[64,1], index: 4, kind: input, shape index: {}]
  %s5 = inlined_call_operand.vmem [shape: f32[32,64], index: 5, kind: input, shape index: {}]
  %s6 = inlined_call_operand.vmem [shape: f32[32,1], index: 6, kind: input, shape index: {}]
  %s7 = inlined_call_operand.hbm [shape: f32[2,32,256], index: 7, kind: output, shape index: {}]
  %s8 = sld [smem:[#allocation0]]
  $region140: #{tpu_custom_call.1} parent=0
    _
  %s10 = ssub.s32 1, %s8
  %s11 = scalar_select 0, %s10, %s8
  $region1: #{tpu_custom_call.1} parent=0
    #allocation2 [shape = 'u8[16384]{0}', space=vmem, size = 0x4000, scoped, tag = 'input window, operand 0']
    #allocation3 [shape = 'u8[8192]{0}', space=vmem, size = 0x2000, scoped, tag = 'input window, operand 1']
    #allocation4 [shape = 'u8[65536]{0}', space=vmem, size = 0x10000, scoped, tag = 'output window, operand 0']
    #allocation5 [shape = 's32[2]{0}', space=sflag, size = 0x8, scoped, tag = 'scoped memory for tpu_custom_call.1']
    %12 = vsyncpa [#allocation5], 0
    %s13 = scalar_lea.sflag [#allocation5], 1
    %14 = vsyncpa %s13, 0
    loop: start=0, step=1, limit=4
    $region2: #{tpu_custom_call.1} parent=1 // loop_pre_header
      _
    $region3: #{tpu_custom_call.1} parent=1 // loop_header
      %s16 = sphi 0, %s20
      %p17 = scmp.ge.s32.totalorder %s16, 4
      %s23 = sphi 0, %s35
      %s24 = sphi 0, %s31
      %s25 = sphi 0, %s23
      %s26 = sphi 0, %s24
      %s27 = sphi 0, %s25
      %s28 = sphi 0, %s26
      %s40 = sphi 0, %s42
      %s43 = sphi 0, %s40
      %s44 = sphi 0, %s43
      %s60 = sphi 0, %s44
      %s68 = sphi 0, %s70
      %s71 = sphi 0, %s68
      %s72 = sphi 0, %s71
      %s88 = sphi 0, %s72
      %s92 = sphi 0, %s92
      %s94 = sphi 0, %s92
      %s95 = sphi 0, %s94
      %s109 = sphi 0, %s95
      %s113 = sphi 0, %s113
      %s115 = sphi 0, %s113
      %s116 = sphi 0, %s115
      %s130 = sphi 0, %s116
      %s134 = sphi 0, %s134
      %s136 = sphi 0, %s134
      %s137 = sphi 0, %s136
      %s151 = sphi 0, %s137
      %s155 = sphi 0, %s155
      %s157 = sphi 0, %s155
      %s158 = sphi 0, %s157
      %s172 = sphi 0, %s158
      %s176 = sphi 0, %s176
      %s178 = sphi 0, %s176
      %s179 = sphi 0, %s178
      %s193 = sphi 0, %s179
      %s201 = sphi 0, %s203
      %s204 = sphi 0, %s201
      %s205 = sphi 0, %s204
      %s221 = sphi 0, %s205
    $region4: #{tpu_custom_call.1} parent=1 // loop_header_branch
      %19 = sbr.rel (%p17) target = $region8
    $region5: #{tpu_custom_call.1} parent=1 // loop_body
      %s21 = ssub.s32 %s16, 1
      %s22 = ssub.s32 %s16, 2
      %s29 = sadd.s32 1, %s24
      %p30 = scmp.ge.s32.totalorder %s29, 2
      %s31 = scalar_select %p30, 0, %s29
      %s32 = sadd.s32 1, %s23
      %s33 = scalar_select %p30, %s32, %s23
      %p34 = scmp.ge.s32.totalorder %s33, 1
      %s35 = scalar_select %p34, 0, %s33
      %s36 = ssub.s32 %s23, %s35
      %s37 = ssub.s32 %s24, %s31
      %s38 = sor.u32 %s36, %s37
      %p39 = scmp.eq.s32.totalorder %s38, 0
      %s41 = sadd.s32 %s40, 1
      %s42 = scalar_select %p39, %s40, %s41
      %p45 = pneg %p39
      %p46 = scmp.eq.s32.totalorder %s16, 1
      %p47 = por %p45, %p46
      %p48 = scmp.ne.s32.totalorder %s40, %s43
      %p49 = scmp.eq.s32.totalorder %s16, 0
      %p50 = por %p48, %p49
      %p51 = scmp.ne.s32.totalorder %s40, %s43
      %p52 = scmp.eq.s32.totalorder %s21, 1
      %p53 = por %p51, %p52
      %p54 = scmp.ne.s32.totalorder %s43, %s44
      %p55 = scmp.eq.s32.totalorder %s21, 0
      %p56 = por %p54, %p55
      %p57 = scmp.ne.s32.totalorder %s43, %s44
      %p58 = scmp.eq.s32.totalorder %s22, 1
      %p59 = por %p57, %p58
      %p61 = scmp.ne.s32.totalorder %s44, %s60
      %p62 = scmp.eq.s32.totalorder %s22, 0
      %p63 = por %p61, %p62
      %s64 = ssub.s32 %s23, %s35
      %s65 = ssub.s32 %s24, %s31
      %s66 = sor.u32 %s64, %s65
      %p67 = scmp.eq.s32.totalorder %s66, 0
      %s69 = sadd.s32 %s68, 1
      %s70 = scalar_select %p67, %s68, %s69
      %p73 = pneg %p67
      %p74 = scmp.eq.s32.totalorder %s16, 1
      %p75 = por %p73, %p74
      %p76 = scmp.ne.s32.totalorder %s68, %s71
      %p77 = scmp.eq.s32.totalorder %s16, 0
      %p78 = por %p76, %p77
      %p79 = scmp.ne.s32.totalorder %s68, %s71
      %p80 = scmp.eq.s32.totalorder %s21, 1
      %p81 = por %p79, %p80
      %p82 = scmp.ne.s32.totalorder %s71, %s72
      %p83 = scmp.eq.s32.totalorder %s21, 0
      %p84 = por %p82, %p83
      %p85 = scmp.ne.s32.totalorder %s71, %s72
      %p86 = scmp.eq.s32.totalorder %s22, 1
      %p87 = por %p85, %p86
      %p89 = scmp.ne.s32.totalorder %s72, %s88
      %p90 = scmp.eq.s32.totalorder %s22, 0
      %p91 = por %p89, %p90
      %s93 = sadd.s32 %s92, 1
      %p96 = scmp.eq.s32.totalorder %s16, 1
      %p97 = scmp.ne.s32.totalorder %s92, %s94
      %p98 = scmp.eq.s32.totalorder %s16, 0
      %p99 = por %p97, %p98
      %p100 = scmp.ne.s32.totalorder %s92, %s94
      %p101 = scmp.eq.s32.totalorder %s21, 1
      %p102 = por %p100, %p101
      %p103 = scmp.ne.s32.totalorder %s94, %s95
      %p104 = scmp.eq.s32.totalorder %s21, 0
      %p105 = por %p103, %p104
      %p106 = scmp.ne.s32.totalorder %s94, %s95
      %p107 = scmp.eq.s32.totalorder %s22, 1
      %p108 = por %p106, %p107
      %p110 = scmp.ne.s32.totalorder %s95, %s109
      %p111 = scmp.eq.s32.totalorder %s22, 0
      %p112 = por %p110, %p111
      %s114 = sadd.s32 %s113, 1
      %p117 = scmp.eq.s32.totalorder %s16, 1
      %p118 = scmp.ne.s32.totalorder %s113, %s115
      %p119 = scmp.eq.s32.totalorder %s16, 0
      %p120 = por %p118, %p119
      %p121 = scmp.ne.s32.totalorder %s113, %s115
      %p122 = scmp.eq.s32.totalorder %s21, 1
      %p123 = por %p121, %p122
      %p124 = scmp.ne.s32.totalorder %s115, %s116
      %p125 = scmp.eq.s32.totalorder %s21, 0
      %p126 = por %p124, %p125
      %p127 = scmp.ne.s32.totalorder %s115, %s116
      %p128 = scmp.eq.s32.totalorder %s22, 1
      %p129 = por %p127, %p128
      %p131 = scmp.ne.s32.totalorder %s116, %s130
      %p132 = scmp.eq.s32.totalorder %s22, 0
      %p133 = por %p131, %p132
      %s135 = sadd.s32 %s134, 1
      %p138 = scmp.eq.s32.totalorder %s16, 1
      %p139 = scmp.ne.s32.totalorder %s134, %s136
      %p140 = scmp.eq.s32.totalorder %s16, 0
      %p141 = por %p139, %p140
      %p142 = scmp.ne.s32.totalorder %s134, %s136
      %p143 = scmp.eq.s32.totalorder %s21, 1
      %p144 = por %p142, %p143
      %p145 = scmp.ne.s32.totalorder %s136, %s137
      %p146 = scmp.eq.s32.totalorder %s21, 0
      %p147 = por %p145, %p146
      %p148 = scmp.ne.s32.totalorder %s136, %s137
      %p149 = scmp.eq.s32.totalorder %s22, 1
      %p150 = por %p148, %p149
      %p152 = scmp.ne.s32.totalorder %s137, %s151
      %p153 = scmp.eq.s32.totalorder %s22, 0
      %p154 = por %p152, %p153
      %s156 = sadd.s32 %s155, 1
      %p159 = scmp.eq.s32.totalorder %s16, 1
      %p160 = scmp.ne.s32.totalorder %s155, %s157
      %p161 = scmp.eq.s32.totalorder %s16, 0
      %p162 = por %p160, %p161
      %p163 = scmp.ne.s32.totalorder %s155, %s157
      %p164 = scmp.eq.s32.totalorder %s21, 1
      %p165 = por %p163, %p164
      %p166 = scmp.ne.s32.totalorder %s157, %s158
      %p167 = scmp.eq.s32.totalorder %s21, 0
      %p168 = por %p166, %p167
      %p169 = scmp.ne.s32.totalorder %s157, %s158
      %p170 = scmp.eq.s32.totalorder %s22, 1
      %p171 = por %p169, %p170
      %p173 = scmp.ne.s32.totalorder %s158, %s172
      %p174 = scmp.eq.s32.totalorder %s22, 0
      %p175 = por %p173, %p174
      %s177 = sadd.s32 %s176, 1
      %p180 = scmp.eq.s32.totalorder %s16, 1
      %p181 = scmp.ne.s32.totalorder %s176, %s178
      %p182 = scmp.eq.s32.totalorder %s16, 0
      %p183 = por %p181, %p182
      %p184 = scmp.ne.s32.totalorder %s176, %s178
      %p185 = scmp.eq.s32.totalorder %s21, 1
      %p186 = por %p184, %p185
      %p187 = scmp.ne.s32.totalorder %s178, %s179
      %p188 = scmp.eq.s32.totalorder %s21, 0
      %p189 = por %p187, %p188
      %p190 = scmp.ne.s32.totalorder %s178, %s179
      %p191 = scmp.eq.s32.totalorder %s22, 1
      %p192 = por %p190, %p191
      %p194 = scmp.ne.s32.totalorder %s179, %s193
      %p195 = scmp.eq.s32.totalorder %s22, 0
      %p196 = por %p194, %p195
      %s197 = ssub.s32 %s23, %s35
      %s198 = ssub.s32 %s24, %s31
      %s199 = sor.u32 %s197, %s198
      %p200 = scmp.eq.s32.totalorder %s199, 0
      %s202 = sadd.s32 %s201, 1
      %s203 = scalar_select %p200, %s201, %s202
      %p206 = pneg %p200
      %p207 = scmp.eq.s32.totalorder %s16, 1
      %p208 = por %p206, %p207
      %p209 = scmp.ne.s32.totalorder %s201, %s204
      %p210 = scmp.eq.s32.totalorder %s16, 0
      %p211 = por %p209, %p210
      %p212 = scmp.ne.s32.totalorder %s201, %s204
      %p213 = scmp.eq.s32.totalorder %s21, 1
      %p214 = por %p212, %p213
      %p215 = scmp.ne.s32.totalorder %s204, %s205
      %p216 = scmp.eq.s32.totalorder %s21, 0
      %p217 = por %p215, %p216
      %p218 = scmp.ne.s32.totalorder %s204, %s205
      %p219 = scmp.eq.s32.totalorder %s22, 1
      %p220 = por %p218, %p219
      %p222 = scmp.ne.s32.totalorder %s205, %s221
      %p223 = scmp.eq.s32.totalorder %s22, 0
      %p224 = por %p222, %p223
      %p225 = scmp.le.s32.totalorder 1, %s16
      %p226 = scmp.lt.s32.totalorder %s16, 3
      %p227 = pnand %p225, %p226
      %p228 = pneg %p227
      // Predicated region
      $region9: #{tpu_custom_call.1} parent=5 // pred_check
        _
      $region10: #{tpu_custom_call.1} parent=5 // pred_check_branch
        %230 = sbr.rel (%p227) target = $region12
      $region11: #{tpu_custom_call.1} parent=5 // pred_region
        %s231 = ssub.s32 %s16, 1
        // Predicated region
        $region13: #{tpu_custom_call.1} parent=11 // pred_check
          %p232 = pneg %p105
        $region14: #{tpu_custom_call.1} parent=11 // pred_check_branch
          %234 = sbr.rel (%p232) target = $region16
        $region15: #{tpu_custom_call.1} parent=11 // pred_region
          _
        $region16: #{tpu_custom_call.1} parent=11 // pred_fallthru
          _
        // Predicated region
        $region17: #{tpu_custom_call.1} parent=11 // pred_check
          %p235 = pneg %p126
        $region18: #{tpu_custom_call.1} parent=11 // pred_check_branch
          %237 = sbr.rel (%p235) target = $region20
        $region19: #{tpu_custom_call.1} parent=11 // pred_region
          _
        $region20: #{tpu_custom_call.1} parent=11 // pred_fallthru
          _
        // Predicated region
        $region21: #{tpu_custom_call.1} parent=11 // pred_check
          %p238 = pneg %p147
        $region22: #{tpu_custom_call.1} parent=11 // pred_check_branch
          %240 = sbr.rel (%p238) target = $region24
        $region23: #{tpu_custom_call.1} parent=11 // pred_region
          _
        $region24: #{tpu_custom_call.1} parent=11 // pred_fallthru
          _
        // Predicated region
        $region25: #{tpu_custom_call.1} parent=11 // pred_check
          %p241 = pneg %p168
        $region26: #{tpu_custom_call.1} parent=11 // pred_check_branch
          %243 = sbr.rel (%p241) target = $region28
        $region27: #{tpu_custom_call.1} parent=11 // pred_region
          _
        $region28: #{tpu_custom_call.1} parent=11 // pred_fallthru
          _
        // Predicated region
        $region29: #{tpu_custom_call.1} parent=11 // pred_check
          %p244 = pneg %p189
        $region30: #{tpu_custom_call.1} parent=11 // pred_check_branch
          %246 = sbr.rel (%p244) target = $region32
        $region31: #{tpu_custom_call.1} parent=11 // pred_region
          _
        $region32: #{tpu_custom_call.1} parent=11 // pred_fallthru
          _
      $region12: #{tpu_custom_call.1} parent=5 // pred_fallthru
        _
      %p247 = scmp.lt.s32.totalorder %s16, 2
      // Predicated region
      $region33: #{tpu_custom_call.1} parent=5 // pred_check
        %p248 = pneg %p247
      $region34: #{tpu_custom_call.1} parent=5 // pred_check_branch
        %250 = sbr.rel (%p248) target = $region36
      $region35: #{tpu_custom_call.1} parent=5 // pred_region
        // Predicated region
        $region37: #{tpu_custom_call.1} parent=35 // pred_check
          %p251 = pneg %p50
        $region38: #{tpu_custom_call.1} parent=35 // pred_check_branch
          %253 = sbr.rel (%p251) target = $region40
        $region39: #{tpu_custom_call.1} parent=35 // pred_region
          %s254 = sand.u32 %s40, 1
          %s255 = sand.u32 %s40, 1
          %s256 = smul.addr %s255, 16
          %s257 = scalar_lea.vmem [#allocation2], %s256
          %s258 = smul.u32 2, %s23
          %s259 = smul.addr %s258, 2
          %s260 = sadd.s32 %s24, %s259
          %s261 = smul.addr %s260, 8
          %s262 = scalar_lea.vmem %s0, %s261
          // Predicated region
          $region41: #{tpu_custom_call.1} parent=39 // pred_check
            _
          $region42: #{tpu_custom_call.1} parent=39 // pred_check_branch
            %264 = sbr.rel (0) target = $region44
          $region43: #{tpu_custom_call.1} parent=39 // pred_region
            // Predicated region
            $region45: #{tpu_custom_call.1} parent=43 // pred_check
              _
            $region46: #{tpu_custom_call.1} parent=43 // pred_check_branch
              %266 = sbr.rel (0) target = $region48
            $region47: #{tpu_custom_call.1} parent=43 // pred_region
              // Predicated region
              $region60: #{tpu_custom_call.1} parent=47 // pred_check
                _
              $region61: #{tpu_custom_call.1} parent=47 // pred_check_branch
                %283 = sbr.rel (0) target = $region63
              $region62: #{tpu_custom_call.1} parent=47 // pred_region
                loop: start=0, step=1, limit=1
                $region64: #{tpu_custom_call.1} parent=62 // loop_pre_header
                  _
                $region65: #{tpu_custom_call.1} parent=62 // loop_header
                  %s285 = sphi 0, %s289
                  %p286 = scmp.ge.s32.totalorder %s285, 1
                  %s290 = sphi %s262, %s262
                  %s291 = sphi %s257, %s257
                $region66: #{tpu_custom_call.1} parent=62 // loop_header_branch
                  %288 = sbr.rel (%p286) target = $region70
                $region67: #{tpu_custom_call.1} parent=62 // loop_body
                  %v292 = vld [vmem:[%s290] sm:$0xff]
                  %293 = vst [vmem:[%s291] sm:$0xff] %v292
                  %v294 = vld [vmem:[%s290 + $0x10] sm:$0xff]
                  %295 = vst [vmem:[%s291 + $0x8] sm:$0xff] %v294
                $region68: #{tpu_custom_call.1} parent=62 // loop_footer
                  %s289 = sadd.s32 1, %s285
                $region69: #{tpu_custom_call.1} parent=62 // loop_footer_branch
                  %284 = sbr.rel target = $region65
                $region70: #{tpu_custom_call.1} parent=62 // loop_exit
                  _
              $region63: #{tpu_custom_call.1} parent=47 // pred_fallthru
                _
              // Predicated region
              $region71: #{tpu_custom_call.1} parent=47 // pred_check
                _
              $region72: #{tpu_custom_call.1} parent=47 // pred_check_branch
                %297 = sbr.rel target = $region74
              $region73: #{tpu_custom_call.1} parent=47 // pred_region
                _
              $region74: #{tpu_custom_call.1} parent=47 // pred_fallthru
                _
            $region48: #{tpu_custom_call.1} parent=43 // pred_fallthru
              _
            // Predicated region
            $region49: #{tpu_custom_call.1} parent=43 // pred_check
              _
            $region50: #{tpu_custom_call.1} parent=43 // pred_check_branch
              %268 = sbr.rel target = $region52
            $region51: #{tpu_custom_call.1} parent=43 // pred_region
              loop: start=0, step=1, limit=1
              $region53: #{tpu_custom_call.1} parent=51 // loop_pre_header
                _
              $region54: #{tpu_custom_call.1} parent=51 // loop_header
                %s271 = sphi 0, %s275
                %p272 = scmp.ge.s32.totalorder %s271, 1
                %s276 = sphi %s262, %s262
                %s277 = sphi %s257, %s257
              $region55: #{tpu_custom_call.1} parent=51 // loop_header_branch
                %274 = sbr.rel (%p272) target = $region59
              $region56: #{tpu_custom_call.1} parent=51 // loop_body
                %v278 = vld [vmem:[%s276] sm:$0xff]
                %279 = vst [vmem:[%s277] sm:$0xff] %v278
                %v280 = vld [vmem:[%s276 + $0x10] sm:$0xff]
                %281 = vst [vmem:[%s277 + $0x8] sm:$0xff] %v280
              $region57: #{tpu_custom_call.1} parent=51 // loop_footer
                %s275 = sadd.s32 1, %s271
              $region58: #{tpu_custom_call.1} parent=51 // loop_footer_branch
                %270 = sbr.rel target = $region54
              $region59: #{tpu_custom_call.1} parent=51 // loop_exit
                _
            $region52: #{tpu_custom_call.1} parent=43 // pred_fallthru
              _
          $region44: #{tpu_custom_call.1} parent=39 // pred_fallthru
            _
          %298 = vnop
        $region40: #{tpu_custom_call.1} parent=35 // pred_fallthru
          _
        // Predicated region
        $region75: #{tpu_custom_call.1} parent=35 // pred_check
          %p299 = pneg %p78
        $region76: #{tpu_custom_call.1} parent=35 // pred_check_branch
          %301 = sbr.rel (%p299) target = $region78
        $region77: #{tpu_custom_call.1} parent=35 // pred_region
          %s302 = sand.u32 %s68, 1
          %s303 = sand.u32 %s68, 1
          %s304 = smul.addr %s303, 8
          %s305 = scalar_lea.vmem [#allocation3], %s304
          %s306 = smul.u32 2, %s23
          %s307 = smul.addr %s306, 2
          %s308 = sadd.s32 %s24, %s307
          %s309 = smul.addr %s308, 4
          %s310 = scalar_lea.vmem %s1, %s309
          // Predicated region
          $region79: #{tpu_custom_call.1} parent=77 // pred_check
            _
          $region80: #{tpu_custom_call.1} parent=77 // pred_check_branch
            %312 = sbr.rel (0) target = $region82
          $region81: #{tpu_custom_call.1} parent=77 // pred_region
            // Predicated region
            $region83: #{tpu_custom_call.1} parent=81 // pred_check
              _
            $region84: #{tpu_custom_call.1} parent=81 // pred_check_branch
              %314 = sbr.rel target = $region86
            $region85: #{tpu_custom_call.1} parent=81 // pred_region
              // Predicated region
              $region98: #{tpu_custom_call.1} parent=85 // pred_check
                _
              $region99: #{tpu_custom_call.1} parent=85 // pred_check_branch
                %331 = sbr.rel (0) target = $region101
              $region100: #{tpu_custom_call.1} parent=85 // pred_region
                loop: start=0, step=1, limit=1
                $region102: #{tpu_custom_call.1} parent=100 // loop_pre_header
                  _
                $region103: #{tpu_custom_call.1} parent=100 // loop_header
                  %s333 = sphi 0, %s337
                  %p334 = scmp.ge.s32.totalorder %s333, 1
                  %s338 = sphi %s310, %s310
                  %s339 = sphi %s305, %s305
                $region104: #{tpu_custom_call.1} parent=100 // loop_header_branch
                  %336 = sbr.rel (%p334) target = $region108
                $region105: #{tpu_custom_call.1} parent=100 // loop_body
                  _
                $region106: #{tpu_custom_call.1} parent=100 // loop_footer
                  %s337 = sadd.s32 1, %s333
                $region107: #{tpu_custom_call.1} parent=100 // loop_footer_branch
                  %332 = sbr.rel target = $region103
                $region108: #{tpu_custom_call.1} parent=100 // loop_exit
                  _
                loop: start=0, step=1, limit=1
                $region109: #{tpu_custom_call.1} parent=100 // loop_pre_header
                  _
                $region110: #{tpu_custom_call.1} parent=100 // loop_header
                  %s342 = sphi 0, %s346
                  %p343 = scmp.ge.s32.totalorder %s342, 1
                  %s347 = sphi %s310, %s310
                  %s348 = sphi %s305, %s305
                $region111: #{tpu_custom_call.1} parent=100 // loop_header_branch
                  %345 = sbr.rel (%p343) target = $region115
                $region112: #{tpu_custom_call.1} parent=100 // loop_body
                  %v349 = vld [vmem:[%s347] sm:$0xf]
                  %350 = vst [vmem:[%s348] sm:$0xf] %v349
                  %v351 = vld [vmem:[%s347 + $0x8] sm:$0xf]
                  %352 = vst [vmem:[%s348 + $0x4] sm:$0xf] %v351
                $region113: #{tpu_custom_call.1} parent=100 // loop_footer
                  %s346 = sadd.s32 1, %s342
                $region114: #{tpu_custom_call.1} parent=100 // loop_footer_branch
                  %341 = sbr.rel target = $region110
                $region115: #{tpu_custom_call.1} parent=100 // loop_exit
                  _
              $region101: #{tpu_custom_call.1} parent=85 // pred_fallthru
                _
            $region86: #{tpu_custom_call.1} parent=81 // pred_fallthru
              _
            // Predicated region
            $region87: #{tpu_custom_call.1} parent=81 // pred_check
              _
            $region88: #{tpu_custom_call.1} parent=81 // pred_check_branch
              %316 = sbr.rel (0) target = $region90
            $region89: #{tpu_custom_call.1} parent=81 // pred_region
              loop: start=0, step=1, limit=1
              $region91: #{tpu_custom_call.1} parent=89 // loop_pre_header
                _
              $region92: #{tpu_custom_call.1} parent=89 // loop_header
                %s319 = sphi 0, %s323
                %p320 = scmp.ge.s32.totalorder %s319, 1
                %s324 = sphi %s310, %s310
                %s325 = sphi %s305, %s305
              $region93: #{tpu_custom_call.1} parent=89 // loop_header_branch
                %322 = sbr.rel (%p320) target = $region97
              $region94: #{tpu_custom_call.1} parent=89 // loop_body
                %v326 = vld [vmem:[%s324] sm:$0xf]
                %327 = vst [vmem:[%s325] sm:$0xf] %v326
                %v328 = vld [vmem:[%s324 + $0x8] sm:$0xf]
                %329 = vst [vmem:[%s325 + $0x4] sm:$0xf] %v328
              $region95: #{tpu_custom_call.1} parent=89 // loop_footer
                %s323 = sadd.s32 1, %s319
              $region96: #{tpu_custom_call.1} parent=89 // loop_footer_branch
                %318 = sbr.rel target = $region92
              $region97: #{tpu_custom_call.1} parent=89 // loop_exit
                _
            $region90: #{tpu_custom_call.1} parent=81 // pred_fallthru
              _
          $region82: #{tpu_custom_call.1} parent=77 // pred_fallthru
            _
          %353 = vnop
        $region78: #{tpu_custom_call.1} parent=35 // pred_fallthru
          _
      $region36: #{tpu_custom_call.1} parent=5 // pred_fallthru
        _
      %p354 = scmp.le.s32.totalorder 1, %s16
      %p355 = scmp.lt.s32.totalorder %s16, 3
      %p356 = pnand %p354, %p355
      %p357 = pneg %p356
      // Predicated region
      $region116: #{tpu_custom_call.1} parent=5 // pred_check
        _
      $region117: #{tpu_custom_call.1} parent=5 // pred_check_branch
        %359 = sbr.rel (%p356) target = $region119
      $region118: #{tpu_custom_call.1} parent=5 // pred_region
        %s360 = ssub.s32 %s16, 1
        %s361 = sand.u32 %s43, 1
        %s362 = sand.u32 %s43, 1
        %s363 = smul.addr %s362, 16
        %s364 = scalar_lea.vmem [#allocation2], %s363
        // Predicated region
        $region120: #{tpu_custom_call.1} parent=118 // pred_check
          %p365 = pneg %p56
        $region121: #{tpu_custom_call.1} parent=118 // pred_check_branch
          %367 = sbr.rel (%p365) target = $region123
        $region122: #{tpu_custom_call.1} parent=118 // pred_region
          _
        $region123: #{tpu_custom_call.1} parent=118 // pred_fallthru
          _
        %s368 = sand.u32 %s71, 1
        %s369 = sand.u32 %s71, 1
        %s370 = smul.addr %s369, 8
        %s371 = scalar_lea.vmem [#allocation3], %s370
        // Predicated region
        $region124: #{tpu_custom_call.1} parent=118 // pred_check
          %p372 = pneg %p84
        $region125: #{tpu_custom_call.1} parent=118 // pred_check_branch
          %374 = sbr.rel (%p372) target = $region127
        $region126: #{tpu_custom_call.1} parent=118 // pred_region
          _
        $region127: #{tpu_custom_call.1} parent=118 // pred_fallthru
          _
        %s375 = sand.u32 %s43, 1
        %s376 = sand.u32 %s43, 1
        %s377 = smul.addr %s376, 16
        %s378 = scalar_lea.vmem [#allocation2], %s377
        %p379 = pneg %p56
        %p380 = pneg %p53
        %s381 = sand.u32 %s71, 1
        %s382 = sand.u32 %s71, 1
        %s383 = smul.addr %s382, 8
        %s384 = scalar_lea.vmem [#allocation3], %s383
        %p385 = pneg %p84
        %p386 = pneg %p81
        %p387 = pneg %p105
        %p388 = pneg %p102
        %p389 = pneg %p126
        %p390 = pneg %p123
        %p391 = pneg %p147
        %p392 = pneg %p144
        %p393 = pneg %p168
        %p394 = pneg %p165
        %p395 = pneg %p189
        %p396 = pneg %p186
        %p397 = pneg %p217
        %p398 = pneg %p214
        %s399 = sand.u32 %s204, 1
        %s400 = scalar_lea.sflag [#allocation5], %s399
        %s401 = sand.u32 %s204, 1
        %s402 = smul.addr %s401, 64
        %s403 = scalar_lea.vmem [#allocation4], %s402
        %s404 = smul.u32 2, %s25
        %s405 = smul.u32 2, %s25
        %s406 = smul.u32 2, %s25
        %v407 = vld [vmem:[%s2] sm:$0xff]
        %v408 = vld [vmem:[%s2 + $0x8] sm:$0xff]
        %v409 = vld [vmem:[%s2 + $0x10] sm:$0xff]
        %v410 = vld [vmem:[%s2 + $0x18] sm:$0xff]
        %v411 = vld [vmem:[%s2 + $0x20] sm:$0xff]
        %v412 = vld [vmem:[%s2 + $0x28] sm:$0xff]
        %v413 = vld [vmem:[%s2 + $0x30] sm:$0xff]
        %v414 = vld [vmem:[%s2 + $0x38] sm:$0xff]
        %v415 = vld [vmem:[%s364] sm:$0x3f]
        %v416 = vld [vmem:[%s3] sm:$0xff]
        %v417 = vld [vmem:[%s3 + $0x8] sm:$0xff]
        %v418 = vld [vmem:[%s3 + $0x10] sm:$0xff]
        %v419 = vld [vmem:[%s3 + $0x18] sm:$0xff]
        %v420 = vld [vmem:[%s3 + $0x20] sm:$0xff]
        %v421 = vld [vmem:[%s3 + $0x28] sm:$0xff]
        %v422 = vld [vmem:[%s3 + $0x30] sm:$0xff]
        %v423 = vld [vmem:[%s3 + $0x38] sm:$0xff]
        %v424 = vld [vmem:[%s371] sm:$0xf]
        %vm425 = vcmask 31744
        %v427 = vsel %vm425, %v416, 0
        %v430 = vsel %vm425, %v417, 0
        %v433 = vsel %vm425, %v418, 0
        %v436 = vsel %vm425, %v419, 0
        %v439 = vsel %vm425, %v420, 0
        %v442 = vsel %vm425, %v421, 0
        %v445 = vsel %vm425, %v422, 0
        %v448 = vsel %vm425, %v423, 0
        %vm450 = vcmask 1043456
        %v452 = vsel %vm450, %v424, 0
        %454 = vmatprep.subr.mxu0 0.0
        %455 = vmatpush1.msra.mxu0 %v452
        %456 = vmatprep.subr.mxu0 0.0
        %457 = vmatpush1.msra.mxu0 0.0
        %458 = vmatprep.subr.mxu0 0.0
        %459 = vmatpush1.msra.mxu0 0.0
        %460 = vmatprep.subr.mxu0 0.0
        %461 = vmatpush1.msra.mxu0 0.0
        %462 = vmatprep.subr.mxu0 0.0
        %463 = vmatpush1.msra.mxu0 0.0
        %464 = vmatprep.subr.mxu0 0.0
        %465 = vmatpush1.msra.mxu0 0.0
        %466 = vmatprep.subr.mxu0 0.0
        %467 = vmatpush1.msra.mxu0 0.0
        %468 = vmatprep.subr.mxu0 0.0
        %469 = vmatpush1.msra.mxu0 0.0
        %470 = vmatprep.subr.mxu0 0.0
        %471 = vmatpush1.msra.mxu0 0.0
        %472 = vmatprep.subr.mxu0 0.0
        %473 = vmatpush1.msra.mxu0 0.0
        %474 = vmatprep.subr.mxu0 0.0
        %475 = vmatpush1.msra.mxu0 0.0
        %476 = vmatprep.subr.mxu0 0.0
        %477 = vmatpush1.msra.mxu0 0.0
        %478 = vmatprep.subr.mxu0 0.0
        %479 = vmatpush1.msra.mxu0 0.0
        %480 = vmatprep.subr.mxu0 0.0
        %481 = vmatpush1.msra.mxu0 0.0
        %482 = vmatprep.subr.mxu0 0.0
        %483 = vmatpush1.msra.mxu0 0.0
        %484 = vmatprep.subr.mxu0 0.0
        %485 = vmatpush1.msra.mxu0 0.0
        %486 = vmatprep.subr.mxu0 0.0
        %487 = vmatpush1.msra.mxu0 0.0
        %488 = vmatprep.subr.mxu0 0.0
        %489 = vmatpush1.msra.mxu0 0.0
        %490 = vmatprep.subr.mxu0 0.0
        %491 = vmatpush1.msra.mxu0 0.0
        %492 = vmatprep.subr.mxu0 0.0
        %493 = vmatpush1.msra.mxu0 0.0
        %494 = vmatprep.subr.mxu0 0.0
        %495 = vmatpush1.msra.mxu0 0.0
        %496 = vmatprep.subr.mxu0 0.0
        %497 = vmatpush1.msra.mxu0 0.0
        %498 = vmatprep.subr.mxu0 0.0
        %499 = vmatpush1.msra.mxu0 0.0
        %500 = vmatprep.subr.mxu0 0.0
        %501 = vmatpush1.msra.mxu0 0.0
        %502 = vmatprep.subr.mxu0 0.0
        %503 = vmatpush1.msra.mxu0 0.0
        %504 = vmatprep.subr.mxu0 0.0
        %505 = vmatpush1.msra.mxu0 0.0
        %506 = vmatprep.subr.mxu0 0.0
        %507 = vmatpush1.msra.mxu0 0.0
        %508 = vmatprep.subr.mxu0 0.0
        %509 = vmatpush1.msra.mxu0 0.0
        %510 = vmatprep.subr.mxu0 0.0
        %511 = vmatpush1.msra.mxu0 0.0
        %512 = vmatprep.subr.mxu0 0.0
        %513 = vmatpush1.msra.mxu0 0.0
        %514 = vmatprep.subr.mxu0 0.0
        %515 = vmatpush1.msra.mxu0 0.0
        %516 = vmatprep.subr.mxu0 0.0
        %517 = vmatpush1.msra.mxu0 0.0
        %518 = vmatprep.mubr.f32.mxu0 0.0
        %519 = vmatmul.mubr.f32.gmra.mrb[0].mxu0 %v427
        %v520 = vpop.f32.mrb[0].mxu0
        %v521 = vadd.f32 0.0, %v520
        %v522 = vpop.f32.mrb[0].mxu0
        %523 = vmatprep.mubr.f32.mxu0 0.0
        %524 = vmatmul.mubr.f32.gmra.mrb[0].mxu0 %v430
        %v525 = vpop.f32.mrb[0].mxu0
        %v526 = vadd.f32 0.0, %v525
        %v527 = vpop.f32.mrb[0].mxu0
        %528 = vmatprep.mubr.f32.mxu0 0.0
        %529 = vmatmul.mubr.f32.gmra.mrb[0].mxu0 %v433
        %v530 = vpop.f32.mrb[0].mxu0
        %v531 = vadd.f32 0.0, %v530
        %v532 = vpop.f32.mrb[0].mxu0
        %533 = vmatprep.mubr.f32.mxu0 0.0
        %534 = vmatmul.mubr.f32.gmra.mrb[0].mxu0 %v436
        %v535 = vpop.f32.mrb[0].mxu0
        %v536 = vadd.f32 0.0, %v535
        %v537 = vpop.f32.mrb[0].mxu0
        %538 = vmatprep.mubr.f32.mxu0 0.0
        %539 = vmatmul.mubr.f32.gmra.mrb[0].mxu0 %v439
        %v540 = vpop.f32.mrb[0].mxu0
        %v541 = vadd.f32 0.0, %v540
        %v542 = vpop.f32.mrb[0].mxu0
        %543 = vmatprep.mubr.f32.mxu0 0.0
        %544 = vmatmul.mubr.f32.gmra.mrb[0].mxu0 %v442
        %v545 = vpop.f32.mrb[0].mxu0
        %v546 = vadd.f32 0.0, %v545
        %v547 = vpop.f32.mrb[0].mxu0
        %548 = vmatprep.mubr.f32.mxu0 0.0
        %549 = vmatmul.mubr.f32.gmra.mrb[0].mxu0 %v445
        %v550 = vpop.f32.mrb[0].mxu0
        %v551 = vadd.f32 0.0, %v550
        %v552 = vpop.f32.mrb[0].mxu0
        %553 = vmatprep.mubr.f32.mxu0 0.0
        %554 = vmatmul.mubr.f32.gmra.mrb[0].mxu0 %v448
        %v555 = vpop.f32.mrb[0].mxu0
        %v556 = vadd.f32 0.0, %v555
        %v557 = vpop.f32.mrb[0].mxu0
        %558 = vdwg.mxu0
        %vm559 = vcmask 48128
        %v561 = vsel %vm559, %v407, 0
        %v564 = vsel %vm559, %v408, 0
        %v567 = vsel %vm559, %v409, 0
        %v570 = vsel %vm559, %v410, 0
        %v573 = vsel %vm559, %v411, 0
        %v576 = vsel %vm559, %v412, 0
        %v579 = vsel %vm559, %v413, 0
        %v582 = vsel %vm559, %v414, 0
        %vm584 = vcmask 1045504
        %v586 = vsel %vm584, %v415, 0
        %588 = vmatprep.subr.mxu0 0.0
        %589 = vmatpush1.msra.mxu0 %v586
        %590 = vmatprep.subr.mxu0 0.0
        %591 = vmatpush1.msra.mxu0 0.0
        %592 = vmatprep.subr.mxu0 0.0
        %593 = vmatpush1.msra.mxu0 0.0
        %594 = vmatprep.subr.mxu0 0.0
        %595 = vmatpush1.msra.mxu0 0.0
        %596 = vmatprep.subr.mxu0 0.0
        %597 = vmatpush1.msra.mxu0 0.0
        %598 = vmatprep.subr.mxu0 0.0
        %599 = vmatpush1.msra.mxu0 0.0
        %600 = vmatprep.subr.mxu0 0.0
        %601 = vmatpush1.msra.mxu0 0.0
        %602 = vmatprep.subr.mxu0 0.0
        %603 = vmatpush1.msra.mxu0 0.0
        %604 = vmatprep.subr.mxu0 0.0
        %605 = vmatpush1.msra.mxu0 0.0
        %606 = vmatprep.subr.mxu0 0.0
        %607 = vmatpush1.msra.mxu0 0.0
        %608 = vmatprep.subr.mxu0 0.0
        %609 = vmatpush1.msra.mxu0 0.0
        %610 = vmatprep.subr.mxu0 0.0
        %611 = vmatpush1.msra.mxu0 0.0
        %612 = vmatprep.subr.mxu0 0.0
        %613 = vmatpush1.msra.mxu0 0.0
        %614 = vmatprep.subr.mxu0 0.0
        %615 = vmatpush1.msra.mxu0 0.0
        %616 = vmatprep.subr.mxu0 0.0
        %617 = vmatpush1.msra.mxu0 0.0
        %618 = vmatprep.subr.mxu0 0.0
        %619 = vmatpush1.msra.mxu0 0.0
        %620 = vmatprep.subr.mxu0 0.0
        %621 = vmatpush1.msra.mxu0 0.0
        %622 = vmatprep.subr.mxu0 0.0
        %623 = vmatpush1.msra.mxu0 0.0
        %624 = vmatprep.subr.mxu0 0.0
        %625 = vmatpush1.msra.mxu0 0.0
        %626 = vmatprep.subr.mxu0 0.0
        %627 = vmatpush1.msra.mxu0 0.0
        %628 = vmatprep.subr.mxu0 0.0
        %629 = vmatpush1.msra.mxu0 0.0
        %630 = vmatprep.subr.mxu0 0.0
        %631 = vmatpush1.msra.mxu0 0.0
        %632 = vmatprep.subr.mxu0 0.0
        %633 = vmatpush1.msra.mxu0 0.0
        %634 = vmatprep.subr.mxu0 0.0
        %635 = vmatpush1.msra.mxu0 0.0
        %636 = vmatprep.subr.mxu0 0.0
        %637 = vmatpush1.msra.mxu0 0.0
        %638 = vmatprep.subr.mxu0 0.0
        %639 = vmatpush1.msra.mxu0 0.0
        %640 = vmatprep.subr.mxu0 0.0
        %641 = vmatpush1.msra.mxu0 0.0
        %642 = vmatprep.subr.mxu0 0.0
        %643 = vmatpush1.msra.mxu0 0.0
        %644 = vmatprep.subr.mxu0 0.0
        %645 = vmatpush1.msra.mxu0 0.0
        %646 = vmatprep.subr.mxu0 0.0
        %647 = vmatpush1.msra.mxu0 0.0
        %648 = vmatprep.subr.mxu0 0.0
        %649 = vmatpush1.msra.mxu0 0.0
        %650 = vmatprep.subr.mxu0 0.0
        %651 = vmatpush1.msra.mxu0 0.0
        %652 = vmatprep.mubr.f32.mxu0 0.0
        %653 = vmatmul.mubr.f32.gmra.mrb[0].mxu0 %v561
        %v654 = vpop.f32.mrb[0].mxu0
        %v655 = vadd.f32 %v521, %v654
        %v656 = vpop.f32.mrb[0].mxu0
        %657 = vmatprep.mubr.f32.mxu0 0.0
        %658 = vmatmul.mubr.f32.gmra.mrb[0].mxu0 %v564
        %v659 = vpop.f32.mrb[0].mxu0
        %v660 = vadd.f32 %v526, %v659
        %v661 = vpop.f32.mrb[0].mxu0
        %662 = vmatprep.mubr.f32.mxu0 0.0
        %663 = vmatmul.mubr.f32.gmra.mrb[0].mxu0 %v567
        %v664 = vpop.f32.mrb[0].mxu0
        %v665 = vadd.f32 %v531, %v664
        %v666 = vpop.f32.mrb[0].mxu0
        %667 = vmatprep.mubr.f32.mxu0 0.0
        %668 = vmatmul.mubr.f32.gmra.mrb[0].mxu0 %v570
        %v669 = vpop.f32.mrb[0].mxu0
        %v670 = vadd.f32 %v536, %v669
        %v671 = vpop.f32.mrb[0].mxu0
        %672 = vmatprep.mubr.f32.mxu0 0.0
        %673 = vmatmul.mubr.f32.gmra.mrb[0].mxu0 %v573
        %v674 = vpop.f32.mrb[0].mxu0
        %v675 = vadd.f32 %v541, %v674
        %v676 = vpop.f32.mrb[0].mxu0
        %677 = vmatprep.mubr.f32.mxu0 0.0
        %678 = vmatmul.mubr.f32.gmra.mrb[0].mxu0 %v576
        %v679 = vpop.f32.mrb[0].mxu0
        %v680 = vadd.f32 %v546, %v679
        %v681 = vpop.f32.mrb[0].mxu0
        %682 = vmatprep.mubr.f32.mxu0 0.0
        %683 = vmatmul.mubr.f32.gmra.mrb[0].mxu0 %v579
        %v684 = vpop.f32.mrb[0].mxu0
        %v685 = vadd.f32 %v551, %v684
        %v686 = vpop.f32.mrb[0].mxu0
        %687 = vmatprep.mubr.f32.mxu0 0.0
        %688 = vmatmul.mubr.f32.gmra.mrb[0].mxu0 %v582
        %v689 = vpop.f32.mrb[0].mxu0
        %v690 = vadd.f32 %v556, %v689
        %v691 = vpop.f32.mrb[0].mxu0
        %692 = vdwg.mxu0
        %v693 = vld [vmem:[%s4] sm:$0xff]
        %v694 = vld [vmem:[%s4 + $0x8] sm:$0xff]
        %v695 = vld [vmem:[%s4 + $0x10] sm:$0xff]
        %v696 = vld [vmem:[%s4 + $0x18] sm:$0xff]
        %v697 = vld [vmem:[%s4 + $0x20] sm:$0xff]
        %v698 = vld [vmem:[%s4 + $0x28] sm:$0xff]
        %v699 = vld [vmem:[%s4 + $0x30] sm:$0xff]
        %v700 = vld [vmem:[%s4 + $0x38] sm:$0xff]
        %702 = vset.pattern.permute.xlu0 0
        %703 = vperm.xlu0 %702, %v693
        %v704 = vpop.permute.xlu0 %703
        %707 = vset.pattern.permute.xlu0 0
        %708 = vperm.xlu0 %707, %v694
        %v709 = vpop.permute.xlu0 %708
        %712 = vset.pattern.permute.xlu0 0
        %713 = vperm.xlu0 %712, %v695
        %v714 = vpop.permute.xlu0 %713
        %717 = vset.pattern.permute.xlu0 0
        %718 = vperm.xlu0 %717, %v696
        %v719 = vpop.permute.xlu0 %718
        %722 = vset.pattern.permute.xlu0 0
        %723 = vperm.xlu0 %722, %v697
        %v724 = vpop.permute.xlu0 %723
        %727 = vset.pattern.permute.xlu0 0
        %728 = vperm.xlu0 %727, %v698
        %v729 = vpop.permute.xlu0 %728
        %732 = vset.pattern.permute.xlu0 0
        %733 = vperm.xlu0 %732, %v699
        %v734 = vpop.permute.xlu0 %733
        %737 = vset.pattern.permute.xlu0 0
        %738 = vperm.xlu0 %737, %v700
        %v739 = vpop.permute.xlu0 %738
        %v741 = vadd.f32 %v655, %v704
        %v742 = vadd.f32 %v660, %v709
        %v743 = vadd.f32 %v665, %v714
        %v744 = vadd.f32 %v670, %v719
        %v745 = vadd.f32 %v675, %v724
        %v746 = vadd.f32 %v680, %v729
        %v747 = vadd.f32 %v685, %v734
        %v748 = vadd.f32 %v690, %v739
        %v749 = vmax.f32 %v741, 0.0
        %v750 = vmax.f32 %v742, 0.0
        %v751 = vmax.f32 %v743, 0.0
        %v752 = vmax.f32 %v744, 0.0
        %v753 = vmax.f32 %v745, 0.0
        %v754 = vmax.f32 %v746, 0.0
        %v755 = vmax.f32 %v747, 0.0
        %v756 = vmax.f32 %v748, 0.0
        %v757 = vld [vmem:[%s5] sm:$0xff]
        %v758 = vld [vmem:[%s5 + $0x8] sm:$0xff]
        %v759 = vld [vmem:[%s5 + $0x10] sm:$0xff]
        %v760 = vld [vmem:[%s5 + $0x18] sm:$0xff]
        %v761 = vld [vmem:[%s6] sm:$0xff]
        %v762 = vld [vmem:[%s6 + $0x8] sm:$0xff]
        %v763 = vld [vmem:[%s6 + $0x10] sm:$0xff]
        %v764 = vld [vmem:[%s6 + $0x18] sm:$0xff]
        %766 = vset.pattern.permute.xlu0 0
        %767 = vperm.xlu0 %766, %v761
        %v768 = vpop.permute.xlu0 %767
        %771 = vset.pattern.permute.xlu0 0
        %772 = vperm.xlu0 %771, %v762
        %v773 = vpop.permute.xlu0 %772
        %776 = vset.pattern.permute.xlu0 0
        %777 = vperm.xlu0 %776, %v763
        %v778 = vpop.permute.xlu0 %777
        %781 = vset.pattern.permute.xlu0 0
        %782 = vperm.xlu0 %781, %v764
        %v783 = vpop.permute.xlu0 %782
        %vm785 = vcmask 523264
        %v787 = vsel %vm785, %v757, 0
        %v790 = vsel %vm785, %v758, 0
        %v793 = vsel %vm785, %v759, 0
        %v796 = vsel %vm785, %v760, 0
        %798 = vmatprep.subr.mxu0 0.0
        %799 = vmatpush1.msra.mxu0 %v749
        %800 = vmatprep.subr.mxu0 0.0
        %801 = vmatpush1.msra.mxu0 %v750
        %802 = vmatprep.subr.mxu0 0.0
        %803 = vmatpush1.msra.mxu0 %v751
        %804 = vmatprep.subr.mxu0 0.0
        %805 = vmatpush1.msra.mxu0 %v752
        %806 = vmatprep.subr.mxu0 0.0
        %807 = vmatpush1.msra.mxu0 %v753
        %808 = vmatprep.subr.mxu0 0.0
        %809 = vmatpush1.msra.mxu0 %v754
        %810 = vmatprep.subr.mxu0 0.0
        %811 = vmatpush1.msra.mxu0 %v755
        %812 = vmatprep.subr.mxu0 0.0
        %813 = vmatpush1.msra.mxu0 %v756
        %814 = vmatprep.subr.mxu0 0.0
        %815 = vmatpush1.msra.mxu0 0.0
        %816 = vmatprep.subr.mxu0 0.0
        %817 = vmatpush1.msra.mxu0 0.0
        %818 = vmatprep.subr.mxu0 0.0
        %819 = vmatpush1.msra.mxu0 0.0
        %820 = vmatprep.subr.mxu0 0.0
        %821 = vmatpush1.msra.mxu0 0.0
        %822 = vmatprep.subr.mxu0 0.0
        %823 = vmatpush1.msra.mxu0 0.0
        %824 = vmatprep.subr.mxu0 0.0
        %825 = vmatpush1.msra.mxu0 0.0
        %826 = vmatprep.subr.mxu0 0.0
        %827 = vmatpush1.msra.mxu0 0.0
        %828 = vmatprep.subr.mxu0 0.0
        %829 = vmatpush1.msra.mxu0 0.0
        %830 = vmatprep.subr.mxu0 0.0
        %831 = vmatpush1.msra.mxu0 0.0
        %832 = vmatprep.subr.mxu0 0.0
        %833 = vmatpush1.msra.mxu0 0.0
        %834 = vmatprep.subr.mxu0 0.0
        %835 = vmatpush1.msra.mxu0 0.0
        %836 = vmatprep.subr.mxu0 0.0
        %837 = vmatpush1.msra.mxu0 0.0
        %838 = vmatprep.subr.mxu0 0.0
        %839 = vmatpush1.msra.mxu0 0.0
        %840 = vmatprep.subr.mxu0 0.0
        %841 = vmatpush1.msra.mxu0 0.0
        %842 = vmatprep.subr.mxu0 0.0
        %843 = vmatpush1.msra.mxu0 0.0
        %844 = vmatprep.subr.mxu0 0.0
        %845 = vmatpush1.msra.mxu0 0.0
        %846 = vmatprep.subr.mxu0 0.0
        %847 = vmatpush1.msra.mxu0 0.0
        %848 = vmatprep.subr.mxu0 0.0
        %849 = vmatpush1.msra.mxu0 0.0
        %850 = vmatprep.subr.mxu0 0.0
        %851 = vmatpush1.msra.mxu0 0.0
        %852 = vmatprep.subr.mxu0 0.0
        %853 = vmatpush1.msra.mxu0 0.0
        %854 = vmatprep.subr.mxu0 0.0
        %855 = vmatpush1.msra.mxu0 0.0
        %856 = vmatprep.subr.mxu0 0.0
        %857 = vmatpush1.msra.mxu0 0.0
        %858 = vmatprep.subr.mxu0 0.0
        %859 = vmatpush1.msra.mxu0 0.0
        %860 = vmatprep.subr.mxu0 0.0
        %861 = vmatpush1.msra.mxu0 0.0
        %862 = vmatprep.mubr.f32.mxu0 0.0
        %863 = vmatmul.mubr.f32.gmra.mrb[0].mxu0 %v787
        %v864 = vpop.f32.mrb[0].mxu0
        %v865 = vadd.f32 %v768, %v864
        %v866 = vpop.f32.mrb[0].mxu0
        %867 = vmatprep.mubr.f32.mxu0 0.0
        %868 = vmatmul.mubr.f32.gmra.mrb[0].mxu0 %v790
        %v869 = vpop.f32.mrb[0].mxu0
        %v870 = vadd.f32 %v773, %v869
        %v871 = vpop.f32.mrb[0].mxu0
        %872 = vmatprep.mubr.f32.mxu0 0.0
        %873 = vmatmul.mubr.f32.gmra.mrb[0].mxu0 %v793
        %v874 = vpop.f32.mrb[0].mxu0
        %v875 = vadd.f32 %v778, %v874
        %v876 = vpop.f32.mrb[0].mxu0
        %877 = vmatprep.mubr.f32.mxu0 0.0
        %878 = vmatmul.mubr.f32.gmra.mrb[0].mxu0 %v796
        %v879 = vpop.f32.mrb[0].mxu0
        %v880 = vadd.f32 %v783, %v879
        %v881 = vpop.f32.mrb[0].mxu0
        %882 = vdwg.mxu0
        %v883 = vmax.f32 %v865, 0.0
        %v884 = vmax.f32 %v870, 0.0
        %v885 = vmax.f32 %v875, 0.0
        %v886 = vmax.f32 %v880, 0.0
        %887 = vst [vmem:[%s403] sm:$0xff] %v883
        %888 = vst [vmem:[%s403 + $0x8] sm:$0xff] %v884
        %889 = vst [vmem:[%s403 + $0x10] sm:$0xff] %v885
        %890 = vst [vmem:[%s403 + $0x18] sm:$0xff] %v886
        %v891 = vld [vmem:[%s2] sm:$0xff]
        %v892 = vld [vmem:[%s2 + $0x8] sm:$0xff]
        %v893 = vld [vmem:[%s2 + $0x10] sm:$0xff]
        %v894 = vld [vmem:[%s2 + $0x18] sm:$0xff]
        %v895 = vld [vmem:[%s2 + $0x20] sm:$0xff]
        %v896 = vld [vmem:[%s2 + $0x28] sm:$0xff]
        %v897 = vld [vmem:[%s2 + $0x30] sm:$0xff]
        %v898 = vld [vmem:[%s2 + $0x38] sm:$0xff]
        %s899 = scalar_lea.vmem %s364, 8 [#allocation2]
        %v900 = vld [vmem:[%s899] sm:$0x3f]
        %v901 = vld [vmem:[%s3] sm:$0xff]
        %v902 = vld [vmem:[%s3 + $0x8] sm:$0xff]
        %v903 = vld [vmem:[%s3 + $0x10] sm:$0xff]
        %v904 = vld [vmem:[%s3 + $0x18] sm:$0xff]
        %v905 = vld [vmem:[%s3 + $0x20] sm:$0xff]
        %v906 = vld [vmem:[%s3 + $0x28] sm:$0xff]
        %v907 = vld [vmem:[%s3 + $0x30] sm:$0xff]
        %v908 = vld [vmem:[%s3 + $0x38] sm:$0xff]
        %s909 = scalar_lea.vmem %s371, 4 [#allocation3]
        %v910 = vld [vmem:[%s909] sm:$0xf]
        %v912 = vsel %vm425, %v901, 0
        %v915 = vsel %vm425, %v902, 0
        %v918 = vsel %vm425, %v903, 0
        %v921 = vsel %vm425, %v904, 0
        %v924 = vsel %vm425, %v905, 0
        %v927 = vsel %vm425, %v906, 0
        %v930 = vsel %vm425, %v907, 0
        %v933 = vsel %vm425, %v908, 0
        %v936 = vsel %vm450, %v910, 0
        %938 = vmatprep.subr.mxu0 0.0
        %939 = vmatpush1.msra.mxu0 %v936
        %940 = vmatprep.subr.mxu0 0.0
        %941 = vmatpush1.msra.mxu0 0.0
        %942 = vmatprep.subr.mxu0 0.0
        %943 = vmatpush1.msra.mxu0 0.0
        %944 = vmatprep.subr.mxu0 0.0
        %945 = vmatpush1.msra.mxu0 0.0
        %946 = vmatprep.subr.mxu0 0.0
        %947 = vmatpush1.msra.mxu0 0.0
        %948 = vmatprep.subr.mxu0 0.0
        %949 = vmatpush1.msra.mxu0 0.0
        %950 = vmatprep.subr.mxu0 0.0
        %951 = vmatpush1.msra.mxu0 0.0
        %952 = vmatprep.subr.mxu0 0.0
        %953 = vmatpush1.msra.mxu0 0.0
        %954 = vmatprep.subr.mxu0 0.0
        %955 = vmatpush1.msra.mxu0 0.0
        %956 = vmatprep.subr.mxu0 0.0
        %957 = vmatpush1.msra.mxu0 0.0
        %958 = vmatprep.subr.mxu0 0.0
        %959 = vmatpush1.msra.mxu0 0.0
        %960 = vmatprep.subr.mxu0 0.0
        %961 = vmatpush1.msra.mxu0 0.0
        %962 = vmatprep.subr.mxu0 0.0
        %963 = vmatpush1.msra.mxu0 0.0
        %964 = vmatprep.subr.mxu0 0.0
        %965 = vmatpush1.msra.mxu0 0.0
        %966 = vmatprep.subr.mxu0 0.0
        %967 = vmatpush1.msra.mxu0 0.0
        %968 = vmatprep.subr.mxu0 0.0
        %969 = vmatpush1.msra.mxu0 0.0
        %970 = vmatprep.subr.mxu0 0.0
        %971 = vmatpush1.msra.mxu0 0.0
        %972 = vmatprep.subr.mxu0 0.0
        %973 = vmatpush1.msra.mxu0 0.0
        %974 = vmatprep.subr.mxu0 0.0
        %975 = vmatpush1.msra.mxu0 0.0
        %976 = vmatprep.subr.mxu0 0.0
        %977 = vmatpush1.msra.mxu0 0.0
        %978 = vmatprep.subr.mxu0 0.0
        %979 = vmatpush1.msra.mxu0 0.0
        %980 = vmatprep.subr.mxu0 0.0
        %981 = vmatpush1.msra.mxu0 0.0
        %982 = vmatprep.subr.mxu0 0.0
        %983 = vmatpush1.msra.mxu0 0.0
        %984 = vmatprep.subr.mxu0 0.0
        %985 = vmatpush1.msra.mxu0 0.0
        %986 = vmatprep.subr.mxu0 0.0
        %987 = vmatpush1.msra.mxu0 0.0
        %988 = vmatprep.subr.mxu0 0.0
        %989 = vmatpush1.msra.mxu0 0.0
        %990 = vmatprep.subr.mxu0 0.0
        %991 = vmatpush1.msra.mxu0 0.0
        %992 = vmatprep.subr.mxu0 0.0
        %993 = vmatpush1.msra.mxu0 0.0
        %994 = vmatprep.subr.mxu0 0.0
        %995 = vmatpush1.msra.mxu0 0.0
        %996 = vmatprep.subr.mxu0 0.0
        %997 = vmatpush1.msra.mxu0 0.0
        %998 = vmatprep.subr.mxu0 0.0
        %999 = vmatpush1.msra.mxu0 0.0
        %1000 = vmatprep.subr.mxu0 0.0
        %1001 = vmatpush1.msra.mxu0 0.0
        %1002 = vmatprep.mubr.f32.mxu0 0.0
        %1003 = vmatmul.mubr.f32.gmra.mrb[0].mxu0 %v912
        %v1004 = vpop.f32.mrb[0].mxu0
        %v1005 = vadd.f32 0.0, %v1004
        %v1006 = vpop.f32.mrb[0].mxu0
        %1007 = vmatprep.mubr.f32.mxu0 0.0
        %1008 = vmatmul.mubr.f32.gmra.mrb[0].mxu0 %v915
        %v1009 = vpop.f32.mrb[0].mxu0
        %v1010 = vadd.f32 0.0, %v1009
        %v1011 = vpop.f32.mrb[0].mxu0
        %1012 = vmatprep.mubr.f32.mxu0 0.0
        %1013 = vmatmul.mubr.f32.gmra.mrb[0].mxu0 %v918
        %v1014 = vpop.f32.mrb[0].mxu0
        %v1015 = vadd.f32 0.0, %v1014
        %v1016 = vpop.f32.mrb[0].mxu0
        %1017 = vmatprep.mubr.f32.mxu0 0.0
        %1018 = vmatmul.mubr.f32.gmra.mrb[0].mxu0 %v921
        %v1019 = vpop.f32.mrb[0].mxu0
        %v1020 = vadd.f32 0.0, %v1019
        %v1021 = vpop.f32.mrb[0].mxu0
        %1022 = vmatprep.mubr.f32.mxu0 0.0
        %1023 = vmatmul.mubr.f32.gmra.mrb[0].mxu0 %v924
        %v1024 = vpop.f32.mrb[0].mxu0
        %v1025 = vadd.f32 0.0, %v1024
        %v1026 = vpop.f32.mrb[0].mxu0
        %1027 = vmatprep.mubr.f32.mxu0 0.0
        %1028 = vmatmul.mubr.f32.gmra.mrb[0].mxu0 %v927
        %v1029 = vpop.f32.mrb[0].mxu0
        %v1030 = vadd.f32 0.0, %v1029
        %v1031 = vpop.f32.mrb[0].mxu0
        %1032 = vmatprep.mubr.f32.mxu0 0.0
        %1033 = vmatmul.mubr.f32.gmra.mrb[0].mxu0 %v930
        %v1034 = vpop.f32.mrb[0].mxu0
        %v1035 = vadd.f32 0.0, %v1034
        %v1036 = vpop.f32.mrb[0].mxu0
        %1037 = vmatprep.mubr.f32.mxu0 0.0
        %1038 = vmatmul.mubr.f32.gmra.mrb[0].mxu0 %v933
        %v1039 = vpop.f32.mrb[0].mxu0
        %v1040 = vadd.f32 0.0, %v1039
        %v1041 = vpop.f32.mrb[0].mxu0
        %1042 = vdwg.mxu0
        %v1044 = vsel %vm559, %v891, 0
        %v1047 = vsel %vm559, %v892, 0
        %v1050 = vsel %vm559, %v893, 0
        %v1053 = vsel %vm559, %v894, 0
        %v1056 = vsel %vm559, %v895, 0
        %v1059 = vsel %vm559, %v896, 0
        %v1062 = vsel %vm559, %v897, 0
        %v1065 = vsel %vm559, %v898, 0
        %v1068 = vsel %vm584, %v900, 0
        %1070 = vmatprep.subr.mxu0 0.0
        %1071 = vmatpush1.msra.mxu0 %v1068
        %1072 = vmatprep.subr.mxu0 0.0
        %1073 = vmatpush1.msra.mxu0 0.0
        %1074 = vmatprep.subr.mxu0 0.0
        %1075 = vmatpush1.msra.mxu0 0.0
        %1076 = vmatprep.subr.mxu0 0.0
        %1077 = vmatpush1.msra.mxu0 0.0
        %1078 = vmatprep.subr.mxu0 0.0
        %1079 = vmatpush1.msra.mxu0 0.0
        %1080 = vmatprep.subr.mxu0 0.0
        %1081 = vmatpush1.msra.mxu0 0.0
        %1082 = vmatprep.subr.mxu0 0.0
        %1083 = vmatpush1.msra.mxu0 0.0
        %1084 = vmatprep.subr.mxu0 0.0
        %1085 = vmatpush1.msra.mxu0 0.0
        %1086 = vmatprep.subr.mxu0 0.0
        %1087 = vmatpush1.msra.mxu0 0.0
        %1088 = vmatprep.subr.mxu0 0.0
        %1089 = vmatpush1.msra.mxu0 0.0
        %1090 = vmatprep.subr.mxu0 0.0
        %1091 = vmatpush1.msra.mxu0 0.0
        %1092 = vmatprep.subr.mxu0 0.0
        %1093 = vmatpush1.msra.mxu0 0.0
        %1094 = vmatprep.subr.mxu0 0.0
        %1095 = vmatpush1.msra.mxu0 0.0
        %1096 = vmatprep.subr.mxu0 0.0
        %1097 = vmatpush1.msra.mxu0 0.0
        %1098 = vmatprep.subr.mxu0 0.0
        %1099 = vmatpush1.msra.mxu0 0.0
        %1100 = vmatprep.subr.mxu0 0.0
        %1101 = vmatpush1.msra.mxu0 0.0
        %1102 = vmatprep.subr.mxu0 0.0
        %1103 = vmatpush1.msra.mxu0 0.0
        %1104 = vmatprep.subr.mxu0 0.0
        %1105 = vmatpush1.msra.mxu0 0.0
        %1106 = vmatprep.subr.mxu0 0.0
        %1107 = vmatpush1.msra.mxu0 0.0
        %1108 = vmatprep.subr.mxu0 0.0
        %1109 = vmatpush1.msra.mxu0 0.0
        %1110 = vmatprep.subr.mxu0 0.0
        %1111 = vmatpush1.msra.mxu0 0.0
        %1112 = vmatprep.subr.mxu0 0.0
        %1113 = vmatpush1.msra.mxu0 0.0
        %1114 = vmatprep.subr.mxu0 0.0
        %1115 = vmatpush1.msra.mxu0 0.0
        %1116 = vmatprep.subr.mxu0 0.0
        %1117 = vmatpush1.msra.mxu0 0.0
        %1118 = vmatprep.subr.mxu0 0.0
        %1119 = vmatpush1.msra.mxu0 0.0
        %1120 = vmatprep.subr.mxu0 0.0
        %1121 = vmatpush1.msra.mxu0 0.0
        %1122 = vmatprep.subr.mxu0 0.0
        %1123 = vmatpush1.msra.mxu0 0.0
        %1124 = vmatprep.subr.mxu0 0.0
        %1125 = vmatpush1.msra.mxu0 0.0
        %1126 = vmatprep.subr.mxu0 0.0
        %1127 = vmatpush1.msra.mxu0 0.0
        %1128 = vmatprep.subr.mxu0 0.0
        %1129 = vmatpush1.msra.mxu0 0.0
        %1130 = vmatprep.subr.mxu0 0.0
        %1131 = vmatpush1.msra.mxu0 0.0
        %1132 = vmatprep.subr.mxu0 0.0
        %1133 = vmatpush1.msra.mxu0 0.0
        %1134 = vmatprep.mubr.f32.mxu0 0.0
        %1135 = vmatmul.mubr.f32.gmra.mrb[0].mxu0 %v1044
        %v1136 = vpop.f32.mrb[0].mxu0
        %v1137 = vadd.f32 %v1005, %v1136
        %v1138 = vpop.f32.mrb[0].mxu0
        %1139 = vmatprep.mubr.f32.mxu0 0.0
        %1140 = vmatmul.mubr.f32.gmra.mrb[0].mxu0 %v1047
        %v1141 = vpop.f32.mrb[0].mxu0
        %v1142 = vadd.f32 %v1010, %v1141
        %v1143 = vpop.f32.mrb[0].mxu0
        %1144 = vmatprep.mubr.f32.mxu0 0.0
        %1145 = vmatmul.mubr.f32.gmra.mrb[0].mxu0 %v1050
        %v1146 = vpop.f32.mrb[0].mxu0
        %v1147 = vadd.f32 %v1015, %v1146
        %v1148 = vpop.f32.mrb[0].mxu0
        %1149 = vmatprep.mubr.f32.mxu0 0.0
        %1150 = vmatmul.mubr.f32.gmra.mrb[0].mxu0 %v1053
        %v1151 = vpop.f32.mrb[0].mxu0
        %v1152 = vadd.f32 %v1020, %v1151
        %v1153 = vpop.f32.mrb[0].mxu0
        %1154 = vmatprep.mubr.f32.mxu0 0.0
        %1155 = vmatmul.mubr.f32.gmra.mrb[0].mxu0 %v1056
        %v1156 = vpop.f32.mrb[0].mxu0
        %v1157 = vadd.f32 %v1025, %v1156
        %v1158 = vpop.f32.mrb[0].mxu0
        %1159 = vmatprep.mubr.f32.mxu0 0.0
        %1160 = vmatmul.mubr.f32.gmra.mrb[0].mxu0 %v1059
        %v1161 = vpop.f32.mrb[0].mxu0
        %v1162 = vadd.f32 %v1030, %v1161
        %v1163 = vpop.f32.mrb[0].mxu0
        %1164 = vmatprep.mubr.f32.mxu0 0.0
        %1165 = vmatmul.mubr.f32.gmra.mrb[0].mxu0 %v1062
        %v1166 = vpop.f32.mrb[0].mxu0
        %v1167 = vadd.f32 %v1035, %v1166
        %v1168 = vpop.f32.mrb[0].mxu0
        %1169 = vmatprep.mubr.f32.mxu0 0.0
        %1170 = vmatmul.mubr.f32.gmra.mrb[0].mxu0 %v1065
        %v1171 = vpop.f32.mrb[0].mxu0
        %v1172 = vadd.f32 %v1040, %v1171
        %v1173 = vpop.f32.mrb[0].mxu0
        %1174 = vdwg.mxu0
        %v1175 = vld [vmem:[%s4] sm:$0xff]
        %v1176 = vld [vmem:[%s4 + $0x8] sm:$0xff]
        %v1177 = vld [vmem:[%s4 + $0x10] sm:$0xff]
        %v1178 = vld [vmem:[%s4 + $0x18] sm:$0xff]
        %v1179 = vld [vmem:[%s4 + $0x20] sm:$0xff]
        %v1180 = vld [vmem:[%s4 + $0x28] sm:$0xff]
        %v1181 = vld [vmem:[%s4 + $0x30] sm:$0xff]
        %v1182 = vld [vmem:[%s4 + $0x38] sm:$0xff]
        %1184 = vset.pattern.permute.xlu0 0
        %1185 = vperm.xlu0 %1184, %v1175
        %v1186 = vpop.permute.xlu0 %1185
        %1189 = vset.pattern.permute.xlu0 0
        %1190 = vperm.xlu0 %1189, %v1176
        %v1191 = vpop.permute.xlu0 %1190
        %1194 = vset.pattern.permute.xlu0 0
        %1195 = vperm.xlu0 %1194, %v1177
        %v1196 = vpop.permute.xlu0 %1195
        %1199 = vset.pattern.permute.xlu0 0
        %1200 = vperm.xlu0 %1199, %v1178
        %v1201 = vpop.permute.xlu0 %1200
        %1204 = vset.pattern.permute.xlu0 0
        %1205 = vperm.xlu0 %1204, %v1179
        %v1206 = vpop.permute.xlu0 %1205
        %1209 = vset.pattern.permute.xlu0 0
        %1210 = vperm.xlu0 %1209, %v1180
        %v1211 = vpop.permute.xlu0 %1210
        %1214 = vset.pattern.permute.xlu0 0
        %1215 = vperm.xlu0 %1214, %v1181
        %v1216 = vpop.permute.xlu0 %1215
        %1219 = vset.pattern.permute.xlu0 0
        %1220 = vperm.xlu0 %1219, %v1182
        %v1221 = vpop.permute.xlu0 %1220
        %v1223 = vadd.f32 %v1137, %v1186
        %v1224 = vadd.f32 %v1142, %v1191
        %v1225 = vadd.f32 %v1147, %v1196
        %v1226 = vadd.f32 %v1152, %v1201
        %v1227 = vadd.f32 %v1157, %v1206
        %v1228 = vadd.f32 %v1162, %v1211
        %v1229 = vadd.f32 %v1167, %v1216
        %v1230 = vadd.f32 %v1172, %v1221
        %v1231 = vmax.f32 %v1223, 0.0
        %v1232 = vmax.f32 %v1224, 0.0
        %v1233 = vmax.f32 %v1225, 0.0
        %v1234 = vmax.f32 %v1226, 0.0
        %v1235 = vmax.f32 %v1227, 0.0
        %v1236 = vmax.f32 %v1228, 0.0
        %v1237 = vmax.f32 %v1229, 0.0
        %v1238 = vmax.f32 %v1230, 0.0
        %v1239 = vld [vmem:[%s5] sm:$0xff]
        %v1240 = vld [vmem:[%s5 + $0x8] sm:$0xff]
        %v1241 = vld [vmem:[%s5 + $0x10] sm:$0xff]
        %v1242 = vld [vmem:[%s5 + $0x18] sm:$0xff]
        %v1243 = vld [vmem:[%s6] sm:$0xff]
        %v1244 = vld [vmem:[%s6 + $0x8] sm:$0xff]
        %v1245 = vld [vmem:[%s6 + $0x10] sm:$0xff]
        %v1246 = vld [vmem:[%s6 + $0x18] sm:$0xff]
        %1248 = vset.pattern.permute.xlu0 0
        %1249 = vperm.xlu0 %1248, %v1243
        %v1250 = vpop.permute.xlu0 %1249
        %1253 = vset.pattern.permute.xlu0 0
        %1254 = vperm.xlu0 %1253, %v1244
        %v1255 = vpop.permute.xlu0 %1254
        %1258 = vset.pattern.permute.xlu0 0
        %1259 = vperm.xlu0 %1258, %v1245
        %v1260 = vpop.permute.xlu0 %1259
        %1263 = vset.pattern.permute.xlu0 0
        %1264 = vperm.xlu0 %1263, %v1246
        %v1265 = vpop.permute.xlu0 %1264
        %v1268 = vsel %vm785, %v1239, 0
        %v1271 = vsel %vm785, %v1240, 0
        %v1274 = vsel %vm785, %v1241, 0
        %v1277 = vsel %vm785, %v1242, 0
        %1279 = vmatprep.subr.mxu0 0.0
        %1280 = vmatpush1.msra.mxu0 %v1231
        %1281 = vmatprep.subr.mxu0 0.0
        %1282 = vmatpush1.msra.mxu0 %v1232
        %1283 = vmatprep.subr.mxu0 0.0
        %1284 = vmatpush1.msra.mxu0 %v1233
        %1285 = vmatprep.subr.mxu0 0.0
        %1286 = vmatpush1.msra.mxu0 %v1234
        %1287 = vmatprep.subr.mxu0 0.0
        %1288 = vmatpush1.msra.mxu0 %v1235
        %1289 = vmatprep.subr.mxu0 0.0
        %1290 = vmatpush1.msra.mxu0 %v1236
        %1291 = vmatprep.subr.mxu0 0.0
        %1292 = vmatpush1.msra.mxu0 %v1237
        %1293 = vmatprep.subr.mxu0 0.0
        %1294 = vmatpush1.msra.mxu0 %v1238
        %1295 = vmatprep.subr.mxu0 0.0
        %1296 = vmatpush1.msra.mxu0 0.0
        %1297 = vmatprep.subr.mxu0 0.0
        %1298 = vmatpush1.msra.mxu0 0.0
        %1299 = vmatprep.subr.mxu0 0.0
        %1300 = vmatpush1.msra.mxu0 0.0
        %1301 = vmatprep.subr.mxu0 0.0
        %1302 = vmatpush1.msra.mxu0 0.0
        %1303 = vmatprep.subr.mxu0 0.0
        %1304 = vmatpush1.msra.mxu0 0.0
        %1305 = vmatprep.subr.mxu0 0.0
        %1306 = vmatpush1.msra.mxu0 0.0
        %1307 = vmatprep.subr.mxu0 0.0
        %1308 = vmatpush1.msra.mxu0 0.0
        %1309 = vmatprep.subr.mxu0 0.0
        %1310 = vmatpush1.msra.mxu0 0.0
        %1311 = vmatprep.subr.mxu0 0.0
        %1312 = vmatpush1.msra.mxu0 0.0
        %1313 = vmatprep.subr.mxu0 0.0
        %1314 = vmatpush1.msra.mxu0 0.0
        %1315 = vmatprep.subr.mxu0 0.0
        %1316 = vmatpush1.msra.mxu0 0.0
        %1317 = vmatprep.subr.mxu0 0.0
        %1318 = vmatpush1.msra.mxu0 0.0
        %1319 = vmatprep.subr.mxu0 0.0
        %1320 = vmatpush1.msra.mxu0 0.0
        %1321 = vmatprep.subr.mxu0 0.0
        %1322 = vmatpush1.msra.mxu0 0.0
        %1323 = vmatprep.subr.mxu0 0.0
        %1324 = vmatpush1.msra.mxu0 0.0
        %1325 = vmatprep.subr.mxu0 0.0
        %1326 = vmatpush1.msra.mxu0 0.0
        %1327 = vmatprep.subr.mxu0 0.0
        %1328 = vmatpush1.msra.mxu0 0.0
        %1329 = vmatprep.subr.mxu0 0.0
        %1330 = vmatpush1.msra.mxu0 0.0
        %1331 = vmatprep.subr.mxu0 0.0
        %1332 = vmatpush1.msra.mxu0 0.0
        %1333 = vmatprep.subr.mxu0 0.0
        %1334 = vmatpush1.msra.mxu0 0.0
        %1335 = vmatprep.subr.mxu0 0.0
        %1336 = vmatpush1.msra.mxu0 0.0
        %1337 = vmatprep.subr.mxu0 0.0
        %1338 = vmatpush1.msra.mxu0 0.0
        %1339 = vmatprep.subr.mxu0 0.0
        %1340 = vmatpush1.msra.mxu0 0.0
        %1341 = vmatprep.subr.mxu0 0.0
        %1342 = vmatpush1.msra.mxu0 0.0
        %1343 = vmatprep.mubr.f32.mxu0 0.0
        %1344 = vmatmul.mubr.f32.gmra.mrb[0].mxu0 %v1268
        %v1345 = vpop.f32.mrb[0].mxu0
        %v1346 = vadd.f32 %v1250, %v1345
        %v1347 = vpop.f32.mrb[0].mxu0
        %1348 = vmatprep.mubr.f32.mxu0 0.0
        %1349 = vmatmul.mubr.f32.gmra.mrb[0].mxu0 %v1271
        %v1350 = vpop.f32.mrb[0].mxu0
        %v1351 = vadd.f32 %v1255, %v1350
        %v1352 = vpop.f32.mrb[0].mxu0
        %1353 = vmatprep.mubr.f32.mxu0 0.0
        %1354 = vmatmul.mubr.f32.gmra.mrb[0].mxu0 %v1274
        %v1355 = vpop.f32.mrb[0].mxu0
        %v1356 = vadd.f32 %v1260, %v1355
        %v1357 = vpop.f32.mrb[0].mxu0
        %1358 = vmatprep.mubr.f32.mxu0 0.0
        %1359 = vmatmul.mubr.f32.gmra.mrb[0].mxu0 %v1277
        %v1360 = vpop.f32.mrb[0].mxu0
        %v1361 = vadd.f32 %v1265, %v1360
        %v1362 = vpop.f32.mrb[0].mxu0
        %1363 = vdwg.mxu0
        %v1364 = vmax.f32 %v1346, 0.0
        %v1365 = vmax.f32 %v1351, 0.0
        %v1366 = vmax.f32 %v1356, 0.0
        %v1367 = vmax.f32 %v1361, 0.0
        %s1368 = scalar_lea.vmem %s403, 32 [#allocation4]
        %1369 = vst [vmem:[%s1368] sm:$0xff] %v1364
        %1370 = vst [vmem:[%s1368 + $0x8] sm:$0xff] %v1365
        %1371 = vst [vmem:[%s1368 + $0x10] sm:$0xff] %v1366
        %1372 = vst [vmem:[%s1368 + $0x18] sm:$0xff] %v1367
        %s1373 = sand.u32 %s204, 1
        %s1374 = scalar_lea.sflag [#allocation5], %s1373
        %s1375 = sand.u32 %s204, 1
        %s1376 = smul.addr %s1375, 64
        %s1377 = scalar_lea.vmem [#allocation4], %s1376
        // Predicated region
        $region128: #{tpu_custom_call.1} parent=118 // pred_check
          %p1378 = pneg %p214
        $region129: #{tpu_custom_call.1} parent=118 // pred_check_branch
          %1380 = sbr.rel (%p1378) target = $region131
        $region130: #{tpu_custom_call.1} parent=118 // pred_region
          %s1381 = smul.u32 2, %s25
          %s1383 = ssub.s32 1024, 1024
          %1384 = vsyncadd %s1374, %s1383
          %s1385 = smul.addr %s1381, 8
          %s1386 = sadd.s32 %s26, %s1385
          %s1387 = smul.addr %s1386, 128
          %s1388 = scalar_lea.hbm %s7, %s1387
          %s1389 = sshll.u32 %s1377, 4
          %s1390 = int_to_ptr.vmem [resolvable:$true] %s1389
          %1395 = dma.vmem_to_hbm [thread:$0]  %s1390, 1024, %s1388, %s1374, 128, 256, 8
        $region131: #{tpu_custom_call.1} parent=118 // pred_fallthru
          _
      $region119: #{tpu_custom_call.1} parent=5 // pred_fallthru
        _
      %p1396 = scmp.le.s32.totalorder 2, %s16
      // Predicated region
      $region132: #{tpu_custom_call.1} parent=5 // pred_check
        %p1397 = pneg %p1396
      $region133: #{tpu_custom_call.1} parent=5 // pred_check_branch
        %1399 = sbr.rel (%p1397) target = $region135
      $region134: #{tpu_custom_call.1} parent=5 // pred_region
        %s1400 = ssub.s32 %s16, 2
        // Predicated region
        $region136: #{tpu_custom_call.1} parent=134 // pred_check
          %p1401 = pneg %p220
        $region137: #{tpu_custom_call.1} parent=134 // pred_check_branch
          %1403 = sbr.rel (%p1401) target = $region139
        $region138: #{tpu_custom_call.1} parent=134 // pred_region
          %s1404 = sand.u32 %s205, 1
          %s1405 = scalar_lea.sflag [#allocation5], %s1404
          %s1406 = sand.u32 %s205, 1
          %s1407 = smul.addr %s1406, 64
          %s1408 = scalar_lea.vmem [#allocation4], %s1407
          %1409 = dma.done %s1405, 1024
        $region139: #{tpu_custom_call.1} parent=134 // pred_fallthru
          _
      $region135: #{tpu_custom_call.1} parent=5 // pred_fallthru
        _
    $region6: #{tpu_custom_call.1} parent=1 // loop_footer
      %s20 = sadd.s32 1, %s16
    $region7: #{tpu_custom_call.1} parent=1 // loop_footer_branch
      %15 = sbr.rel target = $region3
    $region8: #{tpu_custom_call.1} parent=1 // loop_exit
      _
    %1410 = vsyncpa [#allocation5], 1
    %s1411 = scalar_lea.sflag [#allocation5], 1
    %1412 = vsyncpa %s1411, 1

// kernel: tpu_custom_call.1
$region0: #{tpu_custom_call.1}
  #allocation0 [shape = 'u32[]', space=smem, size = 0x4, offset = 0x4, fixed_abs, tag = 'smem constant byte address 0x4 - core index']
  #allocation1 [shape = 'u32[144,128]{1,0:T(1,128)}', space=vmem, size = 0x12000, scoped, tag = 'internal scratch']
  %s0 = inlined_call_operand.vmem [shape: f32[2,6,256], index: 0, kind: input, shape index: {}]
  %s1 = inlined_call_operand.vmem [shape: f32[2,4,256], index: 1, kind: input, shape index: {}]
  %s2 = inlined_call_operand.vmem [shape: f32[64,6], index: 2, kind: input, shape index: {}]
  %s3 = inlined_call_operand.vmem [shape: f32[64,4], index: 3, kind: input, shape index: {}]
  %s4 = inlined_call_operand.vmem [shape: f32[64,1], index: 4, kind: input, shape index: {}]
  %s5 = inlined_call_operand.vmem [shape: f32[32,64], index: 5, kind: input, shape index: {}]
  %s6 = inlined_call_operand.vmem [shape: f32[32,1], index: 6, kind: input, shape index: {}]
  %s7 = inlined_call_operand.hbm [shape: f32[2,32,256], index: 7, kind: output, shape index: {}]
  %s8 = sld [smem:[#allocation0]]
  $region140: #{tpu_custom_call.1} parent=0
    _
  %s10 = ssub.s32 1, %s8
  %s11 = scalar_select 0, %s10, %s8
  $region1: #{tpu_custom_call.1} parent=0
    #allocation2 [shape = 'u8[16384]{0}', space=vmem, size = 0x4000, scoped, tag = 'input window, operand 0']
    #allocation3 [shape = 'u8[8192]{0}', space=vmem, size = 0x2000, scoped, tag = 'input window, operand 1']
    #allocation4 [shape = 'u8[65536]{0}', space=vmem, size = 0x10000, scoped, tag = 'output window, operand 0']
    #allocation5 [shape = 's32[2]{0}', space=sflag, size = 0x8, scoped, tag = 'scoped memory for tpu_custom_call.1']
    %12 = vsyncpa [#allocation5], 0
    %s13 = scalar_lea.sflag [#allocation5], 1
    %14 = vsyncpa %s13, 0
    loop: start=0, step=1, limit=4
    $region2: #{tpu_custom_call.1} parent=1 // loop_pre_header
      _
    $region3: #{tpu_custom_call.1} parent=1 // loop_header
      %s16 = sphi 0, %s20
      %p17 = scmp.ge.s32.totalorder %s16, 4
      %s23 = sphi 0, %s35
      %s24 = sphi 0, %s31
      %s25 = sphi 0, %s23
      %s26 = sphi 0, %s24
      %s27 = sphi 0, %s25
      %s28 = sphi 0, %s26
      %s40 = sphi 0, %s42
      %s43 = sphi 0, %s40
      %s44 = sphi 0, %s43
      %s60 = sphi 0, %s44
      %s68 = sphi 0, %s70
      %s71 = sphi 0, %s68
      %s72 = sphi 0, %s71
      %s88 = sphi 0, %s72
      %s92 = sphi 0, %s92
      %s94 = sphi 0, %s92
      %s95 = sphi 0, %s94
      %s109 = sphi 0, %s95
      %s113 = sphi 0, %s113
      %s115 = sphi 0, %s113
      %s116 = sphi 0, %s115
      %s130 = sphi 0, %s116
      %s134 = sphi 0, %s134
      %s136 = sphi 0, %s134
      %s137 = sphi 0, %s136
      %s151 = sphi 0, %s137
      %s155 = sphi 0, %s155
      %s157 = sphi 0, %s155
      %s158 = sphi 0, %s157
      %s172 = sphi 0, %s158
      %s176 = sphi 0, %s176
      %s178 = sphi 0, %s176
      %s179 = sphi 0, %s178
      %s193 = sphi 0, %s179
      %s201 = sphi 0, %s203
      %s204 = sphi 0, %s201
      %s205 = sphi 0, %s204
      %s221 = sphi 0, %s205
    $region4: #{tpu_custom_call.1} parent=1 // loop_header_branch
      %19 = sbr.rel (%p17) target = $region8
    $region5: #{tpu_custom_call.1} parent=1 // loop_body
      %s21 = ssub.s32 %s16, 1
      %s22 = ssub.s32 %s16, 2
      %s29 = sadd.s32 1, %s24
      %p30 = scmp.ge.s32.totalorder %s29, 2
      %s31 = scalar_select %p30, 0, %s29
      %s32 = sadd.s32 1, %s23
      %s33 = scalar_select %p30, %s32, %s23
      %p34 = scmp.ge.s32.totalorder %s33, 1
      %s35 = scalar_select %p34, 0, %s33
      %s36 = ssub.s32 %s23, %s35
      %s37 = ssub.s32 %s24, %s31
      %s38 = sor.u32 %s36, %s37
      %p39 = scmp.eq.s32.totalorder %s38, 0
      %s41 = sadd.s32 %s40, 1
      %s42 = scalar_select %p39, %s40, %s41
      %p45 = pneg %p39
      %p46 = scmp.eq.s32.totalorder %s16, 1
      %p47 = por %p45, %p46
      %p48 = scmp.ne.s32.totalorder %s40, %s43
      %p49 = scmp.eq.s32.totalorder %s16, 0
      %p50 = por %p48, %p49
      %p51 = scmp.ne.s32.totalorder %s40, %s43
      %p52 = scmp.eq.s32.totalorder %s21, 1
      %p53 = por %p51, %p52
      %p54 = scmp.ne.s32.totalorder %s43, %s44
      %p55 = scmp.eq.s32.totalorder %s21, 0
      %p56 = por %p54, %p55
      %p57 = scmp.ne.s32.totalorder %s43, %s44
      %p58 = scmp.eq.s32.totalorder %s22, 1
      %p59 = por %p57, %p58
      %p61 = scmp.ne.s32.totalorder %s44, %s60
      %p62 = scmp.eq.s32.totalorder %s22, 0
      %p63 = por %p61, %p62
      %s64 = ssub.s32 %s23, %s35
      %s65 = ssub.s32 %s24, %s31
      %s66 = sor.u32 %s64, %s65
      %p67 = scmp.eq.s32.totalorder %s66, 0
      %s69 = sadd.s32 %s68, 1
      %s70 = scalar_select %p67, %s68, %s69
      %p73 = pneg %p67
      %p74 = scmp.eq.s32.totalorder %s16, 1
      %p75 = por %p73, %p74
      %p76 = scmp.ne.s32.totalorder %s68, %s71
      %p77 = scmp.eq.s32.totalorder %s16, 0
      %p78 = por %p76, %p77
      %p79 = scmp.ne.s32.totalorder %s68, %s71
      %p80 = scmp.eq.s32.totalorder %s21, 1
      %p81 = por %p79, %p80
      %p82 = scmp.ne.s32.totalorder %s71, %s72
      %p83 = scmp.eq.s32.totalorder %s21, 0
      %p84 = por %p82, %p83
      %p85 = scmp.ne.s32.totalorder %s71, %s72
      %p86 = scmp.eq.s32.totalorder %s22, 1
      %p87 = por %p85, %p86
      %p89 = scmp.ne.s32.totalorder %s72, %s88
      %p90 = scmp.eq.s32.totalorder %s22, 0
      %p91 = por %p89, %p90
      %s93 = sadd.s32 %s92, 1
      %p96 = scmp.eq.s32.totalorder %s16, 1
      %p97 = scmp.ne.s32.totalorder %s92, %s94
      %p98 = scmp.eq.s32.totalorder %s16, 0
      %p99 = por %p97, %p98
      %p100 = scmp.ne.s32.totalorder %s92, %s94
      %p101 = scmp.eq.s32.totalorder %s21, 1
      %p102 = por %p100, %p101
      %p103 = scmp.ne.s32.totalorder %s94, %s95
      %p104 = scmp.eq.s32.totalorder %s21, 0
      %p105 = por %p103, %p104
      %p106 = scmp.ne.s32.totalorder %s94, %s95
      %p107 = scmp.eq.s32.totalorder %s22, 1
      %p108 = por %p106, %p107
      %p110 = scmp.ne.s32.totalorder %s95, %s109
      %p111 = scmp.eq.s32.totalorder %s22, 0
      %p112 = por %p110, %p111
      %s114 = sadd.s32 %s113, 1
      %p117 = scmp.eq.s32.totalorder %s16, 1
      %p118 = scmp.ne.s32.totalorder %s113, %s115
      %p119 = scmp.eq.s32.totalorder %s16, 0
      %p120 = por %p118, %p119
      %p121 = scmp.ne.s32.totalorder %s113, %s115
      %p122 = scmp.eq.s32.totalorder %s21, 1
      %p123 = por %p121, %p122
      %p124 = scmp.ne.s32.totalorder %s115, %s116
      %p125 = scmp.eq.s32.totalorder %s21, 0
      %p126 = por %p124, %p125
      %p127 = scmp.ne.s32.totalorder %s115, %s116
      %p128 = scmp.eq.s32.totalorder %s22, 1
      %p129 = por %p127, %p128
      %p131 = scmp.ne.s32.totalorder %s116, %s130
      %p132 = scmp.eq.s32.totalorder %s22, 0
      %p133 = por %p131, %p132
      %s135 = sadd.s32 %s134, 1
      %p138 = scmp.eq.s32.totalorder %s16, 1
      %p139 = scmp.ne.s32.totalorder %s134, %s136
      %p140 = scmp.eq.s32.totalorder %s16, 0
      %p141 = por %p139, %p140
      %p142 = scmp.ne.s32.totalorder %s134, %s136
      %p143 = scmp.eq.s32.totalorder %s21, 1
      %p144 = por %p142, %p143
      %p145 = scmp.ne.s32.totalorder %s136, %s137
      %p146 = scmp.eq.s32.totalorder %s21, 0
      %p147 = por %p145, %p146
      %p148 = scmp.ne.s32.totalorder %s136, %s137
      %p149 = scmp.eq.s32.totalorder %s22, 1
      %p150 = por %p148, %p149
      %p152 = scmp.ne.s32.totalorder %s137, %s151
      %p153 = scmp.eq.s32.totalorder %s22, 0
      %p154 = por %p152, %p153
      %s156 = sadd.s32 %s155, 1
      %p159 = scmp.eq.s32.totalorder %s16, 1
      %p160 = scmp.ne.s32.totalorder %s155, %s157
      %p161 = scmp.eq.s32.totalorder %s16, 0
      %p162 = por %p160, %p161
      %p163 = scmp.ne.s32.totalorder %s155, %s157
      %p164 = scmp.eq.s32.totalorder %s21, 1
      %p165 = por %p163, %p164
      %p166 = scmp.ne.s32.totalorder %s157, %s158
      %p167 = scmp.eq.s32.totalorder %s21, 0
      %p168 = por %p166, %p167
      %p169 = scmp.ne.s32.totalorder %s157, %s158
      %p170 = scmp.eq.s32.totalorder %s22, 1
      %p171 = por %p169, %p170
      %p173 = scmp.ne.s32.totalorder %s158, %s172
      %p174 = scmp.eq.s32.totalorder %s22, 0
      %p175 = por %p173, %p174
      %s177 = sadd.s32 %s176, 1
      %p180 = scmp.eq.s32.totalorder %s16, 1
      %p181 = scmp.ne.s32.totalorder %s176, %s178
      %p182 = scmp.eq.s32.totalorder %s16, 0
      %p183 = por %p181, %p182
      %p184 = scmp.ne.s32.totalorder %s176, %s178
      %p185 = scmp.eq.s32.totalorder %s21, 1
      %p186 = por %p184, %p185
      %p187 = scmp.ne.s32.totalorder %s178, %s179
      %p188 = scmp.eq.s32.totalorder %s21, 0
      %p189 = por %p187, %p188
      %p190 = scmp.ne.s32.totalorder %s178, %s179
      %p191 = scmp.eq.s32.totalorder %s22, 1
      %p192 = por %p190, %p191
      %p194 = scmp.ne.s32.totalorder %s179, %s193
      %p195 = scmp.eq.s32.totalorder %s22, 0
      %p196 = por %p194, %p195
      %s197 = ssub.s32 %s23, %s35
      %s198 = ssub.s32 %s24, %s31
      %s199 = sor.u32 %s197, %s198
      %p200 = scmp.eq.s32.totalorder %s199, 0
      %s202 = sadd.s32 %s201, 1
      %s203 = scalar_select %p200, %s201, %s202
      %p206 = pneg %p200
      %p207 = scmp.eq.s32.totalorder %s16, 1
      %p208 = por %p206, %p207
      %p209 = scmp.ne.s32.totalorder %s201, %s204
      %p210 = scmp.eq.s32.totalorder %s16, 0
      %p211 = por %p209, %p210
      %p212 = scmp.ne.s32.totalorder %s201, %s204
      %p213 = scmp.eq.s32.totalorder %s21, 1
      %p214 = por %p212, %p213
      %p215 = scmp.ne.s32.totalorder %s204, %s205
      %p216 = scmp.eq.s32.totalorder %s21, 0
      %p217 = por %p215, %p216
      %p218 = scmp.ne.s32.totalorder %s204, %s205
      %p219 = scmp.eq.s32.totalorder %s22, 1
      %p220 = por %p218, %p219
      %p222 = scmp.ne.s32.totalorder %s205, %s221
      %p223 = scmp.eq.s32.totalorder %s22, 0
      %p224 = por %p222, %p223
      %p225 = scmp.le.s32.totalorder 1, %s16
      %p226 = scmp.lt.s32.totalorder %s16, 3
      %p227 = pnand %p225, %p226
      %p228 = pneg %p227
      // Predicated region
      $region9: #{tpu_custom_call.1} parent=5 // pred_check
        _
      $region10: #{tpu_custom_call.1} parent=5 // pred_check_branch
        %230 = sbr.rel (%p227) target = $region12
      $region11: #{tpu_custom_call.1} parent=5 // pred_region
        %s231 = ssub.s32 %s16, 1
        // Predicated region
        $region13: #{tpu_custom_call.1} parent=11 // pred_check
          %p232 = pneg %p105
        $region14: #{tpu_custom_call.1} parent=11 // pred_check_branch
          %234 = sbr.rel (%p232) target = $region16
        $region15: #{tpu_custom_call.1} parent=11 // pred_region
          _
        $region16: #{tpu_custom_call.1} parent=11 // pred_fallthru
          _
        // Predicated region
        $region17: #{tpu_custom_call.1} parent=11 // pred_check
          %p235 = pneg %p126
        $region18: #{tpu_custom_call.1} parent=11 // pred_check_branch
          %237 = sbr.rel (%p235) target = $region20
        $region19: #{tpu_custom_call.1} parent=11 // pred_region
          _
        $region20: #{tpu_custom_call.1} parent=11 // pred_fallthru
          _
        // Predicated region
        $region21: #{tpu_custom_call.1} parent=11 // pred_check
          %p238 = pneg %p147
        $region22: #{tpu_custom_call.1} parent=11 // pred_check_branch
          %240 = sbr.rel (%p238) target = $region24
        $region23: #{tpu_custom_call.1} parent=11 // pred_region
          _
        $region24: #{tpu_custom_call.1} parent=11 // pred_fallthru
          _
        // Predicated region
        $region25: #{tpu_custom_call.1} parent=11 // pred_check
          %p241 = pneg %p168
        $region26: #{tpu_custom_call.1} parent=11 // pred_check_branch
          %243 = sbr.rel (%p241) target = $region28
        $region27: #{tpu_custom_call.1} parent=11 // pred_region
          _
        $region28: #{tpu_custom_call.1} parent=11 // pred_fallthru
          _
        // Predicated region
        $region29: #{tpu_custom_call.1} parent=11 // pred_check
          %p244 = pneg %p189
        $region30: #{tpu_custom_call.1} parent=11 // pred_check_branch
          %246 = sbr.rel (%p244) target = $region32
        $region31: #{tpu_custom_call.1} parent=11 // pred_region
          _
        $region32: #{tpu_custom_call.1} parent=11 // pred_fallthru
          _
      $region12: #{tpu_custom_call.1} parent=5 // pred_fallthru
        _
      %p247 = scmp.lt.s32.totalorder %s16, 2
      // Predicated region
      $region33: #{tpu_custom_call.1} parent=5 // pred_check
        %p248 = pneg %p247
      $region34: #{tpu_custom_call.1} parent=5 // pred_check_branch
        %250 = sbr.rel (%p248) target = $region36
      $region35: #{tpu_custom_call.1} parent=5 // pred_region
        // Predicated region
        $region37: #{tpu_custom_call.1} parent=35 // pred_check
          %p251 = pneg %p50
        $region38: #{tpu_custom_call.1} parent=35 // pred_check_branch
          %253 = sbr.rel (%p251) target = $region40
        $region39: #{tpu_custom_call.1} parent=35 // pred_region
          %s254 = sand.u32 %s40, 1
          %s255 = sand.u32 %s40, 1
          %s256 = smul.addr %s255, 16
          %s257 = scalar_lea.vmem [#allocation2], %s256
          %s258 = smul.u32 2, %s23
          %s259 = smul.addr %s258, 2
          %s260 = sadd.s32 %s24, %s259
          %s261 = smul.addr %s260, 8
          %s262 = scalar_lea.vmem %s0, %s261
          // Predicated region
          $region41: #{tpu_custom_call.1} parent=39 // pred_check
            _
          $region42: #{tpu_custom_call.1} parent=39 // pred_check_branch
            %264 = sbr.rel (0) target = $region44
          $region43: #{tpu_custom_call.1} parent=39 // pred_region
            // Predicated region
            $region45: #{tpu_custom_call.1} parent=43 // pred_check
              _
            $region46: #{tpu_custom_call.1} parent=43 // pred_check_branch
              %266 = sbr.rel (0) target = $region48
            $region47: #{tpu_custom_call.1} parent=43 // pred_region
              // Predicated region
              $region60: #{tpu_custom_call.1} parent=47 // pred_check
                _
              $region61: #{tpu_custom_call.1} parent=47 // pred_check_branch
                %283 = sbr.rel (0) target = $region63
              $region62: #{tpu_custom_call.1} parent=47 // pred_region
                loop: start=0, step=1, limit=1
                $region64: #{tpu_custom_call.1} parent=62 // loop_pre_header
                  _
                $region65: #{tpu_custom_call.1} parent=62 // loop_header
                  %s285 = sphi 0, %s289
                  %p286 = scmp.ge.s32.totalorder %s285, 1
                  %s290 = sphi %s262, %s262
                  %s291 = sphi %s257, %s257
                $region66: #{tpu_custom_call.1} parent=62 // loop_header_branch
                  %288 = sbr.rel (%p286) target = $region70
                $region67: #{tpu_custom_call.1} parent=62 // loop_body
                  %v292 = vld [vmem:[%s290] sm:$0xff]
                  %293 = vst [vmem:[%s291] sm:$0xff] %v292
                  %v294 = vld [vmem:[%s290 + $0x10] sm:$0xff]
                  %295 = vst [vmem:[%s291 + $0x8] sm:$0xff] %v294
                $region68: #{tpu_custom_call.1} parent=62 // loop_footer
                  %s289 = sadd.s32 1, %s285
                $region69: #{tpu_custom_call.1} parent=62 // loop_footer_branch
                  %284 = sbr.rel target = $region65
                $region70: #{tpu_custom_call.1} parent=62 // loop_exit
                  _
              $region63: #{tpu_custom_call.1} parent=47 // pred_fallthru
                _
              // Predicated region
              $region71: #{tpu_custom_call.1} parent=47 // pred_check
                _
              $region72: #{tpu_custom_call.1} parent=47 // pred_check_branch
                %297 = sbr.rel target = $region74
              $region73: #{tpu_custom_call.1} parent=47 // pred_region
                _
              $region74: #{tpu_custom_call.1} parent=47 // pred_fallthru
                _
            $region48: #{tpu_custom_call.1} parent=43 // pred_fallthru
              _
            // Predicated region
            $region49: #{tpu_custom_call.1} parent=43 // pred_check
              _
            $region50: #{tpu_custom_call.1} parent=43 // pred_check_branch
              %268 = sbr.rel target = $region52
            $region51: #{tpu_custom_call.1} parent=43 // pred_region
              loop: start=0, step=1, limit=1
              $region53: #{tpu_custom_call.1} parent=51 // loop_pre_header
                _
              $region54: #{tpu_custom_call.1} parent=51 // loop_header
                %s271 = sphi 0, %s275
                %p272 = scmp.ge.s32.totalorder %s271, 1
                %s276 = sphi %s262, %s262
                %s277 = sphi %s257, %s257
              $region55: #{tpu_custom_call.1} parent=51 // loop_header_branch
                %274 = sbr.rel (%p272) target = $region59
              $region56: #{tpu_custom_call.1} parent=51 // loop_body
                %v278 = vld [vmem:[%s276] sm:$0xff]
                %279 = vst [vmem:[%s277] sm:$0xff] %v278
                %v280 = vld [vmem:[%s276 + $0x10] sm:$0xff]
                %281 = vst [vmem:[%s277 + $0x8] sm:$0xff] %v280
              $region57: #{tpu_custom_call.1} parent=51 // loop_footer
                %s275 = sadd.s32 1, %s271
              $region58: #{tpu_custom_call.1} parent=51 // loop_footer_branch
                %270 = sbr.rel target = $region54
              $region59: #{tpu_custom_call.1} parent=51 // loop_exit
                _
            $region52: #{tpu_custom_call.1} parent=43 // pred_fallthru
              _
          $region44: #{tpu_custom_call.1} parent=39 // pred_fallthru
            _
          %298 = vnop
        $region40: #{tpu_custom_call.1} parent=35 // pred_fallthru
          _
        // Predicated region
        $region75: #{tpu_custom_call.1} parent=35 // pred_check
          %p299 = pneg %p78
        $region76: #{tpu_custom_call.1} parent=35 // pred_check_branch
          %301 = sbr.rel (%p299) target = $region78
        $region77: #{tpu_custom_call.1} parent=35 // pred_region
          %s302 = sand.u32 %s68, 1
          %s303 = sand.u32 %s68, 1
          %s304 = smul.addr %s303, 8
          %s305 = scalar_lea.vmem [#allocation3], %s304
          %s306 = smul.u32 2, %s23
          %s307 = smul.addr %s306, 2
          %s308 = sadd.s32 %s24, %s307
          %s309 = smul.addr %s308, 4
          %s310 = scalar_lea.vmem %s1, %s309
          // Predicated region
          $region79: #{tpu_custom_call.1} parent=77 // pred_check
            _
          $region80: #{tpu_custom_call.1} parent=77 // pred_check_branch
            %312 = sbr.rel (0) target = $region82
          $region81: #{tpu_custom_call.1} parent=77 // pred_region
            // Predicated region
            $region83: #{tpu_custom_call.1} parent=81 // pred_check
              _
            $region84: #{tpu_custom_call.1} parent=81 // pred_check_branch
              %314 = sbr.rel target = $region86
            $region85: #{tpu_custom_call.1} parent=81 // pred_region
              // Predicated region
              $region98: #{tpu_custom_call.1} parent=85 // pred_check
                _
              $region99: #{tpu_custom_call.1} parent=85 // pred_check_branch
                %331 = sbr.rel (0) target = $region101
              $region100: #{tpu_custom_call.1} parent=85 // pred_region
                loop: start=0, step=1, limit=1
                $region102: #{tpu_custom_call.1} parent=100 // loop_pre_header
                  _
                $region103: #{tpu_custom_call.1} parent=100 // loop_header
                  %s333 = sphi 0, %s337
                  %p334 = scmp.ge.s32.totalorder %s333, 1
                  %s338 = sphi %s310, %s310
                  %s339 = sphi %s305, %s305
                $region104: #{tpu_custom_call.1} parent=100 // loop_header_branch
                  %336 = sbr.rel (%p334) target = $region108
                $region105: #{tpu_custom_call.1} parent=100 // loop_body
                  _
                $region106: #{tpu_custom_call.1} parent=100 // loop_footer
                  %s337 = sadd.s32 1, %s333
                $region107: #{tpu_custom_call.1} parent=100 // loop_footer_branch
                  %332 = sbr.rel target = $region103
                $region108: #{tpu_custom_call.1} parent=100 // loop_exit
                  _
                loop: start=0, step=1, limit=1
                $region109: #{tpu_custom_call.1} parent=100 // loop_pre_header
                  _
                $region110: #{tpu_custom_call.1} parent=100 // loop_header
                  %s342 = sphi 0, %s346
                  %p343 = scmp.ge.s32.totalorder %s342, 1
                  %s347 = sphi %s310, %s310
                  %s348 = sphi %s305, %s305
                $region111: #{tpu_custom_call.1} parent=100 // loop_header_branch
                  %345 = sbr.rel (%p343) target = $region115
                $region112: #{tpu_custom_call.1} parent=100 // loop_body
                  %v349 = vld [vmem:[%s347] sm:$0xf]
                  %350 = vst [vmem:[%s348] sm:$0xf] %v349
                  %v351 = vld [vmem:[%s347 + $0x8] sm:$0xf]
                  %352 = vst [vmem:[%s348 + $0x4] sm:$0xf] %v351
                $region113: #{tpu_custom_call.1} parent=100 // loop_footer
                  %s346 = sadd.s32 1, %s342
                $region114: #{tpu_custom_call.1} parent=100 // loop_footer_branch
                  %341 = sbr.rel target = $region110
                $region115: #{tpu_custom_call.1} parent=100 // loop_exit
                  _
              $region101: #{tpu_custom_call.1} parent=85 // pred_fallthru
                _
            $region86: #{tpu_custom_call.1} parent=81 // pred_fallthru
              _
            // Predicated region
            $region87: #{tpu_custom_call.1} parent=81 // pred_check
              _
            $region88: #{tpu_custom_call.1} parent=81 // pred_check_branch
              %316 = sbr.rel (0) target = $region90
            $region89: #{tpu_custom_call.1} parent=81 // pred_region
              loop: start=0, step=1, limit=1
              $region91: #{tpu_custom_call.1} parent=89 // loop_pre_header
                _
              $region92: #{tpu_custom_call.1} parent=89 // loop_header
                %s319 = sphi 0, %s323
                %p320 = scmp.ge.s32.totalorder %s319, 1
                %s324 = sphi %s310, %s310
                %s325 = sphi %s305, %s305
              $region93: #{tpu_custom_call.1} parent=89 // loop_header_branch
                %322 = sbr.rel (%p320) target = $region97
              $region94: #{tpu_custom_call.1} parent=89 // loop_body
                %v326 = vld [vmem:[%s324] sm:$0xf]
                %327 = vst [vmem:[%s325] sm:$0xf] %v326
                %v328 = vld [vmem:[%s324 + $0x8] sm:$0xf]
                %329 = vst [vmem:[%s325 + $0x4] sm:$0xf] %v328
              $region95: #{tpu_custom_call.1} parent=89 // loop_footer
                %s323 = sadd.s32 1, %s319
              $region96: #{tpu_custom_call.1} parent=89 // loop_footer_branch
                %318 = sbr.rel target = $region92
              $region97: #{tpu_custom_call.1} parent=89 // loop_exit
                _
            $region90: #{tpu_custom_call.1} parent=81 // pred_fallthru
              _
          $region82: #{tpu_custom_call.1} parent=77 // pred_fallthru
            _
          %353 = vnop
        $region78: #{tpu_custom_call.1} parent=35 // pred_fallthru
          _
      $region36: #{tpu_custom_call.1} parent=5 // pred_fallthru
        _
      %p354 = scmp.le.s32.totalorder 1, %s16
      %p355 = scmp.lt.s32.totalorder %s16, 3
      %p356 = pnand %p354, %p355
      %p357 = pneg %p356
      // Predicated region
      $region116: #{tpu_custom_call.1} parent=5 // pred_check
        _
      $region117: #{tpu_custom_call.1} parent=5 // pred_check_branch
        %359 = sbr.rel (%p356) target = $region119
      $region118: #{tpu_custom_call.1} parent=5 // pred_region
        %s360 = ssub.s32 %s16, 1
        %s361 = sand.u32 %s43, 1
        %s362 = sand.u32 %s43, 1
        %s363 = smul.addr %s362, 16
        %s364 = scalar_lea.vmem [#allocation2], %s363
        // Predicated region
        $region120: #{tpu_custom_call.1} parent=118 // pred_check
          %p365 = pneg %p56
        $region121: #{tpu_custom_call.1} parent=118 // pred_check_branch
          %367 = sbr.rel (%p365) target = $region123
        $region122: #{tpu_custom_call.1} parent=118 // pred_region
          _
        $region123: #{tpu_custom_call.1} parent=118 // pred_fallthru
          _
        %s368 = sand.u32 %s71, 1
        %s369 = sand.u32 %s71, 1
        %s370 = smul.addr %s369, 8
        %s371 = scalar_lea.vmem [#allocation3], %s370
        // Predicated region
        $region124: #{tpu_custom_call.1} parent=118 // pred_check
          %p372 = pneg %p84
        $region125: #{tpu_custom_call.1} parent=118 // pred_check_branch
          %374 = sbr.rel (%p372) target = $region127
        $region126: #{tpu_custom_call.1} parent=118 // pred_region
          _
        $region127: #{tpu_custom_call.1} parent=118 // pred_fallthru
          _
        %s375 = sand.u32 %s43, 1
        %s376 = sand.u32 %s43, 1
        %s377 = smul.addr %s376, 16
        %s378 = scalar_lea.vmem [#allocation2], %s377
        %p379 = pneg %p56
        %p380 = pneg %p53
        %s381 = sand.u32 %s71, 1
        %s382 = sand.u32 %s71, 1
        %s383 = smul.addr %s382, 8
        %s384 = scalar_lea.vmem [#allocation3], %s383
        %p385 = pneg %p84
        %p386 = pneg %p81
        %p387 = pneg %p105
        %p388 = pneg %p102
        %p389 = pneg %p126
        %p390 = pneg %p123
        %p391 = pneg %p147
        %p392 = pneg %p144
        %p393 = pneg %p168
        %p394 = pneg %p165
        %p395 = pneg %p189
        %p396 = pneg %p186
        %p397 = pneg %p217
        %p398 = pneg %p214
        %s399 = sand.u32 %s204, 1
        %s400 = scalar_lea.sflag [#allocation5], %s399
        %s401 = sand.u32 %s204, 1
        %s402 = smul.addr %s401, 64
        %s403 = scalar_lea.vmem [#allocation4], %s402
        %s404 = smul.u32 2, %s25
        %s405 = smul.u32 2, %s25
        %s406 = smul.u32 2, %s25
        %v407 = vld [vmem:[%s2] sm:$0xff]
        %v408 = vld [vmem:[%s2 + $0x8] sm:$0xff]
        %v409 = vld [vmem:[%s2 + $0x10] sm:$0xff]
        %v410 = vld [vmem:[%s2 + $0x18] sm:$0xff]
        %v411 = vld [vmem:[%s2 + $0x20] sm:$0xff]
        %v412 = vld [vmem:[%s2 + $0x28] sm:$0xff]
        %v413 = vld [vmem:[%s2 + $0x30] sm:$0xff]
        %v414 = vld [vmem:[%s2 + $0x38] sm:$0xff]
        %v415 = vld [vmem:[%s364] sm:$0x3f]
        %v416 = vld [vmem:[%s3] sm:$0xff]
        %v417 = vld [vmem:[%s3 + $0x8] sm:$0xff]
        %v418 = vld [vmem:[%s3 + $0x10] sm:$0xff]
        %v419 = vld [vmem:[%s3 + $0x18] sm:$0xff]
        %v420 = vld [vmem:[%s3 + $0x20] sm:$0xff]
        %v421 = vld [vmem:[%s3 + $0x28] sm:$0xff]
        %v422 = vld [vmem:[%s3 + $0x30] sm:$0xff]
        %v423 = vld [vmem:[%s3 + $0x38] sm:$0xff]
        %v424 = vld [vmem:[%s371] sm:$0xf]
        %vm425 = vcmask 31744
        %v427 = vsel %vm425, %v416, 0
        %v430 = vsel %vm425, %v417, 0
        %v433 = vsel %vm425, %v418, 0
        %v436 = vsel %vm425, %v419, 0
        %v439 = vsel %vm425, %v420, 0
        %v442 = vsel %vm425, %v421, 0
        %v445 = vsel %vm425, %v422, 0
        %v448 = vsel %vm425, %v423, 0
        %vm450 = vcmask 1043456
        %v452 = vsel %vm450, %v424, 0
        %454 = vmatprep.subr.mxu0 0.0
        %455 = vmatpush1.msra.mxu0 %v452
        %456 = vmatprep.subr.mxu0 0.0
        %457 = vmatpush1.msra.mxu0 0.0
        %458 = vmatprep.subr.mxu0 0.0
        %459 = vmatpush1.msra.mxu0 0.0
        %460 = vmatprep.subr.mxu0 0.0
        %461 = vmatpush1.msra.mxu0 0.0
        %462 = vmatprep.subr.mxu0 0.0
        %463 = vmatpush1.msra.mxu0 0.0
        %464 = vmatprep.subr.mxu0 0.0
        %465 = vmatpush1.msra.mxu0 0.0
        %466 = vmatprep.subr.mxu0 0.0
        %467 = vmatpush1.msra.mxu0 0.0
        %468 = vmatprep.subr.mxu0 0.0
        %469 = vmatpush1.msra.mxu0 0.0
        %470 = vmatprep.subr.mxu0 0.0
        %471 = vmatpush1.msra.mxu0 0.0
        %472 = vmatprep.subr.mxu0 0.0
        %473 = vmatpush1.msra.mxu0 0.0
        %474 = vmatprep.subr.mxu0 0.0
        %475 = vmatpush1.msra.mxu0 0.0
        %476 = vmatprep.subr.mxu0 0.0
        %477 = vmatpush1.msra.mxu0 0.0
        %478 = vmatprep.subr.mxu0 0.0
        %479 = vmatpush1.msra.mxu0 0.0
        %480 = vmatprep.subr.mxu0 0.0
        %481 = vmatpush1.msra.mxu0 0.0
        %482 = vmatprep.subr.mxu0 0.0
        %483 = vmatpush1.msra.mxu0 0.0
        %484 = vmatprep.subr.mxu0 0.0
        %485 = vmatpush1.msra.mxu0 0.0
        %486 = vmatprep.subr.mxu0 0.0
        %487 = vmatpush1.msra.mxu0 0.0
        %488 = vmatprep.subr.mxu0 0.0
        %489 = vmatpush1.msra.mxu0 0.0
        %490 = vmatprep.subr.mxu0 0.0
        %491 = vmatpush1.msra.mxu0 0.0
        %492 = vmatprep.subr.mxu0 0.0
        %493 = vmatpush1.msra.mxu0 0.0
        %494 = vmatprep.subr.mxu0 0.0
        %495 = vmatpush1.msra.mxu0 0.0
        %496 = vmatprep.subr.mxu0 0.0
        %497 = vmatpush1.msra.mxu0 0.0
        %498 = vmatprep.subr.mxu0 0.0
        %499 = vmatpush1.msra.mxu0 0.0
        %500 = vmatprep.subr.mxu0 0.0
        %501 = vmatpush1.msra.mxu0 0.0
        %502 = vmatprep.subr.mxu0 0.0
        %503 = vmatpush1.msra.mxu0 0.0
        %504 = vmatprep.subr.mxu0 0.0
        %505 = vmatpush1.msra.mxu0 0.0
        %506 = vmatprep.subr.mxu0 0.0
        %507 = vmatpush1.msra.mxu0 0.0
        %508 = vmatprep.subr.mxu0 0.0
        %509 = vmatpush1.msra.mxu0 0.0
        %510 = vmatprep.subr.mxu0 0.0
        %511 = vmatpush1.msra.mxu0 0.0
        %512 = vmatprep.subr.mxu0 0.0
        %513 = vmatpush1.msra.mxu0 0.0
        %514 = vmatprep.subr.mxu0 0.0
        %515 = vmatpush1.msra.mxu0 0.0
        %516 = vmatprep.subr.mxu0 0.0
        %517 = vmatpush1.msra.mxu0 0.0
        %518 = vmatprep.mubr.f32.mxu0 0.0
        %519 = vmatmul.mubr.f32.gmra.mrb[0].mxu0 %v427
        %v520 = vpop.f32.mrb[0].mxu0
        %v521 = vadd.f32 0.0, %v520
        %v522 = vpop.f32.mrb[0].mxu0
        %523 = vmatprep.mubr.f32.mxu0 0.0
        %524 = vmatmul.mubr.f32.gmra.mrb[0].mxu0 %v430
        %v525 = vpop.f32.mrb[0].mxu0
        %v526 = vadd.f32 0.0, %v525
        %v527 = vpop.f32.mrb[0].mxu0
        %528 = vmatprep.mubr.f32.mxu0 0.0
        %529 = vmatmul.mubr.f32.gmra.mrb[0].mxu0 %v433
        %v530 = vpop.f32.mrb[0].mxu0
        %v531 = vadd.f32 0.0, %v530
        %v532 = vpop.f32.mrb[0].mxu0
        %533 = vmatprep.mubr.f32.mxu0 0.0
        %534 = vmatmul.mubr.f32.gmra.mrb[0].mxu0 %v436
        %v535 = vpop.f32.mrb[0].mxu0
        %v536 = vadd.f32 0.0, %v535
        %v537 = vpop.f32.mrb[0].mxu0
        %538 = vmatprep.mubr.f32.mxu0 0.0
        %539 = vmatmul.mubr.f32.gmra.mrb[0].mxu0 %v439
        %v540 = vpop.f32.mrb[0].mxu0
        %v541 = vadd.f32 0.0, %v540
        %v542 = vpop.f32.mrb[0].mxu0
        %543 = vmatprep.mubr.f32.mxu0 0.0
        %544 = vmatmul.mubr.f32.gmra.mrb[0].mxu0 %v442
        %v545 = vpop.f32.mrb[0].mxu0
        %v546 = vadd.f32 0.0, %v545
        %v547 = vpop.f32.mrb[0].mxu0
        %548 = vmatprep.mubr.f32.mxu0 0.0
        %549 = vmatmul.mubr.f32.gmra.mrb[0].mxu0 %v445
        %v550 = vpop.f32.mrb[0].mxu0
        %v551 = vadd.f32 0.0, %v550
        %v552 = vpop.f32.mrb[0].mxu0
        %553 = vmatprep.mubr.f32.mxu0 0.0
        %554 = vmatmul.mubr.f32.gmra.mrb[0].mxu0 %v448
        %v555 = vpop.f32.mrb[0].mxu0
        %v556 = vadd.f32 0.0, %v555
        %v557 = vpop.f32.mrb[0].mxu0
        %558 = vdwg.mxu0
        %vm559 = vcmask 48128
        %v561 = vsel %vm559, %v407, 0
        %v564 = vsel %vm559, %v408, 0
        %v567 = vsel %vm559, %v409, 0
        %v570 = vsel %vm559, %v410, 0
        %v573 = vsel %vm559, %v411, 0
        %v576 = vsel %vm559, %v412, 0
        %v579 = vsel %vm559, %v413, 0
        %v582 = vsel %vm559, %v414, 0
        %vm584 = vcmask 1045504
        %v586 = vsel %vm584, %v415, 0
        %588 = vmatprep.subr.mxu0 0.0
        %589 = vmatpush1.msra.mxu0 %v586
        %590 = vmatprep.subr.mxu0 0.0
        %591 = vmatpush1.msra.mxu0 0.0
        %592 = vmatprep.subr.mxu0 0.0
        %593 = vmatpush1.msra.mxu0 0.0
        %594 = vmatprep.subr.mxu0 0.0
        %595 = vmatpush1.msra.mxu0 0.0
        %596 = vmatprep.subr.mxu0 0.0
        %597 = vmatpush1.msra.mxu0 0.0
        %598 = vmatprep.subr.mxu0 0.0
        %599 = vmatpush1.msra.mxu0 0.0
        %600 = vmatprep.subr.mxu0 0.0
        %601 = vmatpush1.msra.mxu0 0.0
        %602 = vmatprep.subr.mxu0 0.0
        %603 = vmatpush1.msra.mxu0 0.0
        %604 = vmatprep.subr.mxu0 0.0
        %605 = vmatpush1.msra.mxu0 0.0
        %606 = vmatprep.subr.mxu0 0.0
        %607 = vmatpush1.msra.mxu0 0.0
        %608 = vmatprep.subr.mxu0 0.0
        %609 = vmatpush1.msra.mxu0 0.0
        %610 = vmatprep.subr.mxu0 0.0
        %611 = vmatpush1.msra.mxu0 0.0
        %612 = vmatprep.subr.mxu0 0.0
        %613 = vmatpush1.msra.mxu0 0.0
        %614 = vmatprep.subr.mxu0 0.0
        %615 = vmatpush1.msra.mxu0 0.0
        %616 = vmatprep.subr.mxu0 0.0
        %617 = vmatpush1.msra.mxu0 0.0
        %618 = vmatprep.subr.mxu0 0.0
        %619 = vmatpush1.msra.mxu0 0.0
        %620 = vmatprep.subr.mxu0 0.0
        %621 = vmatpush1.msra.mxu0 0.0
        %622 = vmatprep.subr.mxu0 0.0
        %623 = vmatpush1.msra.mxu0 0.0
        %624 = vmatprep.subr.mxu0 0.0
        %625 = vmatpush1.msra.mxu0 0.0
        %626 = vmatprep.subr.mxu0 0.0
        %627 = vmatpush1.msra.mxu0 0.0
        %628 = vmatprep.subr.mxu0 0.0
        %629 = vmatpush1.msra.mxu0 0.0
        %630 = vmatprep.subr.mxu0 0.0
        %631 = vmatpush1.msra.mxu0 0.0
        %632 = vmatprep.subr.mxu0 0.0
        %633 = vmatpush1.msra.mxu0 0.0
        %634 = vmatprep.subr.mxu0 0.0
        %635 = vmatpush1.msra.mxu0 0.0
        %636 = vmatprep.subr.mxu0 0.0
        %637 = vmatpush1.msra.mxu0 0.0
        %638 = vmatprep.subr.mxu0 0.0
        %639 = vmatpush1.msra.mxu0 0.0
        %640 = vmatprep.subr.mxu0 0.0
        %641 = vmatpush1.msra.mxu0 0.0
        %642 = vmatprep.subr.mxu0 0.0
        %643 = vmatpush1.msra.mxu0 0.0
        %644 = vmatprep.subr.mxu0 0.0
        %645 = vmatpush1.msra.mxu0 0.0
        %646 = vmatprep.subr.mxu0 0.0
        %647 = vmatpush1.msra.mxu0 0.0
        %648 = vmatprep.subr.mxu0 0.0
        %649 = vmatpush1.msra.mxu0 0.0
        %650 = vmatprep.subr.mxu0 0.0
        %651 = vmatpush1.msra.mxu0 0.0
        %652 = vmatprep.mubr.f32.mxu0 0.0
        %653 = vmatmul.mubr.f32.gmra.mrb[0].mxu0 %v561
        %v654 = vpop.f32.mrb[0].mxu0
        %v655 = vadd.f32 %v521, %v654
        %v656 = vpop.f32.mrb[0].mxu0
        %657 = vmatprep.mubr.f32.mxu0 0.0
        %658 = vmatmul.mubr.f32.gmra.mrb[0].mxu0 %v564
        %v659 = vpop.f32.mrb[0].mxu0
        %v660 = vadd.f32 %v526, %v659
        %v661 = vpop.f32.mrb[0].mxu0
        %662 = vmatprep.mubr.f32.mxu0 0.0
        %663 = vmatmul.mubr.f32.gmra.mrb[0].mxu0 %v567
        %v664 = vpop.f32.mrb[0].mxu0
        %v665 = vadd.f32 %v531, %v664
        %v666 = vpop.f32.mrb[0].mxu0
        %667 = vmatprep.mubr.f32.mxu0 0.0
        %668 = vmatmul.mubr.f32.gmra.mrb[0].mxu0 %v570
        %v669 = vpop.f32.mrb[0].mxu0
        %v670 = vadd.f32 %v536, %v669
        %v671 = vpop.f32.mrb[0].mxu0
        %672 = vmatprep.mubr.f32.mxu0 0.0
        %673 = vmatmul.mubr.f32.gmra.mrb[0].mxu0 %v573
        %v674 = vpop.f32.mrb[0].mxu0
        %v675 = vadd.f32 %v541, %v674
        %v676 = vpop.f32.mrb[0].mxu0
        %677 = vmatprep.mubr.f32.mxu0 0.0
        %678 = vmatmul.mubr.f32.gmra.mrb[0].mxu0 %v576
        %v679 = vpop.f32.mrb[0].mxu0
        %v680 = vadd.f32 %v546, %v679
        %v681 = vpop.f32.mrb[0].mxu0
        %682 = vmatprep.mubr.f32.mxu0 0.0
        %683 = vmatmul.mubr.f32.gmra.mrb[0].mxu0 %v579
        %v684 = vpop.f32.mrb[0].mxu0
        %v685 = vadd.f32 %v551, %v684
        %v686 = vpop.f32.mrb[0].mxu0
        %687 = vmatprep.mubr.f32.mxu0 0.0
        %688 = vmatmul.mubr.f32.gmra.mrb[0].mxu0 %v582
        %v689 = vpop.f32.mrb[0].mxu0
        %v690 = vadd.f32 %v556, %v689
        %v691 = vpop.f32.mrb[0].mxu0
        %692 = vdwg.mxu0
        %v693 = vld [vmem:[%s4] sm:$0xff]
        %v694 = vld [vmem:[%s4 + $0x8] sm:$0xff]
        %v695 = vld [vmem:[%s4 + $0x10] sm:$0xff]
        %v696 = vld [vmem:[%s4 + $0x18] sm:$0xff]
        %v697 = vld [vmem:[%s4 + $0x20] sm:$0xff]
        %v698 = vld [vmem:[%s4 + $0x28] sm:$0xff]
        %v699 = vld [vmem:[%s4 + $0x30] sm:$0xff]
        %v700 = vld [vmem:[%s4 + $0x38] sm:$0xff]
        %702 = vset.pattern.permute.xlu0 0
        %703 = vperm.xlu0 %702, %v693
        %v704 = vpop.permute.xlu0 %703
        %707 = vset.pattern.permute.xlu0 0
        %708 = vperm.xlu0 %707, %v694
        %v709 = vpop.permute.xlu0 %708
        %712 = vset.pattern.permute.xlu0 0
        %713 = vperm.xlu0 %712, %v695
        %v714 = vpop.permute.xlu0 %713
        %717 = vset.pattern.permute.xlu0 0
        %718 = vperm.xlu0 %717, %v696
        %v719 = vpop.permute.xlu0 %718
        %722 = vset.pattern.permute.xlu0 0
        %723 = vperm.xlu0 %722, %v697
        %v724 = vpop.permute.xlu0 %723
        %727 = vset.pattern.permute.xlu0 0
        %728 = vperm.xlu0 %727, %v698
        %v729 = vpop.permute.xlu0 %728
        %732 = vset.pattern.permute.xlu0 0
        %733 = vperm.xlu0 %732, %v699
        %v734 = vpop.permute.xlu0 %733
        %737 = vset.pattern.permute.xlu0 0
        %738 = vperm.xlu0 %737, %v700
        %v739 = vpop.permute.xlu0 %738
        %v741 = vadd.f32 %v655, %v704
        %v742 = vadd.f32 %v660, %v709
        %v743 = vadd.f32 %v665, %v714
        %v744 = vadd.f32 %v670, %v719
        %v745 = vadd.f32 %v675, %v724
        %v746 = vadd.f32 %v680, %v729
        %v747 = vadd.f32 %v685, %v734
        %v748 = vadd.f32 %v690, %v739
        %v749 = vmax.f32 %v741, 0.0
        %v750 = vmax.f32 %v742, 0.0
        %v751 = vmax.f32 %v743, 0.0
        %v752 = vmax.f32 %v744, 0.0
        %v753 = vmax.f32 %v745, 0.0
        %v754 = vmax.f32 %v746, 0.0
        %v755 = vmax.f32 %v747, 0.0
        %v756 = vmax.f32 %v748, 0.0
        %v757 = vld [vmem:[%s5] sm:$0xff]
        %v758 = vld [vmem:[%s5 + $0x8] sm:$0xff]
        %v759 = vld [vmem:[%s5 + $0x10] sm:$0xff]
        %v760 = vld [vmem:[%s5 + $0x18] sm:$0xff]
        %v761 = vld [vmem:[%s6] sm:$0xff]
        %v762 = vld [vmem:[%s6 + $0x8] sm:$0xff]
        %v763 = vld [vmem:[%s6 + $0x10] sm:$0xff]
        %v764 = vld [vmem:[%s6 + $0x18] sm:$0xff]
        %766 = vset.pattern.permute.xlu0 0
        %767 = vperm.xlu0 %766, %v761
        %v768 = vpop.permute.xlu0 %767
        %771 = vset.pattern.permute.xlu0 0
        %772 = vperm.xlu0 %771, %v762
        %v773 = vpop.permute.xlu0 %772
        %776 = vset.pattern.permute.xlu0 0
        %777 = vperm.xlu0 %776, %v763
        %v778 = vpop.permute.xlu0 %777
        %781 = vset.pattern.permute.xlu0 0
        %782 = vperm.xlu0 %781, %v764
        %v783 = vpop.permute.xlu0 %782
        %vm785 = vcmask 523264
        %v787 = vsel %vm785, %v757, 0
        %v790 = vsel %vm785, %v758, 0
        %v793 = vsel %vm785, %v759, 0
        %v796 = vsel %vm785, %v760, 0
        %798 = vmatprep.subr.mxu0 0.0
        %799 = vmatpush1.msra.mxu0 %v749
        %800 = vmatprep.subr.mxu0 0.0
        %801 = vmatpush1.msra.mxu0 %v750
        %802 = vmatprep.subr.mxu0 0.0
        %803 = vmatpush1.msra.mxu0 %v751
        %804 = vmatprep.subr.mxu0 0.0
        %805 = vmatpush1.msra.mxu0 %v752
        %806 = vmatprep.subr.mxu0 0.0
        %807 = vmatpush1.msra.mxu0 %v753
        %808 = vmatprep.subr.mxu0 0.0
        %809 = vmatpush1.msra.mxu0 %v754
        %810 = vmatprep.subr.mxu0 0.0
        %811 = vmatpush1.msra.mxu0 %v755
        %812 = vmatprep.subr.mxu0 0.0
        %813 = vmatpush1.msra.mxu0 %v756
        %814 = vmatprep.subr.mxu0 0.0
        %815 = vmatpush1.msra.mxu0 0.0
        %816 = vmatprep.subr.mxu0 0.0
        %817 = vmatpush1.msra.mxu0 0.0
        %818 = vmatprep.subr.mxu0 0.0
        %819 = vmatpush1.msra.mxu0 0.0
        %820 = vmatprep.subr.mxu0 0.0
        %821 = vmatpush1.msra.mxu0 0.0
        %822 = vmatprep.subr.mxu0 0.0
        %823 = vmatpush1.msra.mxu0 0.0
        %824 = vmatprep.subr.mxu0 0.0
        %825 = vmatpush1.msra.mxu0 0.0
        %826 = vmatprep.subr.mxu0 0.0
        %827 = vmatpush1.msra.mxu0 0.0
        %828 = vmatprep.subr.mxu0 0.0
        %829 = vmatpush1.msra.mxu0 0.0
        %830 = vmatprep.subr.mxu0 0.0
        %831 = vmatpush1.msra.mxu0 0.0
        %832 = vmatprep.subr.mxu0 0.0
        %833 = vmatpush1.msra.mxu0 0.0
        %834 = vmatprep.subr.mxu0 0.0
        %835 = vmatpush1.msra.mxu0 0.0
        %836 = vmatprep.subr.mxu0 0.0
        %837 = vmatpush1.msra.mxu0 0.0
        %838 = vmatprep.subr.mxu0 0.0
        %839 = vmatpush1.msra.mxu0 0.0
        %840 = vmatprep.subr.mxu0 0.0
        %841 = vmatpush1.msra.mxu0 0.0
        %842 = vmatprep.subr.mxu0 0.0
        %843 = vmatpush1.msra.mxu0 0.0
        %844 = vmatprep.subr.mxu0 0.0
        %845 = vmatpush1.msra.mxu0 0.0
        %846 = vmatprep.subr.mxu0 0.0
        %847 = vmatpush1.msra.mxu0 0.0
        %848 = vmatprep.subr.mxu0 0.0
        %849 = vmatpush1.msra.mxu0 0.0
        %850 = vmatprep.subr.mxu0 0.0
        %851 = vmatpush1.msra.mxu0 0.0
        %852 = vmatprep.subr.mxu0 0.0
        %853 = vmatpush1.msra.mxu0 0.0
        %854 = vmatprep.subr.mxu0 0.0
        %855 = vmatpush1.msra.mxu0 0.0
        %856 = vmatprep.subr.mxu0 0.0
        %857 = vmatpush1.msra.mxu0 0.0
        %858 = vmatprep.subr.mxu0 0.0
        %859 = vmatpush1.msra.mxu0 0.0
        %860 = vmatprep.subr.mxu0 0.0
        %861 = vmatpush1.msra.mxu0 0.0
        %862 = vmatprep.mubr.f32.mxu0 0.0
        %863 = vmatmul.mubr.f32.gmra.mrb[0].mxu0 %v787
        %v864 = vpop.f32.mrb[0].mxu0
        %v865 = vadd.f32 %v768, %v864
        %v866 = vpop.f32.mrb[0].mxu0
        %867 = vmatprep.mubr.f32.mxu0 0.0
        %868 = vmatmul.mubr.f32.gmra.mrb[0].mxu0 %v790
        %v869 = vpop.f32.mrb[0].mxu0
        %v870 = vadd.f32 %v773, %v869
        %v871 = vpop.f32.mrb[0].mxu0
        %872 = vmatprep.mubr.f32.mxu0 0.0
        %873 = vmatmul.mubr.f32.gmra.mrb[0].mxu0 %v793
        %v874 = vpop.f32.mrb[0].mxu0
        %v875 = vadd.f32 %v778, %v874
        %v876 = vpop.f32.mrb[0].mxu0
        %877 = vmatprep.mubr.f32.mxu0 0.0
        %878 = vmatmul.mubr.f32.gmra.mrb[0].mxu0 %v796
        %v879 = vpop.f32.mrb[0].mxu0
        %v880 = vadd.f32 %v783, %v879
        %v881 = vpop.f32.mrb[0].mxu0
        %882 = vdwg.mxu0
        %v883 = vmax.f32 %v865, 0.0
        %v884 = vmax.f32 %v870, 0.0
        %v885 = vmax.f32 %v875, 0.0
        %v886 = vmax.f32 %v880, 0.0
        %887 = vst [vmem:[%s403] sm:$0xff] %v883
        %888 = vst [vmem:[%s403 + $0x8] sm:$0xff] %v884
        %889 = vst [vmem:[%s403 + $0x10] sm:$0xff] %v885
        %890 = vst [vmem:[%s403 + $0x18] sm:$0xff] %v886
        %v891 = vld [vmem:[%s2] sm:$0xff]
        %v892 = vld [vmem:[%s2 + $0x8] sm:$0xff]
        %v893 = vld [vmem:[%s2 + $0x10] sm:$0xff]
        %v894 = vld [vmem:[%s2 + $0x18] sm:$0xff]
        %v895 = vld [vmem:[%s2 + $0x20] sm:$0xff]
        %v896 = vld [vmem:[%s2 + $0x28] sm:$0xff]
        %v897 = vld [vmem:[%s2 + $0x30] sm:$0xff]
        %v898 = vld [vmem:[%s2 + $0x38] sm:$0xff]
        %s899 = scalar_lea.vmem %s364, 8 [#allocation2]
        %v900 = vld [vmem:[%s899] sm:$0x3f]
        %v901 = vld [vmem:[%s3] sm:$0xff]
        %v902 = vld [vmem:[%s3 + $0x8] sm:$0xff]
        %v903 = vld [vmem:[%s3 + $0x10] sm:$0xff]
        %v904 = vld [vmem:[%s3 + $0x18] sm:$0xff]
        %v905 = vld [vmem:[%s3 + $0x20] sm:$0xff]
        %v906 = vld [vmem:[%s3 + $0x28] sm:$0xff]
        %v907 = vld [vmem:[%s3 + $0x30] sm:$0xff]
        %v908 = vld [vmem:[%s3 + $0x38] sm:$0xff]
        %s909 = scalar_lea.vmem %s371, 4 [#allocation3]
        %v910 = vld [vmem:[%s909] sm:$0xf]
        %v912 = vsel %vm425, %v901, 0
        %v915 = vsel %vm425, %v902, 0
        %v918 = vsel %vm425, %v903, 0
        %v921 = vsel %vm425, %v904, 0
        %v924 = vsel %vm425, %v905, 0
        %v927 = vsel %vm425, %v906, 0
        %v930 = vsel %vm425, %v907, 0
        %v933 = vsel %vm425, %v908, 0
        %v936 = vsel %vm450, %v910, 0
        %938 = vmatprep.subr.mxu0 0.0
        %939 = vmatpush1.msra.mxu0 %v936
        %940 = vmatprep.subr.mxu0 0.0
        %941 = vmatpush1.msra.mxu0 0.0
        %942 = vmatprep.subr.mxu0 0.0
        %943 = vmatpush1.msra.mxu0 0.0
        %944 = vmatprep.subr.mxu0 0.0
        %945 = vmatpush1.msra.mxu0 0.0
        %946 = vmatprep.subr.mxu0 0.0
        %947 = vmatpush1.msra.mxu0 0.0
        %948 = vmatprep.subr.mxu0 0.0
        %949 = vmatpush1.msra.mxu0 0.0
        %950 = vmatprep.subr.mxu0 0.0
        %951 = vmatpush1.msra.mxu0 0.0
        %952 = vmatprep.subr.mxu0 0.0
        %953 = vmatpush1.msra.mxu0 0.0
        %954 = vmatprep.subr.mxu0 0.0
        %955 = vmatpush1.msra.mxu0 0.0
        %956 = vmatprep.subr.mxu0 0.0
        %957 = vmatpush1.msra.mxu0 0.0
        %958 = vmatprep.subr.mxu0 0.0
        %959 = vmatpush1.msra.mxu0 0.0
        %960 = vmatprep.subr.mxu0 0.0
        %961 = vmatpush1.msra.mxu0 0.0
        %962 = vmatprep.subr.mxu0 0.0
        %963 = vmatpush1.msra.mxu0 0.0
        %964 = vmatprep.subr.mxu0 0.0
        %965 = vmatpush1.msra.mxu0 0.0
        %966 = vmatprep.subr.mxu0 0.0
        %967 = vmatpush1.msra.mxu0 0.0
        %968 = vmatprep.subr.mxu0 0.0
        %969 = vmatpush1.msra.mxu0 0.0
        %970 = vmatprep.subr.mxu0 0.0
        %971 = vmatpush1.msra.mxu0 0.0
        %972 = vmatprep.subr.mxu0 0.0
        %973 = vmatpush1.msra.mxu0 0.0
        %974 = vmatprep.subr.mxu0 0.0
        %975 = vmatpush1.msra.mxu0 0.0
        %976 = vmatprep.subr.mxu0 0.0
        %977 = vmatpush1.msra.mxu0 0.0
        %978 = vmatprep.subr.mxu0 0.0
        %979 = vmatpush1.msra.mxu0 0.0
        %980 = vmatprep.subr.mxu0 0.0
        %981 = vmatpush1.msra.mxu0 0.0
        %982 = vmatprep.subr.mxu0 0.0
        %983 = vmatpush1.msra.mxu0 0.0
        %984 = vmatprep.subr.mxu0 0.0
        %985 = vmatpush1.msra.mxu0 0.0
        %986 = vmatprep.subr.mxu0 0.0
        %987 = vmatpush1.msra.mxu0 0.0
        %988 = vmatprep.subr.mxu0 0.0
        %989 = vmatpush1.msra.mxu0 0.0
        %990 = vmatprep.subr.mxu0 0.0
        %991 = vmatpush1.msra.mxu0 0.0
        %992 = vmatprep.subr.mxu0 0.0
        %993 = vmatpush1.msra.mxu0 0.0
        %994 = vmatprep.subr.mxu0 0.0
        %995 = vmatpush1.msra.mxu0 0.0
        %996 = vmatprep.subr.mxu0 0.0
        %997 = vmatpush1.msra.mxu0 0.0
        %998 = vmatprep.subr.mxu0 0.0
        %999 = vmatpush1.msra.mxu0 0.0
        %1000 = vmatprep.subr.mxu0 0.0
        %1001 = vmatpush1.msra.mxu0 0.0
        %1002 = vmatprep.mubr.f32.mxu0 0.0
        %1003 = vmatmul.mubr.f32.gmra.mrb[0].mxu0 %v912
        %v1004 = vpop.f32.mrb[0].mxu0
        %v1005 = vadd.f32 0.0, %v1004
        %v1006 = vpop.f32.mrb[0].mxu0
        %1007 = vmatprep.mubr.f32.mxu0 0.0
        %1008 = vmatmul.mubr.f32.gmra.mrb[0].mxu0 %v915
        %v1009 = vpop.f32.mrb[0].mxu0
        %v1010 = vadd.f32 0.0, %v1009
        %v1011 = vpop.f32.mrb[0].mxu0
        %1012 = vmatprep.mubr.f32.mxu0 0.0
        %1013 = vmatmul.mubr.f32.gmra.mrb[0].mxu0 %v918
        %v1014 = vpop.f32.mrb[0].mxu0
        %v1015 = vadd.f32 0.0, %v1014
        %v1016 = vpop.f32.mrb[0].mxu0
        %1017 = vmatprep.mubr.f32.mxu0 0.0
        %1018 = vmatmul.mubr.f32.gmra.mrb[0].mxu0 %v921
        %v1019 = vpop.f32.mrb[0].mxu0
        %v1020 = vadd.f32 0.0, %v1019
        %v1021 = vpop.f32.mrb[0].mxu0
        %1022 = vmatprep.mubr.f32.mxu0 0.0
        %1023 = vmatmul.mubr.f32.gmra.mrb[0].mxu0 %v924
        %v1024 = vpop.f32.mrb[0].mxu0
        %v1025 = vadd.f32 0.0, %v1024
        %v1026 = vpop.f32.mrb[0].mxu0
        %1027 = vmatprep.mubr.f32.mxu0 0.0
        %1028 = vmatmul.mubr.f32.gmra.mrb[0].mxu0 %v927
        %v1029 = vpop.f32.mrb[0].mxu0
        %v1030 = vadd.f32 0.0, %v1029
        %v1031 = vpop.f32.mrb[0].mxu0
        %1032 = vmatprep.mubr.f32.mxu0 0.0
        %1033 = vmatmul.mubr.f32.gmra.mrb[0].mxu0 %v930
        %v1034 = vpop.f32.mrb[0].mxu0
        %v1035 = vadd.f32 0.0, %v1034
        %v1036 = vpop.f32.mrb[0].mxu0
        %1037 = vmatprep.mubr.f32.mxu0 0.0
        %1038 = vmatmul.mubr.f32.gmra.mrb[0].mxu0 %v933
        %v1039 = vpop.f32.mrb[0].mxu0
        %v1040 = vadd.f32 0.0, %v1039
        %v1041 = vpop.f32.mrb[0].mxu0
        %1042 = vdwg.mxu0
        %v1044 = vsel %vm559, %v891, 0
        %v1047 = vsel %vm559, %v892, 0
        %v1050 = vsel %vm559, %v893, 0
        %v1053 = vsel %vm559, %v894, 0
        %v1056 = vsel %vm559, %v895, 0
        %v1059 = vsel %vm559, %v896, 0
        %v1062 = vsel %vm559, %v897, 0
        %v1065 = vsel %vm559, %v898, 0
        %v1068 = vsel %vm584, %v900, 0
        %1070 = vmatprep.subr.mxu0 0.0
        %1071 = vmatpush1.msra.mxu0 %v1068
        %1072 = vmatprep.subr.mxu0 0.0
        %1073 = vmatpush1.msra.mxu0 0.0
        %1074 = vmatprep.subr.mxu0 0.0
        %1075 = vmatpush1.msra.mxu0 0.0
        %1076 = vmatprep.subr.mxu0 0.0
        %1077 = vmatpush1.msra.mxu0 0.0
        %1078 = vmatprep.subr.mxu0 0.0
        %1079 = vmatpush1.msra.mxu0 0.0
        %1080 = vmatprep.subr.mxu0 0.0
        %1081 = vmatpush1.msra.mxu0 0.0
        %1082 = vmatprep.subr.mxu0 0.0
        %1083 = vmatpush1.msra.mxu0 0.0
        %1084 = vmatprep.subr.mxu0 0.0
        %1085 = vmatpush1.msra.mxu0 0.0
        %1086 = vmatprep.subr.mxu0 0.0
        %1087 = vmatpush1.msra.mxu0 0.0
        %1088 = vmatprep.subr.mxu0 0.0
        %1089 = vmatpush1.msra.mxu0 0.0
        %1090 = vmatprep.subr.mxu0 0.0
        %1091 = vmatpush1.msra.mxu0 0.0
        %1092 = vmatprep.subr.mxu0 0.0
        %1093 = vmatpush1.msra.mxu0 0.0
        %1094 = vmatprep.subr.mxu0 0.0
        %1095 = vmatpush1.msra.mxu0 0.0
        %1096 = vmatprep.subr.mxu0 0.0
        %1097 = vmatpush1.msra.mxu0 0.0
        %1098 = vmatprep.subr.mxu0 0.0
        %1099 = vmatpush1.msra.mxu0 0.0
        %1100 = vmatprep.subr.mxu0 0.0
        %1101 = vmatpush1.msra.mxu0 0.0
        %1102 = vmatprep.subr.mxu0 0.0
        %1103 = vmatpush1.msra.mxu0 0.0
        %1104 = vmatprep.subr.mxu0 0.0
        %1105 = vmatpush1.msra.mxu0 0.0
        %1106 = vmatprep.subr.mxu0 0.0
        %1107 = vmatpush1.msra.mxu0 0.0
        %1108 = vmatprep.subr.mxu0 0.0
        %1109 = vmatpush1.msra.mxu0 0.0
        %1110 = vmatprep.subr.mxu0 0.0
        %1111 = vmatpush1.msra.mxu0 0.0
        %1112 = vmatprep.subr.mxu0 0.0
        %1113 = vmatpush1.msra.mxu0 0.0
        %1114 = vmatprep.subr.mxu0 0.0
        %1115 = vmatpush1.msra.mxu0 0.0
        %1116 = vmatprep.subr.mxu0 0.0
        %1117 = vmatpush1.msra.mxu0 0.0
        %1118 = vmatprep.subr.mxu0 0.0
        %1119 = vmatpush1.msra.mxu0 0.0
        %1120 = vmatprep.subr.mxu0 0.0
        %1121 = vmatpush1.msra.mxu0 0.0
        %1122 = vmatprep.subr.mxu0 0.0
        %1123 = vmatpush1.msra.mxu0 0.0
        %1124 = vmatprep.subr.mxu0 0.0
        %1125 = vmatpush1.msra.mxu0 0.0
        %1126 = vmatprep.subr.mxu0 0.0
        %1127 = vmatpush1.msra.mxu0 0.0
        %1128 = vmatprep.subr.mxu0 0.0
        %1129 = vmatpush1.msra.mxu0 0.0
        %1130 = vmatprep.subr.mxu0 0.0
        %1131 = vmatpush1.msra.mxu0 0.0
        %1132 = vmatprep.subr.mxu0 0.0
        %1133 = vmatpush1.msra.mxu0 0.0
        %1134 = vmatprep.mubr.f32.mxu0 0.0
        %1135 = vmatmul.mubr.f32.gmra.mrb[0].mxu0 %v1044
        %v1136 = vpop.f32.mrb[0].mxu0
        %v1137 = vadd.f32 %v1005, %v1136
        %v1138 = vpop.f32.mrb[0].mxu0
        %1139 = vmatprep.mubr.f32.mxu0 0.0
        %1140 = vmatmul.mubr.f32.gmra.mrb[0].mxu0 %v1047
        %v1141 = vpop.f32.mrb[0].mxu0
        %v1142 = vadd.f32 %v1010, %v1141
        %v1143 = vpop.f32.mrb[0].mxu0
        %1144 = vmatprep.mubr.f32.mxu0 0.0
        %1145 = vmatmul.mubr.f32.gmra.mrb[0].mxu0 %v1050
        %v1146 = vpop.f32.mrb[0].mxu0
        %v1147 = vadd.f32 %v1015, %v1146
        %v1148 = vpop.f32.mrb[0].mxu0
        %1149 = vmatprep.mubr.f32.mxu0 0.0
        %1150 = vmatmul.mubr.f32.gmra.mrb[0].mxu0 %v1053
        %v1151 = vpop.f32.mrb[0].mxu0
        %v1152 = vadd.f32 %v1020, %v1151
        %v1153 = vpop.f32.mrb[0].mxu0
        %1154 = vmatprep.mubr.f32.mxu0 0.0
        %1155 = vmatmul.mubr.f32.gmra.mrb[0].mxu0 %v1056
        %v1156 = vpop.f32.mrb[0].mxu0
        %v1157 = vadd.f32 %v1025, %v1156
        %v1158 = vpop.f32.mrb[0].mxu0
        %1159 = vmatprep.mubr.f32.mxu0 0.0
        %1160 = vmatmul.mubr.f32.gmra.mrb[0].mxu0 %v1059
        %v1161 = vpop.f32.mrb[0].mxu0
        %v1162 = vadd.f32 %v1030, %v1161
        %v1163 = vpop.f32.mrb[0].mxu0
        %1164 = vmatprep.mubr.f32.mxu0 0.0
        %1165 = vmatmul.mubr.f32.gmra.mrb[0].mxu0 %v1062
        %v1166 = vpop.f32.mrb[0].mxu0
        %v1167 = vadd.f32 %v1035, %v1166
        %v1168 = vpop.f32.mrb[0].mxu0
        %1169 = vmatprep.mubr.f32.mxu0 0.0
        %1170 = vmatmul.mubr.f32.gmra.mrb[0].mxu0 %v1065
        %v1171 = vpop.f32.mrb[0].mxu0
        %v1172 = vadd.f32 %v1040, %v1171
        %v1173 = vpop.f32.mrb[0].mxu0
        %1174 = vdwg.mxu0
        %v1175 = vld [vmem:[%s4] sm:$0xff]
        %v1176 = vld [vmem:[%s4 + $0x8] sm:$0xff]
        %v1177 = vld [vmem:[%s4 + $0x10] sm:$0xff]
        %v1178 = vld [vmem:[%s4 + $0x18] sm:$0xff]
        %v1179 = vld [vmem:[%s4 + $0x20] sm:$0xff]
        %v1180 = vld [vmem:[%s4 + $0x28] sm:$0xff]
        %v1181 = vld [vmem:[%s4 + $0x30] sm:$0xff]
        %v1182 = vld [vmem:[%s4 + $0x38] sm:$0xff]
        %1184 = vset.pattern.permute.xlu0 0
        %1185 = vperm.xlu0 %1184, %v1175
        %v1186 = vpop.permute.xlu0 %1185
        %1189 = vset.pattern.permute.xlu0 0
        %1190 = vperm.xlu0 %1189, %v1176
        %v1191 = vpop.permute.xlu0 %1190
        %1194 = vset.pattern.permute.xlu0 0
        %1195 = vperm.xlu0 %1194, %v1177
        %v1196 = vpop.permute.xlu0 %1195
        %1199 = vset.pattern.permute.xlu0 0
        %1200 = vperm.xlu0 %1199, %v1178
        %v1201 = vpop.permute.xlu0 %1200
        %1204 = vset.pattern.permute.xlu0 0
        %1205 = vperm.xlu0 %1204, %v1179
        %v1206 = vpop.permute.xlu0 %1205
        %1209 = vset.pattern.permute.xlu0 0
        %1210 = vperm.xlu0 %1209, %v1180
        %v1211 = vpop.permute.xlu0 %1210
        %1214 = vset.pattern.permute.xlu0 0
        %1215 = vperm.xlu0 %1214, %v1181
        %v1216 = vpop.permute.xlu0 %1215
        %1219 = vset.pattern.permute.xlu0 0
        %1220 = vperm.xlu0 %1219, %v1182
        %v1221 = vpop.permute.xlu0 %1220
        %v1223 = vadd.f32 %v1137, %v1186
        %v1224 = vadd.f32 %v1142, %v1191
        %v1225 = vadd.f32 %v1147, %v1196
        %v1226 = vadd.f32 %v1152, %v1201
        %v1227 = vadd.f32 %v1157, %v1206
        %v1228 = vadd.f32 %v1162, %v1211
        %v1229 = vadd.f32 %v1167, %v1216
        %v1230 = vadd.f32 %v1172, %v1221
        %v1231 = vmax.f32 %v1223, 0.0
        %v1232 = vmax.f32 %v1224, 0.0
        %v1233 = vmax.f32 %v1225, 0.0
        %v1234 = vmax.f32 %v1226, 0.0
        %v1235 = vmax.f32 %v1227, 0.0
        %v1236 = vmax.f32 %v1228, 0.0
        %v1237 = vmax.f32 %v1229, 0.0
        %v1238 = vmax.f32 %v1230, 0.0
        %v1239 = vld [vmem:[%s5] sm:$0xff]
        %v1240 = vld [vmem:[%s5 + $0x8] sm:$0xff]
        %v1241 = vld [vmem:[%s5 + $0x10] sm:$0xff]
        %v1242 = vld [vmem:[%s5 + $0x18] sm:$0xff]
        %v1243 = vld [vmem:[%s6] sm:$0xff]
        %v1244 = vld [vmem:[%s6 + $0x8] sm:$0xff]
        %v1245 = vld [vmem:[%s6 + $0x10] sm:$0xff]
        %v1246 = vld [vmem:[%s6 + $0x18] sm:$0xff]
        %1248 = vset.pattern.permute.xlu0 0
        %1249 = vperm.xlu0 %1248, %v1243
        %v1250 = vpop.permute.xlu0 %1249
        %1253 = vset.pattern.permute.xlu0 0
        %1254 = vperm.xlu0 %1253, %v1244
        %v1255 = vpop.permute.xlu0 %1254
        %1258 = vset.pattern.permute.xlu0 0
        %1259 = vperm.xlu0 %1258, %v1245
        %v1260 = vpop.permute.xlu0 %1259
        %1263 = vset.pattern.permute.xlu0 0
        %1264 = vperm.xlu0 %1263, %v1246
        %v1265 = vpop.permute.xlu0 %1264
        %v1268 = vsel %vm785, %v1239, 0
        %v1271 = vsel %vm785, %v1240, 0
        %v1274 = vsel %vm785, %v1241, 0
        %v1277 = vsel %vm785, %v1242, 0
        %1279 = vmatprep.subr.mxu0 0.0
        %1280 = vmatpush1.msra.mxu0 %v1231
        %1281 = vmatprep.subr.mxu0 0.0
        %1282 = vmatpush1.msra.mxu0 %v1232
        %1283 = vmatprep.subr.mxu0 0.0
        %1284 = vmatpush1.msra.mxu0 %v1233
        %1285 = vmatprep.subr.mxu0 0.0
        %1286 = vmatpush1.msra.mxu0 %v1234
        %1287 = vmatprep.subr.mxu0 0.0
        %1288 = vmatpush1.msra.mxu0 %v1235
        %1289 = vmatprep.subr.mxu0 0.0
        %1290 = vmatpush1.msra.mxu0 %v1236
        %1291 = vmatprep.subr.mxu0 0.0
        %1292 = vmatpush1.msra.mxu0 %v1237
        %1293 = vmatprep.subr.mxu0 0.0
        %1294 = vmatpush1.msra.mxu0 %v1238
        %1295 = vmatprep.subr.mxu0 0.0
        %1296 = vmatpush1.msra.mxu0 0.0
        %1297 = vmatprep.subr.mxu0 0.0
        %1298 = vmatpush1.msra.mxu0 0.0
        %1299 = vmatprep.subr.mxu0 0.0
        %1300 = vmatpush1.msra.mxu0 0.0
        %1301 = vmatprep.subr.mxu0 0.0
        %1302 = vmatpush1.msra.mxu0 0.0
        %1303 = vmatprep.subr.mxu0 0.0
        %1304 = vmatpush1.msra.mxu0 0.0
        %1305 = vmatprep.subr.mxu0 0.0
        %1306 = vmatpush1.msra.mxu0 0.0
        %1307 = vmatprep.subr.mxu0 0.0
        %1308 = vmatpush1.msra.mxu0 0.0
        %1309 = vmatprep.subr.mxu0 0.0
        %1310 = vmatpush1.msra.mxu0 0.0
        %1311 = vmatprep.subr.mxu0 0.0
        %1312 = vmatpush1.msra.mxu0 0.0
        %1313 = vmatprep.subr.mxu0 0.0
        %1314 = vmatpush1.msra.mxu0 0.0
        %1315 = vmatprep.subr.mxu0 0.0
        %1316 = vmatpush1.msra.mxu0 0.0
        %1317 = vmatprep.subr.mxu0 0.0
        %1318 = vmatpush1.msra.mxu0 0.0
        %1319 = vmatprep.subr.mxu0 0.0
        %1320 = vmatpush1.msra.mxu0 0.0
        %1321 = vmatprep.subr.mxu0 0.0
        %1322 = vmatpush1.msra.mxu0 0.0
        %1323 = vmatprep.subr.mxu0 0.0
        %1324 = vmatpush1.msra.mxu0 0.0
        %1325 = vmatprep.subr.mxu0 0.0
        %1326 = vmatpush1.msra.mxu0 0.0
        %1327 = vmatprep.subr.mxu0 0.0
        %1328 = vmatpush1.msra.mxu0 0.0
        %1329 = vmatprep.subr.mxu0 0.0
        %1330 = vmatpush1.msra.mxu0 0.0
        %1331 = vmatprep.subr.mxu0 0.0
        %1332 = vmatpush1.msra.mxu0 0.0
        %1333 = vmatprep.subr.mxu0 0.0
        %1334 = vmatpush1.msra.mxu0 0.0
        %1335 = vmatprep.subr.mxu0 0.0
        %1336 = vmatpush1.msra.mxu0 0.0
        %1337 = vmatprep.subr.mxu0 0.0
        %1338 = vmatpush1.msra.mxu0 0.0
        %1339 = vmatprep.subr.mxu0 0.0
        %1340 = vmatpush1.msra.mxu0 0.0
        %1341 = vmatprep.subr.mxu0 0.0
        %1342 = vmatpush1.msra.mxu0 0.0
        %1343 = vmatprep.mubr.f32.mxu0 0.0
        %1344 = vmatmul.mubr.f32.gmra.mrb[0].mxu0 %v1268
        %v1345 = vpop.f32.mrb[0].mxu0
        %v1346 = vadd.f32 %v1250, %v1345
        %v1347 = vpop.f32.mrb[0].mxu0
        %1348 = vmatprep.mubr.f32.mxu0 0.0
        %1349 = vmatmul.mubr.f32.gmra.mrb[0].mxu0 %v1271
        %v1350 = vpop.f32.mrb[0].mxu0
        %v1351 = vadd.f32 %v1255, %v1350
        %v1352 = vpop.f32.mrb[0].mxu0
        %1353 = vmatprep.mubr.f32.mxu0 0.0
        %1354 = vmatmul.mubr.f32.gmra.mrb[0].mxu0 %v1274
        %v1355 = vpop.f32.mrb[0].mxu0
        %v1356 = vadd.f32 %v1260, %v1355
        %v1357 = vpop.f32.mrb[0].mxu0
        %1358 = vmatprep.mubr.f32.mxu0 0.0
        %1359 = vmatmul.mubr.f32.gmra.mrb[0].mxu0 %v1277
        %v1360 = vpop.f32.mrb[0].mxu0
        %v1361 = vadd.f32 %v1265, %v1360
        %v1362 = vpop.f32.mrb[0].mxu0
        %1363 = vdwg.mxu0
        %v1364 = vmax.f32 %v1346, 0.0
        %v1365 = vmax.f32 %v1351, 0.0
        %v1366 = vmax.f32 %v1356, 0.0
        %v1367 = vmax.f32 %v1361, 0.0
        %s1368 = scalar_lea.vmem %s403, 32 [#allocation4]
        %1369 = vst [vmem:[%s1368] sm:$0xff] %v1364
        %1370 = vst [vmem:[%s1368 + $0x8] sm:$0xff] %v1365
        %1371 = vst [vmem:[%s1368 + $0x10] sm:$0xff] %v1366
        %1372 = vst [vmem:[%s1368 + $0x18] sm:$0xff] %v1367
        %s1373 = sand.u32 %s204, 1
        %s1374 = scalar_lea.sflag [#allocation5], %s1373
        %s1375 = sand.u32 %s204, 1
        %s1376 = smul.addr %s1375, 64
        %s1377 = scalar_lea.vmem [#allocation4], %s1376
        // Predicated region
        $region128: #{tpu_custom_call.1} parent=118 // pred_check
          %p1378 = pneg %p214
        $region129: #{tpu_custom_call.1} parent=118 // pred_check_branch
          %1380 = sbr.rel (%p1378) target = $region131
        $region130: #{tpu_custom_call.1} parent=118 // pred_region
          %s1381 = smul.u32 2, %s25
          %s1383 = ssub.s32 1024, 1024
          %1384 = vsyncadd %s1374, %s1383
          %s1385 = smul.addr %s1381, 8
          %s1386 = sadd.s32 %s26, %s1385
          %s1387 = smul.addr %s1386, 128
          %s1388 = scalar_lea.hbm %s7, %s1387
          %s1389 = sshll.u32 %s1377, 4
          %s1390 = int_to_ptr.vmem [resolvable:$true] %s1389
          %1395 = dma.vmem_to_hbm [thread:$0]  %s1390, 1024, %s1388, %s1374, 128, 256, 8
        $region131: #{tpu_custom_call.1} parent=118 // pred_fallthru
          _
      $region119: #{tpu_custom_call.1} parent=5 // pred_fallthru
        _
      %p1396 = scmp.le.s32.totalorder 2, %s16
      // Predicated region
      $region132: #{tpu_custom_call.1} parent=5 // pred_check
        %p1397 = pneg %p1396
      $region133: #{tpu_custom_call.1} parent=5 // pred_check_branch
        %1399 = sbr.rel (%p1397) target = $region135
      $region134: #{tpu_custom_call.1} parent=5 // pred_region
        %s1400 = ssub.s32 %s16, 2
        // Predicated region
        $region136: #{tpu_custom_call.1} parent=134 // pred_check
          %p1401 = pneg %p220
        $region137: #{tpu_custom_call.1} parent=134 // pred_check_branch
          %1403 = sbr.rel (%p1401) target = $region139
        $region138: #{tpu_custom_call.1} parent=134 // pred_region
          %s1404 = sand.u32 %s205, 1
          %s1405 = scalar_lea.sflag [#allocation5], %s1404
          %s1406 = sand.u32 %s205, 1
          %s1407 = smul.addr %s1406, 64
          %s1408 = scalar_lea.vmem [#allocation4], %s1407
          %1409 = dma.done %s1405, 1024
        $region139: #{tpu_custom_call.1} parent=134 // pred_fallthru
          _
      $region135: #{tpu_custom_call.1} parent=5 // pred_fallthru
        _
    $region6: #{tpu_custom_call.1} parent=1 // loop_footer
      %s20 = sadd.s32 1, %s16
    $region7: #{tpu_custom_call.1} parent=1 // loop_footer_branch
      %15 = sbr.rel target = $region3
    $region8: #{tpu_custom_call.1} parent=1 // loop_exit
      _
    %1410 = vsyncpa [#allocation5], 1
    %s1411 = scalar_lea.sflag [#allocation5], 1
    %1412 = vsyncpa %s1411, 1

</llo_original>
